<compile_context>
chip_gen: v5e
topology: v5e:2x2
jax: 0.10.0
libtpu: 0.0.40
codegen_flags: <defaults>
</compile_context>

<pallas_src>
import jax
import jax.numpy as jnp
from jax.experimental import pallas as pl
from jax.experimental.pallas import tpu as pltpu

_LANE = 128
_SMALL_INPUT_BYTES = 2 * 1024 * 1024   # below this, XLA fusion beats a kernel launch
_MIN_SPLIT_BYTES = 4 * 1024 * 1024     # above this, force >=2 parallel blocks (v7x dual-TC)
_MAX_FLAT_COLS = 2048                  # lane-dense flat-view width cap
_MAX_FULL_COLS = 4096                  # widest "take the whole row" column tile


def _relu_squared_kernel(x_ref, o_ref):
    x = x_ref[...]
    r = jnp.maximum(x, jnp.zeros_like(x))
    o_ref[...] = r * r


def _relu_squared_ref(x):
    r = jnp.maximum(x, jnp.zeros_like(x))
    return r * r


def _round_up(v: int, m: int) -> int:
    return -(-v // m) * m


def _budgets():
    """(block_byte_budget, vmem_limit_bytes), generation-aware but conservative."""
    vmem_cap = None
    try:
        vmem_cap = int(pltpu.get_tpu_info().vmem_capacity_bytes)
    except Exception:
        try:
            kind = jax.devices()[0].device_kind.lower()
            if "v5" in kind or "v6" in kind:
                vmem_cap = 128 * 1024 * 1024
        except Exception:
            pass
    if vmem_cap is not None and vmem_cap >= 96 * 1024 * 1024:
        # v5e / v6e: 128 MiB physical VMEM -> 12 MiB blocks, 4x double-buffered = 48 MiB
        return 12 * 1024 * 1024, 64 * 1024 * 1024
    # v7x (64 MiB physical VMEM) or unknown: 8 MiB blocks, 4x = 32 MiB (+ headroom)
    return 8 * 1024 * 1024, 40 * 1024 * 1024


def _flat_2d_view(x: jax.Array):
    """Free row-major reshape to a lane-dense-as-possible 2D view."""
    total = x.size
    shape = x.shape

    # Largest multiple of 128 (capped) that divides the element count -> fully
    # unmasked lane-dense slab.
    for c in range(_MAX_FLAT_COLS, _LANE - 1, -_LANE):
        if total % c == 0:
            return x.reshape(total // c, c)

    # Ragged fallback: collapse to the WIDEST trailing dimension (>=128), so
    # masking only hits the edge column block, never every store.
    if x.ndim >= 2:
        trailing = 1
        for k in range(x.ndim - 1, 0, -1):
            trailing *= shape[k]
            if trailing >= _LANE:
                leading = total // trailing
                return x.reshape(leading, trailing)
    # Nothing wide enough: fully flatten.
    return x.reshape(1, total)


def relu_squared(x: jax.Array) -> jax.Array:
    """Elementwise ReLU(x)^2 on any-rank input (matches F.relu(x) ** 2)."""
    orig_shape = x.shape
    total = x.size
    itemsize = x.dtype.itemsize
    total_bytes = total * itemsize

    # Tiny / empty inputs: kernel launch + pipeline prologue dwarfs the work.
    if total == 0 or total_bytes < _SMALL_INPUT_BYTES:
        return _relu_squared_ref(x)

    x2 = _flat_2d_view(x)
    rows, cols = x2.shape

    block_budget, vmem_limit = _budgets()

    # Sublane multiple: 8 for 32-bit, 16 for 16-bit, 32 for 8-bit dtypes.
    sub = max(8, 32 // max(itemsize, 1))

    # ---- Column tiling ------------------------------------------------------
    # Modest widths: take the full row (block dim == array dim is always legal).
    # Wide rows: lane-dense 2048-wide chunks (Pallas masks the ragged edge).
    tile_cols = cols if cols <= _MAX_FULL_COLS else _MAX_FLAT_COLS
    n_col = pl.cdiv(cols, tile_cols)

    # ---- Row tiling: byte-budgeted, then balanced ---------------------------
    rows_budget = max(sub, (block_budget // (tile_cols * itemsize) // sub) * sub)
    n_row = pl.cdiv(rows, rows_budget)

    # Guarantee >=2 blocks along a parallel axis for mid/large inputs so both
    # v7x TensorCores stream (free on single-TC v5e/v6e).
    if n_row * n_col == 1 and total_bytes > _MIN_SPLIT_BYTES:
        if rows >= 2 * sub:
            n_row = 2
        elif cols >= 2 * _LANE:
            n_col = 2
            tile_cols = _round_up(-(-cols // 2), _LANE)

    # Balanced row tile (no near-empty trailing block), sublane-aligned.
    if n_row <= 1:
        tile_rows = rows
    else:
        tile_rows = _round_up(-(-rows // n_row), sub)
        if tile_rows >= rows:
            tile_rows = rows

    grid = (pl.cdiv(rows, tile_rows), pl.cdiv(cols, tile_cols))

    out = pl.pallas_call(
        _relu_squared_kernel,
        out_shape=jax.ShapeDtypeStruct((rows, cols), x.dtype),
        grid_spec=pltpu.PrefetchScalarGridSpec(
            num_scalar_prefetch=0,
            grid=grid,
            in_specs=[pl.BlockSpec((tile_rows, tile_cols), lambda i, j: (i, j))],
            out_specs=pl.BlockSpec((tile_rows, tile_cols), lambda i, j: (i, j)),
        ),
        compiler_params=pltpu.CompilerParams(
            dimension_semantics=("parallel", "parallel"),
            vmem_limit_bytes=vmem_limit,
        ),
    )(x2)

    return out.reshape(orig_shape)


if __name__ == "__main__":
    key = jax.random.PRNGKey(0)
    k1, k2, k3, k4, k5 = jax.random.split(key, 5)

    tests = [
        # small module-scale input -> fast path (XLA fusion)
        ("small_fastpath_f32", jax.random.normal(k1, (2, 8, 32), dtype=jnp.float32)),
        # lane-dense flat view (cols=2048), 5 MiB -> 2 balanced row blocks
        ("aligned_f32",        jax.random.normal(k2, (8, 256, 640), dtype=jnp.float32)),
        # lane-dense flat view, bf16, single block
        ("aligned_bf16",       jax.random.normal(k3, (4, 512, 768), dtype=jnp.bfloat16)),
        # total not a multiple of 128 -> wide ragged view (7, 90000), masked edge col block
        ("ragged_f32",         jax.random.normal(k4, (7, 300, 300), dtype=jnp.float32)),
        # 9.2 MB -> multi-row-block grid with balanced tiles and a masked edge row block
        ("multiblock_f32",     jax.random.normal(k5, (9, 500, 512), dtype=jnp.float32)),
    ]

    for name, x in tests:
        y = jax.block_until_ready(relu_squared(x))
        y_ref = jax.block_until_ready(_relu_squared_ref(x))
        assert y.shape == x.shape and y.dtype == x.dtype, name
        tol = 1e-6 if x.dtype == jnp.float32 else 2e-2
        assert jnp.allclose(y.astype(jnp.float32), y_ref.astype(jnp.float32),
                            atol=tol, rtol=tol), name

    print("KERNEL_OK")
</pallas_src>

<mosaic_0001>
module attributes {stable_mosaic.version = 11 : i64} {
  func.func @_relu_squared_kernel(%arg0: i32, %arg1: i32, %arg2: memref<320x2048xf32, #tpu.memory_space<vmem>>, %arg3: memref<320x2048xf32, #tpu.memory_space<vmem>>) attributes {dimension_semantics = [#tpu.dimension_semantics<parallel>, #tpu.dimension_semantics<parallel>], iteration_bounds = array<i64: 2, 1>, scalar_prefetch = 0 : i64, scratch_operands = 0 : i64, tpu.core_type = #tpu.core_type<tc>, window_params = [{transform_indices = @transform_0, window_bounds = array<i64: 320, 2048>}, {transform_indices = @transform_1, window_bounds = array<i64: 320, 2048>}]} {
    %c0 = arith.constant 0 : index
    %c0_0 = arith.constant 0 : index
    %0 = vector.load %arg2[%c0, %c0_0] : memref<320x2048xf32, #tpu.memory_space<vmem>>, vector<320x2048xf32>
    %cst = arith.constant 0.000000e+00 : f32
    %1 = vector.broadcast %cst : f32 to vector<320x2048xf32>
    %2 = arith.maximumf %0, %1 : vector<320x2048xf32>
    %3 = arith.mulf %2, %2 : vector<320x2048xf32>
    %c0_1 = arith.constant 0 : index
    %c0_2 = arith.constant 0 : index
    %4 = vector.load %arg3[%c0_1, %c0_2] : memref<320x2048xf32, #tpu.memory_space<vmem>>, vector<320x2048xf32>
    tpu.vector_store %arg3[%c0_1, %c0_2], %3 {strides = array<i32>} : memref<320x2048xf32, #tpu.memory_space<vmem>>, vector<320x2048xf32>,
    return
  }
  func.func @transform_0(%arg0: i32, %arg1: i32) -> (i32, i32) {
    %c0_i32 = arith.constant 0 : i32
    return %arg0, %arg1 : i32, i32
  }
  func.func @transform_1(%arg0: i32, %arg1: i32) -> (i32, i32) {
    %c0_i32 = arith.constant 0 : i32
    return %arg0, %arg1 : i32, i32
  }
}

</mosaic_0001>

<llo_original>
// kernel: tpu_custom_call.1
$region0: #{tpu_custom_call.1}
  #allocation0 [shape = 'u32[]', space=smem, size = 0x4, offset = 0x4, fixed_abs, tag = 'smem constant byte address 0x4 - core index']
  #allocation1 [shape = 'u32[72,128]{1,0:T(1,128)}', space=vmem, size = 0x9000, scoped, tag = 'internal scratch']
  %s0 = inlined_call_operand.hbm [shape: f32[640,2048], index: 0, kind: input, shape index: {}]
  %s1 = inlined_call_operand.hbm [shape: f32[640,2048], index: 1, kind: output, shape index: {}]
  %s2 = sld [smem:[#allocation0]]
  $region41: #{tpu_custom_call.1} parent=0
    _
  %s4 = ssub.s32 1, %s2
  %s5 = scalar_select 0, %s4, %s2
  $region1: #{tpu_custom_call.1} parent=0
    #allocation2 [shape = 'u8[5242880]{0}', space=vmem, size = 0x500000, scoped, tag = 'input window, operand 0']
    #allocation3 [shape = 's32[2]{0}', space=sflag, size = 0x8, scoped, tag = 'scoped memory for tpu_custom_call.1']
    #allocation4 [shape = 's32[2]{0}', space=sflag, size = 0x8, scoped, tag = 'scoped memory for tpu_custom_call.1']
    #allocation5 [shape = 'u8[5242880]{0}', space=vmem, size = 0x500000, scoped, tag = 'output window, operand 0']
    %6 = vsyncpa [#allocation3], 0
    %s7 = scalar_lea.sflag [#allocation3], 1
    %8 = vsyncpa %s7, 0
    %9 = vsyncpa [#allocation4], 0
    %s10 = scalar_lea.sflag [#allocation4], 1
    %11 = vsyncpa %s10, 0
    loop: start=0, step=1, limit=4
    $region2: #{tpu_custom_call.1} parent=1 // loop_pre_header
      _
    $region3: #{tpu_custom_call.1} parent=1 // loop_header
      %s13 = sphi 0, %s17
      %p14 = scmp.ge.s32.totalorder %s13, 4
      %s20 = sphi 0, %s32
      %s21 = sphi 0, %s28
      %s22 = sphi 0, %s20
      %s23 = sphi 0, %s21
      %s24 = sphi 0, %s22
      %s25 = sphi 0, %s23
      %s37 = sphi 0, %s39
      %s40 = sphi 0, %s37
      %s41 = sphi 0, %s40
      %s57 = sphi 0, %s41
      %s65 = sphi 0, %s67
      %s68 = sphi 0, %s65
      %s69 = sphi 0, %s68
      %s85 = sphi 0, %s69
    $region4: #{tpu_custom_call.1} parent=1 // loop_header_branch
      %16 = sbr.rel (%p14) target = $region8
    $region5: #{tpu_custom_call.1} parent=1 // loop_body
      %s18 = ssub.s32 %s13, 1
      %s19 = ssub.s32 %s13, 2
      %s26 = sadd.s32 1, %s21
      %p27 = scmp.ge.s32.totalorder %s26, 1
      %s28 = scalar_select %p27, 0, %s26
      %s29 = sadd.s32 1, %s20
      %s30 = scalar_select %p27, %s29, %s20
      %p31 = scmp.ge.s32.totalorder %s30, 2
      %s32 = scalar_select %p31, 0, %s30
      %s33 = ssub.s32 %s20, %s32
      %s34 = ssub.s32 %s21, %s28
      %s35 = sor.u32 %s33, %s34
      %p36 = scmp.eq.s32.totalorder %s35, 0
      %s38 = sadd.s32 %s37, 1
      %s39 = scalar_select %p36, %s37, %s38
      %p42 = pneg %p36
      %p43 = scmp.eq.s32.totalorder %s13, 1
      %p44 = por %p42, %p43
      %p45 = scmp.ne.s32.totalorder %s37, %s40
      %p46 = scmp.eq.s32.totalorder %s13, 0
      %p47 = por %p45, %p46
      %p48 = scmp.ne.s32.totalorder %s37, %s40
      %p49 = scmp.eq.s32.totalorder %s18, 1
      %p50 = por %p48, %p49
      %p51 = scmp.ne.s32.totalorder %s40, %s41
      %p52 = scmp.eq.s32.totalorder %s18, 0
      %p53 = por %p51, %p52
      %p54 = scmp.ne.s32.totalorder %s40, %s41
      %p55 = scmp.eq.s32.totalorder %s19, 1
      %p56 = por %p54, %p55
      %p58 = scmp.ne.s32.totalorder %s41, %s57
      %p59 = scmp.eq.s32.totalorder %s19, 0
      %p60 = por %p58, %p59
      %s61 = ssub.s32 %s20, %s32
      %s62 = ssub.s32 %s21, %s28
      %s63 = sor.u32 %s61, %s62
      %p64 = scmp.eq.s32.totalorder %s63, 0
      %s66 = sadd.s32 %s65, 1
      %s67 = scalar_select %p64, %s65, %s66
      %p70 = pneg %p64
      %p71 = scmp.eq.s32.totalorder %s13, 1
      %p72 = por %p70, %p71
      %p73 = scmp.ne.s32.totalorder %s65, %s68
      %p74 = scmp.eq.s32.totalorder %s13, 0
      %p75 = por %p73, %p74
      %p76 = scmp.ne.s32.totalorder %s65, %s68
      %p77 = scmp.eq.s32.totalorder %s18, 1
      %p78 = por %p76, %p77
      %p79 = scmp.ne.s32.totalorder %s68, %s69
      %p80 = scmp.eq.s32.totalorder %s18, 0
      %p81 = por %p79, %p80
      %p82 = scmp.ne.s32.totalorder %s68, %s69
      %p83 = scmp.eq.s32.totalorder %s19, 1
      %p84 = por %p82, %p83
      %p86 = scmp.ne.s32.totalorder %s69, %s85
      %p87 = scmp.eq.s32.totalorder %s19, 0
      %p88 = por %p86, %p87
      %p89 = scmp.le.s32.totalorder 1, %s13
      %p90 = scmp.lt.s32.totalorder %s13, 3
      %p91 = pnand %p89, %p90
      %p92 = pneg %p91
      // Predicated region
      $region9: #{tpu_custom_call.1} parent=5 // pred_check
        _
      $region10: #{tpu_custom_call.1} parent=5 // pred_check_branch
        %94 = sbr.rel (%p91) target = $region12
      $region11: #{tpu_custom_call.1} parent=5 // pred_region
        %s95 = ssub.s32 %s13, 1
      $region12: #{tpu_custom_call.1} parent=5 // pred_fallthru
        _
      %p96 = scmp.lt.s32.totalorder %s13, 2
      // Predicated region
      $region13: #{tpu_custom_call.1} parent=5 // pred_check
        %p97 = pneg %p96
      $region14: #{tpu_custom_call.1} parent=5 // pred_check_branch
        %99 = sbr.rel (%p97) target = $region16
      $region15: #{tpu_custom_call.1} parent=5 // pred_region
        // Predicated region
        $region17: #{tpu_custom_call.1} parent=15 // pred_check
          %p100 = pneg %p47
        $region18: #{tpu_custom_call.1} parent=15 // pred_check_branch
          %102 = sbr.rel (%p100) target = $region20
        $region19: #{tpu_custom_call.1} parent=15 // pred_region
          %s103 = sand.u32 %s37, 1
          %s104 = scalar_lea.sflag [#allocation3], %s103
          %s105 = sand.u32 %s37, 1
          %s106 = smul.addr %s105, 5120
          %s107 = scalar_lea.vmem [#allocation2], %s106
          %s108 = smul.u32 40, %s20
          %s109 = smul.u32 16, %s21
          %111 = vsyncadd %s104, 0
          %s112 = smul.addr %s108, 16
          %s113 = sadd.s32 %s109, %s112
          %s114 = smul.addr %s113, 8
          %s115 = scalar_lea.hbm %s0, %s114
          %s116 = sshll.u32 %s115, 4
          %s117 = int_to_ptr.hbm [resolvable:$true] %s116
          %s118 = sshll.u32 %s107, 4
          %s119 = int_to_ptr.vmem [resolvable:$true] %s118
          %124 = dma.hbm_to_vmem [thread:$0]  %s117, 81920, %s119, %s104, 2048, 2048, 128
        $region20: #{tpu_custom_call.1} parent=15 // pred_fallthru
          _
      $region16: #{tpu_custom_call.1} parent=5 // pred_fallthru
        _
      %p125 = scmp.le.s32.totalorder 1, %s13
      %p126 = scmp.lt.s32.totalorder %s13, 3
      %p127 = pnand %p125, %p126
      %p128 = pneg %p127
      // Predicated region
      $region21: #{tpu_custom_call.1} parent=5 // pred_check
        _
      $region22: #{tpu_custom_call.1} parent=5 // pred_check_branch
        %130 = sbr.rel (%p127) target = $region24
      $region23: #{tpu_custom_call.1} parent=5 // pred_region
        %s131 = ssub.s32 %s13, 1
        %s132 = sand.u32 %s40, 1
        %s133 = scalar_lea.sflag [#allocation3], %s132
        %s134 = sand.u32 %s40, 1
        %s135 = smul.addr %s134, 5120
        %s136 = scalar_lea.vmem [#allocation2], %s135
        // Predicated region
        $region25: #{tpu_custom_call.1} parent=23 // pred_check
          %p137 = pneg %p53
        $region26: #{tpu_custom_call.1} parent=23 // pred_check_branch
          %139 = sbr.rel (%p137) target = $region28
        $region27: #{tpu_custom_call.1} parent=23 // pred_region
          %141 = dma.done %s133, 81920
        $region28: #{tpu_custom_call.1} parent=23 // pred_fallthru
          _
        %s142 = sand.u32 %s40, 1
        %s143 = scalar_lea.sflag [#allocation3], %s142
        %s144 = sand.u32 %s40, 1
        %s145 = smul.addr %s144, 5120
        %s146 = scalar_lea.vmem [#allocation2], %s145
        %p147 = pneg %p53
        %p148 = pneg %p50
        %p149 = pneg %p81
        %p150 = pneg %p78
        %s151 = sand.u32 %s68, 1
        %s152 = scalar_lea.sflag [#allocation4], %s151
        %s153 = sand.u32 %s68, 1
        %s154 = smul.addr %s153, 5120
        %s155 = scalar_lea.vmem [#allocation5], %s154
        %s156 = smul.u32 40, %s22
        %s157 = smul.u32 16, %s23
        %s158 = smul.u32 40, %s22
        %s159 = smul.u32 16, %s23
        %v160 = vld [vmem:[%s136] sm:$0xff]
        %v161 = vld [vmem:[%s136 + $0x8] sm:$0xff]
        %v162 = vld [vmem:[%s136 + $0x10] sm:$0xff]
        %v163 = vld [vmem:[%s136 + $0x18] sm:$0xff]
        %v164 = vld [vmem:[%s136 + $0x20] sm:$0xff]
        %v165 = vld [vmem:[%s136 + $0x28] sm:$0xff]
        %v166 = vld [vmem:[%s136 + $0x30] sm:$0xff]
        %v167 = vld [vmem:[%s136 + $0x38] sm:$0xff]
        %v168 = vld [vmem:[%s136 + $0x40] sm:$0xff]
        %v169 = vld [vmem:[%s136 + $0x48] sm:$0xff]
        %v170 = vld [vmem:[%s136 + $0x50] sm:$0xff]
        %v171 = vld [vmem:[%s136 + $0x58] sm:$0xff]
        %v172 = vld [vmem:[%s136 + $0x60] sm:$0xff]
        %v173 = vld [vmem:[%s136 + $0x68] sm:$0xff]
        %v174 = vld [vmem:[%s136 + $0x70] sm:$0xff]
        %v175 = vld [vmem:[%s136 + $0x78] sm:$0xff]
        %v176 = vld [vmem:[%s136 + $0x80] sm:$0xff]
        %v177 = vld [vmem:[%s136 + $0x88] sm:$0xff]
        %v178 = vld [vmem:[%s136 + $0x90] sm:$0xff]
        %v179 = vld [vmem:[%s136 + $0x98] sm:$0xff]
        %v180 = vld [vmem:[%s136 + $0xa0] sm:$0xff]
        %v181 = vld [vmem:[%s136 + $0xa8] sm:$0xff]
        %v182 = vld [vmem:[%s136 + $0xb0] sm:$0xff]
        %v183 = vld [vmem:[%s136 + $0xb8] sm:$0xff]
        %v184 = vld [vmem:[%s136 + $0xc0] sm:$0xff]
        %v185 = vld [vmem:[%s136 + $0xc8] sm:$0xff]
        %v186 = vld [vmem:[%s136 + $0xd0] sm:$0xff]
        %v187 = vld [vmem:[%s136 + $0xd8] sm:$0xff]
        %v188 = vld [vmem:[%s136 + $0xe0] sm:$0xff]
        %v189 = vld [vmem:[%s136 + $0xe8] sm:$0xff]
        %v190 = vld [vmem:[%s136 + $0xf0] sm:$0xff]
        %v191 = vld [vmem:[%s136 + $0xf8] sm:$0xff]
        %v192 = vld [vmem:[%s136 + $0x100] sm:$0xff]
        %v193 = vld [vmem:[%s136 + $0x108] sm:$0xff]
        %v194 = vld [vmem:[%s136 + $0x110] sm:$0xff]
        %v195 = vld [vmem:[%s136 + $0x118] sm:$0xff]
        %v196 = vld [vmem:[%s136 + $0x120] sm:$0xff]
        %v197 = vld [vmem:[%s136 + $0x128] sm:$0xff]
        %v198 = vld [vmem:[%s136 + $0x130] sm:$0xff]
        %v199 = vld [vmem:[%s136 + $0x138] sm:$0xff]
        %v200 = vld [vmem:[%s136 + $0x140] sm:$0xff]
        %v201 = vld [vmem:[%s136 + $0x148] sm:$0xff]
        %v202 = vld [vmem:[%s136 + $0x150] sm:$0xff]
        %v203 = vld [vmem:[%s136 + $0x158] sm:$0xff]
        %v204 = vld [vmem:[%s136 + $0x160] sm:$0xff]
        %v205 = vld [vmem:[%s136 + $0x168] sm:$0xff]
        %v206 = vld [vmem:[%s136 + $0x170] sm:$0xff]
        %v207 = vld [vmem:[%s136 + $0x178] sm:$0xff]
        %v208 = vld [vmem:[%s136 + $0x180] sm:$0xff]
        %v209 = vld [vmem:[%s136 + $0x188] sm:$0xff]
        %v210 = vld [vmem:[%s136 + $0x190] sm:$0xff]
        %v211 = vld [vmem:[%s136 + $0x198] sm:$0xff]
        %v212 = vld [vmem:[%s136 + $0x1a0] sm:$0xff]
        %v213 = vld [vmem:[%s136 + $0x1a8] sm:$0xff]
        %v214 = vld [vmem:[%s136 + $0x1b0] sm:$0xff]
        %v215 = vld [vmem:[%s136 + $0x1b8] sm:$0xff]
        %v216 = vld [vmem:[%s136 + $0x1c0] sm:$0xff]
        %v217 = vld [vmem:[%s136 + $0x1c8] sm:$0xff]
        %v218 = vld [vmem:[%s136 + $0x1d0] sm:$0xff]
        %v219 = vld [vmem:[%s136 + $0x1d8] sm:$0xff]
        %v220 = vld [vmem:[%s136 + $0x1e0] sm:$0xff]
        %v221 = vld [vmem:[%s136 + $0x1e8] sm:$0xff]
        %v222 = vld [vmem:[%s136 + $0x1f0] sm:$0xff]
        %v223 = vld [vmem:[%s136 + $0x1f8] sm:$0xff]
        %v224 = vld [vmem:[%s136 + $0x200] sm:$0xff]
        %v225 = vld [vmem:[%s136 + $0x208] sm:$0xff]
        %v226 = vld [vmem:[%s136 + $0x210] sm:$0xff]
        %v227 = vld [vmem:[%s136 + $0x218] sm:$0xff]
        %v228 = vld [vmem:[%s136 + $0x220] sm:$0xff]
        %v229 = vld [vmem:[%s136 + $0x228] sm:$0xff]
        %v230 = vld [vmem:[%s136 + $0x230] sm:$0xff]
        %v231 = vld [vmem:[%s136 + $0x238] sm:$0xff]
        %v232 = vld [vmem:[%s136 + $0x240] sm:$0xff]
        %v233 = vld [vmem:[%s136 + $0x248] sm:$0xff]
        %v234 = vld [vmem:[%s136 + $0x250] sm:$0xff]
        %v235 = vld [vmem:[%s136 + $0x258] sm:$0xff]
        %v236 = vld [vmem:[%s136 + $0x260] sm:$0xff]
        %v237 = vld [vmem:[%s136 + $0x268] sm:$0xff]
        %v238 = vld [vmem:[%s136 + $0x270] sm:$0xff]
        %v239 = vld [vmem:[%s136 + $0x278] sm:$0xff]
        %v240 = vld [vmem:[%s136 + $0x280] sm:$0xff]
        %v241 = vld [vmem:[%s136 + $0x288] sm:$0xff]
        %v242 = vld [vmem:[%s136 + $0x290] sm:$0xff]
        %v243 = vld [vmem:[%s136 + $0x298] sm:$0xff]
        %v244 = vld [vmem:[%s136 + $0x2a0] sm:$0xff]
        %v245 = vld [vmem:[%s136 + $0x2a8] sm:$0xff]
        %v246 = vld [vmem:[%s136 + $0x2b0] sm:$0xff]
        %v247 = vld [vmem:[%s136 + $0x2b8] sm:$0xff]
        %v248 = vld [vmem:[%s136 + $0x2c0] sm:$0xff]
        %v249 = vld [vmem:[%s136 + $0x2c8] sm:$0xff]
        %v250 = vld [vmem:[%s136 + $0x2d0] sm:$0xff]
        %v251 = vld [vmem:[%s136 + $0x2d8] sm:$0xff]
        %v252 = vld [vmem:[%s136 + $0x2e0] sm:$0xff]
        %v253 = vld [vmem:[%s136 + $0x2e8] sm:$0xff]
        %v254 = vld [vmem:[%s136 + $0x2f0] sm:$0xff]
        %v255 = vld [vmem:[%s136 + $0x2f8] sm:$0xff]
        %v256 = vld [vmem:[%s136 + $0x300] sm:$0xff]
        %v257 = vld [vmem:[%s136 + $0x308] sm:$0xff]
        %v258 = vld [vmem:[%s136 + $0x310] sm:$0xff]
        %v259 = vld [vmem:[%s136 + $0x318] sm:$0xff]
        %v260 = vld [vmem:[%s136 + $0x320] sm:$0xff]
        %v261 = vld [vmem:[%s136 + $0x328] sm:$0xff]
        %v262 = vld [vmem:[%s136 + $0x330] sm:$0xff]
        %v263 = vld [vmem:[%s136 + $0x338] sm:$0xff]
        %v264 = vld [vmem:[%s136 + $0x340] sm:$0xff]
        %v265 = vld [vmem:[%s136 + $0x348] sm:$0xff]
        %v266 = vld [vmem:[%s136 + $0x350] sm:$0xff]
        %v267 = vld [vmem:[%s136 + $0x358] sm:$0xff]
        %v268 = vld [vmem:[%s136 + $0x360] sm:$0xff]
        %v269 = vld [vmem:[%s136 + $0x368] sm:$0xff]
        %v270 = vld [vmem:[%s136 + $0x370] sm:$0xff]
        %v271 = vld [vmem:[%s136 + $0x378] sm:$0xff]
        %v272 = vld [vmem:[%s136 + $0x380] sm:$0xff]
        %v273 = vld [vmem:[%s136 + $0x388] sm:$0xff]
        %v274 = vld [vmem:[%s136 + $0x390] sm:$0xff]
        %v275 = vld [vmem:[%s136 + $0x398] sm:$0xff]
        %v276 = vld [vmem:[%s136 + $0x3a0] sm:$0xff]
        %v277 = vld [vmem:[%s136 + $0x3a8] sm:$0xff]
        %v278 = vld [vmem:[%s136 + $0x3b0] sm:$0xff]
        %v279 = vld [vmem:[%s136 + $0x3b8] sm:$0xff]
        %v280 = vld [vmem:[%s136 + $0x3c0] sm:$0xff]
        %v281 = vld [vmem:[%s136 + $0x3c8] sm:$0xff]
        %v282 = vld [vmem:[%s136 + $0x3d0] sm:$0xff]
        %v283 = vld [vmem:[%s136 + $0x3d8] sm:$0xff]
        %v284 = vld [vmem:[%s136 + $0x3e0] sm:$0xff]
        %v285 = vld [vmem:[%s136 + $0x3e8] sm:$0xff]
        %v286 = vld [vmem:[%s136 + $0x3f0] sm:$0xff]
        %v287 = vld [vmem:[%s136 + $0x3f8] sm:$0xff]
        %v288 = vld [vmem:[%s136 + $0x400] sm:$0xff]
        %v289 = vld [vmem:[%s136 + $0x408] sm:$0xff]
        %v290 = vld [vmem:[%s136 + $0x410] sm:$0xff]
        %v291 = vld [vmem:[%s136 + $0x418] sm:$0xff]
        %v292 = vld [vmem:[%s136 + $0x420] sm:$0xff]
        %v293 = vld [vmem:[%s136 + $0x428] sm:$0xff]
        %v294 = vld [vmem:[%s136 + $0x430] sm:$0xff]
        %v295 = vld [vmem:[%s136 + $0x438] sm:$0xff]
        %v296 = vld [vmem:[%s136 + $0x440] sm:$0xff]
        %v297 = vld [vmem:[%s136 + $0x448] sm:$0xff]
        %v298 = vld [vmem:[%s136 + $0x450] sm:$0xff]
        %v299 = vld [vmem:[%s136 + $0x458] sm:$0xff]
        %v300 = vld [vmem:[%s136 + $0x460] sm:$0xff]
        %v301 = vld [vmem:[%s136 + $0x468] sm:$0xff]
        %v302 = vld [vmem:[%s136 + $0x470] sm:$0xff]
        %v303 = vld [vmem:[%s136 + $0x478] sm:$0xff]
        %v304 = vld [vmem:[%s136 + $0x480] sm:$0xff]
        %v305 = vld [vmem:[%s136 + $0x488] sm:$0xff]
        %v306 = vld [vmem:[%s136 + $0x490] sm:$0xff]
        %v307 = vld [vmem:[%s136 + $0x498] sm:$0xff]
        %v308 = vld [vmem:[%s136 + $0x4a0] sm:$0xff]
        %v309 = vld [vmem:[%s136 + $0x4a8] sm:$0xff]
        %v310 = vld [vmem:[%s136 + $0x4b0] sm:$0xff]
        %v311 = vld [vmem:[%s136 + $0x4b8] sm:$0xff]
        %v312 = vld [vmem:[%s136 + $0x4c0] sm:$0xff]
        %v313 = vld [vmem:[%s136 + $0x4c8] sm:$0xff]
        %v314 = vld [vmem:[%s136 + $0x4d0] sm:$0xff]
        %v315 = vld [vmem:[%s136 + $0x4d8] sm:$0xff]
        %v316 = vld [vmem:[%s136 + $0x4e0] sm:$0xff]
        %v317 = vld [vmem:[%s136 + $0x4e8] sm:$0xff]
        %v318 = vld [vmem:[%s136 + $0x4f0] sm:$0xff]
        %v319 = vld [vmem:[%s136 + $0x4f8] sm:$0xff]
        %v320 = vld [vmem:[%s136 + $0x500] sm:$0xff]
        %v321 = vld [vmem:[%s136 + $0x508] sm:$0xff]
        %v322 = vld [vmem:[%s136 + $0x510] sm:$0xff]
        %v323 = vld [vmem:[%s136 + $0x518] sm:$0xff]
        %v324 = vld [vmem:[%s136 + $0x520] sm:$0xff]
        %v325 = vld [vmem:[%s136 + $0x528] sm:$0xff]
        %v326 = vld [vmem:[%s136 + $0x530] sm:$0xff]
        %v327 = vld [vmem:[%s136 + $0x538] sm:$0xff]
        %v328 = vld [vmem:[%s136 + $0x540] sm:$0xff]
        %v329 = vld [vmem:[%s136 + $0x548] sm:$0xff]
        %v330 = vld [vmem:[%s136 + $0x550] sm:$0xff]
        %v331 = vld [vmem:[%s136 + $0x558] sm:$0xff]
        %v332 = vld [vmem:[%s136 + $0x560] sm:$0xff]
        %v333 = vld [vmem:[%s136 + $0x568] sm:$0xff]
        %v334 = vld [vmem:[%s136 + $0x570] sm:$0xff]
        %v335 = vld [vmem:[%s136 + $0x578] sm:$0xff]
        %v336 = vld [vmem:[%s136 + $0x580] sm:$0xff]
        %v337 = vld [vmem:[%s136 + $0x588] sm:$0xff]
        %v338 = vld [vmem:[%s136 + $0x590] sm:$0xff]
        %v339 = vld [vmem:[%s136 + $0x598] sm:$0xff]
        %v340 = vld [vmem:[%s136 + $0x5a0] sm:$0xff]
        %v341 = vld [vmem:[%s136 + $0x5a8] sm:$0xff]
        %v342 = vld [vmem:[%s136 + $0x5b0] sm:$0xff]
        %v343 = vld [vmem:[%s136 + $0x5b8] sm:$0xff]
        %v344 = vld [vmem:[%s136 + $0x5c0] sm:$0xff]
        %v345 = vld [vmem:[%s136 + $0x5c8] sm:$0xff]
        %v346 = vld [vmem:[%s136 + $0x5d0] sm:$0xff]
        %v347 = vld [vmem:[%s136 + $0x5d8] sm:$0xff]
        %v348 = vld [vmem:[%s136 + $0x5e0] sm:$0xff]
        %v349 = vld [vmem:[%s136 + $0x5e8] sm:$0xff]
        %v350 = vld [vmem:[%s136 + $0x5f0] sm:$0xff]
        %v351 = vld [vmem:[%s136 + $0x5f8] sm:$0xff]
        %v352 = vld [vmem:[%s136 + $0x600] sm:$0xff]
        %v353 = vld [vmem:[%s136 + $0x608] sm:$0xff]
        %v354 = vld [vmem:[%s136 + $0x610] sm:$0xff]
        %v355 = vld [vmem:[%s136 + $0x618] sm:$0xff]
        %v356 = vld [vmem:[%s136 + $0x620] sm:$0xff]
        %v357 = vld [vmem:[%s136 + $0x628] sm:$0xff]
        %v358 = vld [vmem:[%s136 + $0x630] sm:$0xff]
        %v359 = vld [vmem:[%s136 + $0x638] sm:$0xff]
        %v360 = vld [vmem:[%s136 + $0x640] sm:$0xff]
        %v361 = vld [vmem:[%s136 + $0x648] sm:$0xff]
        %v362 = vld [vmem:[%s136 + $0x650] sm:$0xff]
        %v363 = vld [vmem:[%s136 + $0x658] sm:$0xff]
        %v364 = vld [vmem:[%s136 + $0x660] sm:$0xff]
        %v365 = vld [vmem:[%s136 + $0x668] sm:$0xff]
        %v366 = vld [vmem:[%s136 + $0x670] sm:$0xff]
        %v367 = vld [vmem:[%s136 + $0x678] sm:$0xff]
        %v368 = vld [vmem:[%s136 + $0x680] sm:$0xff]
        %v369 = vld [vmem:[%s136 + $0x688] sm:$0xff]
        %v370 = vld [vmem:[%s136 + $0x690] sm:$0xff]
        %v371 = vld [vmem:[%s136 + $0x698] sm:$0xff]
        %v372 = vld [vmem:[%s136 + $0x6a0] sm:$0xff]
        %v373 = vld [vmem:[%s136 + $0x6a8] sm:$0xff]
        %v374 = vld [vmem:[%s136 + $0x6b0] sm:$0xff]
        %v375 = vld [vmem:[%s136 + $0x6b8] sm:$0xff]
        %v376 = vld [vmem:[%s136 + $0x6c0] sm:$0xff]
        %v377 = vld [vmem:[%s136 + $0x6c8] sm:$0xff]
        %v378 = vld [vmem:[%s136 + $0x6d0] sm:$0xff]
        %v379 = vld [vmem:[%s136 + $0x6d8] sm:$0xff]
        %v380 = vld [vmem:[%s136 + $0x6e0] sm:$0xff]
        %v381 = vld [vmem:[%s136 + $0x6e8] sm:$0xff]
        %v382 = vld [vmem:[%s136 + $0x6f0] sm:$0xff]
        %v383 = vld [vmem:[%s136 + $0x6f8] sm:$0xff]
        %v384 = vld [vmem:[%s136 + $0x700] sm:$0xff]
        %v385 = vld [vmem:[%s136 + $0x708] sm:$0xff]
        %v386 = vld [vmem:[%s136 + $0x710] sm:$0xff]
        %v387 = vld [vmem:[%s136 + $0x718] sm:$0xff]
        %v388 = vld [vmem:[%s136 + $0x720] sm:$0xff]
        %v389 = vld [vmem:[%s136 + $0x728] sm:$0xff]
        %v390 = vld [vmem:[%s136 + $0x730] sm:$0xff]
        %v391 = vld [vmem:[%s136 + $0x738] sm:$0xff]
        %v392 = vld [vmem:[%s136 + $0x740] sm:$0xff]
        %v393 = vld [vmem:[%s136 + $0x748] sm:$0xff]
        %v394 = vld [vmem:[%s136 + $0x750] sm:$0xff]
        %v395 = vld [vmem:[%s136 + $0x758] sm:$0xff]
        %v396 = vld [vmem:[%s136 + $0x760] sm:$0xff]
        %v397 = vld [vmem:[%s136 + $0x768] sm:$0xff]
        %v398 = vld [vmem:[%s136 + $0x770] sm:$0xff]
        %v399 = vld [vmem:[%s136 + $0x778] sm:$0xff]
        %v400 = vld [vmem:[%s136 + $0x780] sm:$0xff]
        %v401 = vld [vmem:[%s136 + $0x788] sm:$0xff]
        %v402 = vld [vmem:[%s136 + $0x790] sm:$0xff]
        %v403 = vld [vmem:[%s136 + $0x798] sm:$0xff]
        %v404 = vld [vmem:[%s136 + $0x7a0] sm:$0xff]
        %v405 = vld [vmem:[%s136 + $0x7a8] sm:$0xff]
        %v406 = vld [vmem:[%s136 + $0x7b0] sm:$0xff]
        %v407 = vld [vmem:[%s136 + $0x7b8] sm:$0xff]
        %v408 = vld [vmem:[%s136 + $0x7c0] sm:$0xff]
        %v409 = vld [vmem:[%s136 + $0x7c8] sm:$0xff]
        %v410 = vld [vmem:[%s136 + $0x7d0] sm:$0xff]
        %v411 = vld [vmem:[%s136 + $0x7d8] sm:$0xff]
        %v412 = vld [vmem:[%s136 + $0x7e0] sm:$0xff]
        %v413 = vld [vmem:[%s136 + $0x7e8] sm:$0xff]
        %v414 = vld [vmem:[%s136 + $0x7f0] sm:$0xff]
        %v415 = vld [vmem:[%s136 + $0x7f8] sm:$0xff]
        %v416 = vld [vmem:[%s136 + $0x800] sm:$0xff]
        %v417 = vld [vmem:[%s136 + $0x808] sm:$0xff]
        %v418 = vld [vmem:[%s136 + $0x810] sm:$0xff]
        %v419 = vld [vmem:[%s136 + $0x818] sm:$0xff]
        %v420 = vld [vmem:[%s136 + $0x820] sm:$0xff]
        %v421 = vld [vmem:[%s136 + $0x828] sm:$0xff]
        %v422 = vld [vmem:[%s136 + $0x830] sm:$0xff]
        %v423 = vld [vmem:[%s136 + $0x838] sm:$0xff]
        %v424 = vld [vmem:[%s136 + $0x840] sm:$0xff]
        %v425 = vld [vmem:[%s136 + $0x848] sm:$0xff]
        %v426 = vld [vmem:[%s136 + $0x850] sm:$0xff]
        %v427 = vld [vmem:[%s136 + $0x858] sm:$0xff]
        %v428 = vld [vmem:[%s136 + $0x860] sm:$0xff]
        %v429 = vld [vmem:[%s136 + $0x868] sm:$0xff]
        %v430 = vld [vmem:[%s136 + $0x870] sm:$0xff]
        %v431 = vld [vmem:[%s136 + $0x878] sm:$0xff]
        %v432 = vld [vmem:[%s136 + $0x880] sm:$0xff]
        %v433 = vld [vmem:[%s136 + $0x888] sm:$0xff]
        %v434 = vld [vmem:[%s136 + $0x890] sm:$0xff]
        %v435 = vld [vmem:[%s136 + $0x898] sm:$0xff]
        %v436 = vld [vmem:[%s136 + $0x8a0] sm:$0xff]
        %v437 = vld [vmem:[%s136 + $0x8a8] sm:$0xff]
        %v438 = vld [vmem:[%s136 + $0x8b0] sm:$0xff]
        %v439 = vld [vmem:[%s136 + $0x8b8] sm:$0xff]
        %v440 = vld [vmem:[%s136 + $0x8c0] sm:$0xff]
        %v441 = vld [vmem:[%s136 + $0x8c8] sm:$0xff]
        %v442 = vld [vmem:[%s136 + $0x8d0] sm:$0xff]
        %v443 = vld [vmem:[%s136 + $0x8d8] sm:$0xff]
        %v444 = vld [vmem:[%s136 + $0x8e0] sm:$0xff]
        %v445 = vld [vmem:[%s136 + $0x8e8] sm:$0xff]
        %v446 = vld [vmem:[%s136 + $0x8f0] sm:$0xff]
        %v447 = vld [vmem:[%s136 + $0x8f8] sm:$0xff]
        %v448 = vld [vmem:[%s136 + $0x900] sm:$0xff]
        %v449 = vld [vmem:[%s136 + $0x908] sm:$0xff]
        %v450 = vld [vmem:[%s136 + $0x910] sm:$0xff]
        %v451 = vld [vmem:[%s136 + $0x918] sm:$0xff]
        %v452 = vld [vmem:[%s136 + $0x920] sm:$0xff]
        %v453 = vld [vmem:[%s136 + $0x928] sm:$0xff]
        %v454 = vld [vmem:[%s136 + $0x930] sm:$0xff]
        %v455 = vld [vmem:[%s136 + $0x938] sm:$0xff]
        %v456 = vld [vmem:[%s136 + $0x940] sm:$0xff]
        %v457 = vld [vmem:[%s136 + $0x948] sm:$0xff]
        %v458 = vld [vmem:[%s136 + $0x950] sm:$0xff]
        %v459 = vld [vmem:[%s136 + $0x958] sm:$0xff]
        %v460 = vld [vmem:[%s136 + $0x960] sm:$0xff]
        %v461 = vld [vmem:[%s136 + $0x968] sm:$0xff]
        %v462 = vld [vmem:[%s136 + $0x970] sm:$0xff]
        %v463 = vld [vmem:[%s136 + $0x978] sm:$0xff]
        %v464 = vld [vmem:[%s136 + $0x980] sm:$0xff]
        %v465 = vld [vmem:[%s136 + $0x988] sm:$0xff]
        %v466 = vld [vmem:[%s136 + $0x990] sm:$0xff]
        %v467 = vld [vmem:[%s136 + $0x998] sm:$0xff]
        %v468 = vld [vmem:[%s136 + $0x9a0] sm:$0xff]
        %v469 = vld [vmem:[%s136 + $0x9a8] sm:$0xff]
        %v470 = vld [vmem:[%s136 + $0x9b0] sm:$0xff]
        %v471 = vld [vmem:[%s136 + $0x9b8] sm:$0xff]
        %v472 = vld [vmem:[%s136 + $0x9c0] sm:$0xff]
        %v473 = vld [vmem:[%s136 + $0x9c8] sm:$0xff]
        %v474 = vld [vmem:[%s136 + $0x9d0] sm:$0xff]
        %v475 = vld [vmem:[%s136 + $0x9d8] sm:$0xff]
        %v476 = vld [vmem:[%s136 + $0x9e0] sm:$0xff]
        %v477 = vld [vmem:[%s136 + $0x9e8] sm:$0xff]
        %v478 = vld [vmem:[%s136 + $0x9f0] sm:$0xff]
        %v479 = vld [vmem:[%s136 + $0x9f8] sm:$0xff]
        %v480 = vld [vmem:[%s136 + $0xa00] sm:$0xff]
        %v481 = vld [vmem:[%s136 + $0xa08] sm:$0xff]
        %v482 = vld [vmem:[%s136 + $0xa10] sm:$0xff]
        %v483 = vld [vmem:[%s136 + $0xa18] sm:$0xff]
        %v484 = vld [vmem:[%s136 + $0xa20] sm:$0xff]
        %v485 = vld [vmem:[%s136 + $0xa28] sm:$0xff]
        %v486 = vld [vmem:[%s136 + $0xa30] sm:$0xff]
        %v487 = vld [vmem:[%s136 + $0xa38] sm:$0xff]
        %v488 = vld [vmem:[%s136 + $0xa40] sm:$0xff]
        %v489 = vld [vmem:[%s136 + $0xa48] sm:$0xff]
        %v490 = vld [vmem:[%s136 + $0xa50] sm:$0xff]
        %v491 = vld [vmem:[%s136 + $0xa58] sm:$0xff]
        %v492 = vld [vmem:[%s136 + $0xa60] sm:$0xff]
        %v493 = vld [vmem:[%s136 + $0xa68] sm:$0xff]
        %v494 = vld [vmem:[%s136 + $0xa70] sm:$0xff]
        %v495 = vld [vmem:[%s136 + $0xa78] sm:$0xff]
        %v496 = vld [vmem:[%s136 + $0xa80] sm:$0xff]
        %v497 = vld [vmem:[%s136 + $0xa88] sm:$0xff]
        %v498 = vld [vmem:[%s136 + $0xa90] sm:$0xff]
        %v499 = vld [vmem:[%s136 + $0xa98] sm:$0xff]
        %v500 = vld [vmem:[%s136 + $0xaa0] sm:$0xff]
        %v501 = vld [vmem:[%s136 + $0xaa8] sm:$0xff]
        %v502 = vld [vmem:[%s136 + $0xab0] sm:$0xff]
        %v503 = vld [vmem:[%s136 + $0xab8] sm:$0xff]
        %v504 = vld [vmem:[%s136 + $0xac0] sm:$0xff]
        %v505 = vld [vmem:[%s136 + $0xac8] sm:$0xff]
        %v506 = vld [vmem:[%s136 + $0xad0] sm:$0xff]
        %v507 = vld [vmem:[%s136 + $0xad8] sm:$0xff]
        %v508 = vld [vmem:[%s136 + $0xae0] sm:$0xff]
        %v509 = vld [vmem:[%s136 + $0xae8] sm:$0xff]
        %v510 = vld [vmem:[%s136 + $0xaf0] sm:$0xff]
        %v511 = vld [vmem:[%s136 + $0xaf8] sm:$0xff]
        %v512 = vld [vmem:[%s136 + $0xb00] sm:$0xff]
        %v513 = vld [vmem:[%s136 + $0xb08] sm:$0xff]
        %v514 = vld [vmem:[%s136 + $0xb10] sm:$0xff]
        %v515 = vld [vmem:[%s136 + $0xb18] sm:$0xff]
        %v516 = vld [vmem:[%s136 + $0xb20] sm:$0xff]
        %v517 = vld [vmem:[%s136 + $0xb28] sm:$0xff]
        %v518 = vld [vmem:[%s136 + $0xb30] sm:$0xff]
        %v519 = vld [vmem:[%s136 + $0xb38] sm:$0xff]
        %v520 = vld [vmem:[%s136 + $0xb40] sm:$0xff]
        %v521 = vld [vmem:[%s136 + $0xb48] sm:$0xff]
        %v522 = vld [vmem:[%s136 + $0xb50] sm:$0xff]
        %v523 = vld [vmem:[%s136 + $0xb58] sm:$0xff]
        %v524 = vld [vmem:[%s136 + $0xb60] sm:$0xff]
        %v525 = vld [vmem:[%s136 + $0xb68] sm:$0xff]
        %v526 = vld [vmem:[%s136 + $0xb70] sm:$0xff]
        %v527 = vld [vmem:[%s136 + $0xb78] sm:$0xff]
        %v528 = vld [vmem:[%s136 + $0xb80] sm:$0xff]
        %v529 = vld [vmem:[%s136 + $0xb88] sm:$0xff]
        %v530 = vld [vmem:[%s136 + $0xb90] sm:$0xff]
        %v531 = vld [vmem:[%s136 + $0xb98] sm:$0xff]
        %v532 = vld [vmem:[%s136 + $0xba0] sm:$0xff]
        %v533 = vld [vmem:[%s136 + $0xba8] sm:$0xff]
        %v534 = vld [vmem:[%s136 + $0xbb0] sm:$0xff]
        %v535 = vld [vmem:[%s136 + $0xbb8] sm:$0xff]
        %v536 = vld [vmem:[%s136 + $0xbc0] sm:$0xff]
        %v537 = vld [vmem:[%s136 + $0xbc8] sm:$0xff]
        %v538 = vld [vmem:[%s136 + $0xbd0] sm:$0xff]
        %v539 = vld [vmem:[%s136 + $0xbd8] sm:$0xff]
        %v540 = vld [vmem:[%s136 + $0xbe0] sm:$0xff]
        %v541 = vld [vmem:[%s136 + $0xbe8] sm:$0xff]
        %v542 = vld [vmem:[%s136 + $0xbf0] sm:$0xff]
        %v543 = vld [vmem:[%s136 + $0xbf8] sm:$0xff]
        %v544 = vld [vmem:[%s136 + $0xc00] sm:$0xff]
        %v545 = vld [vmem:[%s136 + $0xc08] sm:$0xff]
        %v546 = vld [vmem:[%s136 + $0xc10] sm:$0xff]
        %v547 = vld [vmem:[%s136 + $0xc18] sm:$0xff]
        %v548 = vld [vmem:[%s136 + $0xc20] sm:$0xff]
        %v549 = vld [vmem:[%s136 + $0xc28] sm:$0xff]
        %v550 = vld [vmem:[%s136 + $0xc30] sm:$0xff]
        %v551 = vld [vmem:[%s136 + $0xc38] sm:$0xff]
        %v552 = vld [vmem:[%s136 + $0xc40] sm:$0xff]
        %v553 = vld [vmem:[%s136 + $0xc48] sm:$0xff]
        %v554 = vld [vmem:[%s136 + $0xc50] sm:$0xff]
        %v555 = vld [vmem:[%s136 + $0xc58] sm:$0xff]
        %v556 = vld [vmem:[%s136 + $0xc60] sm:$0xff]
        %v557 = vld [vmem:[%s136 + $0xc68] sm:$0xff]
        %v558 = vld [vmem:[%s136 + $0xc70] sm:$0xff]
        %v559 = vld [vmem:[%s136 + $0xc78] sm:$0xff]
        %v560 = vld [vmem:[%s136 + $0xc80] sm:$0xff]
        %v561 = vld [vmem:[%s136 + $0xc88] sm:$0xff]
        %v562 = vld [vmem:[%s136 + $0xc90] sm:$0xff]
        %v563 = vld [vmem:[%s136 + $0xc98] sm:$0xff]
        %v564 = vld [vmem:[%s136 + $0xca0] sm:$0xff]
        %v565 = vld [vmem:[%s136 + $0xca8] sm:$0xff]
        %v566 = vld [vmem:[%s136 + $0xcb0] sm:$0xff]
        %v567 = vld [vmem:[%s136 + $0xcb8] sm:$0xff]
        %v568 = vld [vmem:[%s136 + $0xcc0] sm:$0xff]
        %v569 = vld [vmem:[%s136 + $0xcc8] sm:$0xff]
        %v570 = vld [vmem:[%s136 + $0xcd0] sm:$0xff]
        %v571 = vld [vmem:[%s136 + $0xcd8] sm:$0xff]
        %v572 = vld [vmem:[%s136 + $0xce0] sm:$0xff]
        %v573 = vld [vmem:[%s136 + $0xce8] sm:$0xff]
        %v574 = vld [vmem:[%s136 + $0xcf0] sm:$0xff]
        %v575 = vld [vmem:[%s136 + $0xcf8] sm:$0xff]
        %v576 = vld [vmem:[%s136 + $0xd00] sm:$0xff]
        %v577 = vld [vmem:[%s136 + $0xd08] sm:$0xff]
        %v578 = vld [vmem:[%s136 + $0xd10] sm:$0xff]
        %v579 = vld [vmem:[%s136 + $0xd18] sm:$0xff]
        %v580 = vld [vmem:[%s136 + $0xd20] sm:$0xff]
        %v581 = vld [vmem:[%s136 + $0xd28] sm:$0xff]
        %v582 = vld [vmem:[%s136 + $0xd30] sm:$0xff]
        %v583 = vld [vmem:[%s136 + $0xd38] sm:$0xff]
        %v584 = vld [vmem:[%s136 + $0xd40] sm:$0xff]
        %v585 = vld [vmem:[%s136 + $0xd48] sm:$0xff]
        %v586 = vld [vmem:[%s136 + $0xd50] sm:$0xff]
        %v587 = vld [vmem:[%s136 + $0xd58] sm:$0xff]
        %v588 = vld [vmem:[%s136 + $0xd60] sm:$0xff]
        %v589 = vld [vmem:[%s136 + $0xd68] sm:$0xff]
        %v590 = vld [vmem:[%s136 + $0xd70] sm:$0xff]
        %v591 = vld [vmem:[%s136 + $0xd78] sm:$0xff]
        %v592 = vld [vmem:[%s136 + $0xd80] sm:$0xff]
        %v593 = vld [vmem:[%s136 + $0xd88] sm:$0xff]
        %v594 = vld [vmem:[%s136 + $0xd90] sm:$0xff]
        %v595 = vld [vmem:[%s136 + $0xd98] sm:$0xff]
        %v596 = vld [vmem:[%s136 + $0xda0] sm:$0xff]
        %v597 = vld [vmem:[%s136 + $0xda8] sm:$0xff]
        %v598 = vld [vmem:[%s136 + $0xdb0] sm:$0xff]
        %v599 = vld [vmem:[%s136 + $0xdb8] sm:$0xff]
        %v600 = vld [vmem:[%s136 + $0xdc0] sm:$0xff]
        %v601 = vld [vmem:[%s136 + $0xdc8] sm:$0xff]
        %v602 = vld [vmem:[%s136 + $0xdd0] sm:$0xff]
        %v603 = vld [vmem:[%s136 + $0xdd8] sm:$0xff]
        %v604 = vld [vmem:[%s136 + $0xde0] sm:$0xff]
        %v605 = vld [vmem:[%s136 + $0xde8] sm:$0xff]
        %v606 = vld [vmem:[%s136 + $0xdf0] sm:$0xff]
        %v607 = vld [vmem:[%s136 + $0xdf8] sm:$0xff]
        %v608 = vld [vmem:[%s136 + $0xe00] sm:$0xff]
        %v609 = vld [vmem:[%s136 + $0xe08] sm:$0xff]
        %v610 = vld [vmem:[%s136 + $0xe10] sm:$0xff]
        %v611 = vld [vmem:[%s136 + $0xe18] sm:$0xff]
        %v612 = vld [vmem:[%s136 + $0xe20] sm:$0xff]
        %v613 = vld [vmem:[%s136 + $0xe28] sm:$0xff]
        %v614 = vld [vmem:[%s136 + $0xe30] sm:$0xff]
        %v615 = vld [vmem:[%s136 + $0xe38] sm:$0xff]
        %v616 = vld [vmem:[%s136 + $0xe40] sm:$0xff]
        %v617 = vld [vmem:[%s136 + $0xe48] sm:$0xff]
        %v618 = vld [vmem:[%s136 + $0xe50] sm:$0xff]
        %v619 = vld [vmem:[%s136 + $0xe58] sm:$0xff]
        %v620 = vld [vmem:[%s136 + $0xe60] sm:$0xff]
        %v621 = vld [vmem:[%s136 + $0xe68] sm:$0xff]
        %v622 = vld [vmem:[%s136 + $0xe70] sm:$0xff]
        %v623 = vld [vmem:[%s136 + $0xe78] sm:$0xff]
        %v624 = vld [vmem:[%s136 + $0xe80] sm:$0xff]
        %v625 = vld [vmem:[%s136 + $0xe88] sm:$0xff]
        %v626 = vld [vmem:[%s136 + $0xe90] sm:$0xff]
        %v627 = vld [vmem:[%s136 + $0xe98] sm:$0xff]
        %v628 = vld [vmem:[%s136 + $0xea0] sm:$0xff]
        %v629 = vld [vmem:[%s136 + $0xea8] sm:$0xff]
        %v630 = vld [vmem:[%s136 + $0xeb0] sm:$0xff]
        %v631 = vld [vmem:[%s136 + $0xeb8] sm:$0xff]
        %v632 = vld [vmem:[%s136 + $0xec0] sm:$0xff]
        %v633 = vld [vmem:[%s136 + $0xec8] sm:$0xff]
        %v634 = vld [vmem:[%s136 + $0xed0] sm:$0xff]
        %v635 = vld [vmem:[%s136 + $0xed8] sm:$0xff]
        %v636 = vld [vmem:[%s136 + $0xee0] sm:$0xff]
        %v637 = vld [vmem:[%s136 + $0xee8] sm:$0xff]
        %v638 = vld [vmem:[%s136 + $0xef0] sm:$0xff]
        %v639 = vld [vmem:[%s136 + $0xef8] sm:$0xff]
        %v640 = vld [vmem:[%s136 + $0xf00] sm:$0xff]
        %v641 = vld [vmem:[%s136 + $0xf08] sm:$0xff]
        %v642 = vld [vmem:[%s136 + $0xf10] sm:$0xff]
        %v643 = vld [vmem:[%s136 + $0xf18] sm:$0xff]
        %v644 = vld [vmem:[%s136 + $0xf20] sm:$0xff]
        %v645 = vld [vmem:[%s136 + $0xf28] sm:$0xff]
        %v646 = vld [vmem:[%s136 + $0xf30] sm:$0xff]
        %v647 = vld [vmem:[%s136 + $0xf38] sm:$0xff]
        %v648 = vld [vmem:[%s136 + $0xf40] sm:$0xff]
        %v649 = vld [vmem:[%s136 + $0xf48] sm:$0xff]
        %v650 = vld [vmem:[%s136 + $0xf50] sm:$0xff]
        %v651 = vld [vmem:[%s136 + $0xf58] sm:$0xff]
        %v652 = vld [vmem:[%s136 + $0xf60] sm:$0xff]
        %v653 = vld [vmem:[%s136 + $0xf68] sm:$0xff]
        %v654 = vld [vmem:[%s136 + $0xf70] sm:$0xff]
        %v655 = vld [vmem:[%s136 + $0xf78] sm:$0xff]
        %v656 = vld [vmem:[%s136 + $0xf80] sm:$0xff]
        %v657 = vld [vmem:[%s136 + $0xf88] sm:$0xff]
        %v658 = vld [vmem:[%s136 + $0xf90] sm:$0xff]
        %v659 = vld [vmem:[%s136 + $0xf98] sm:$0xff]
        %v660 = vld [vmem:[%s136 + $0xfa0] sm:$0xff]
        %v661 = vld [vmem:[%s136 + $0xfa8] sm:$0xff]
        %v662 = vld [vmem:[%s136 + $0xfb0] sm:$0xff]
        %v663 = vld [vmem:[%s136 + $0xfb8] sm:$0xff]
        %v664 = vld [vmem:[%s136 + $0xfc0] sm:$0xff]
        %v665 = vld [vmem:[%s136 + $0xfc8] sm:$0xff]
        %v666 = vld [vmem:[%s136 + $0xfd0] sm:$0xff]
        %v667 = vld [vmem:[%s136 + $0xfd8] sm:$0xff]
        %v668 = vld [vmem:[%s136 + $0xfe0] sm:$0xff]
        %v669 = vld [vmem:[%s136 + $0xfe8] sm:$0xff]
        %v670 = vld [vmem:[%s136 + $0xff0] sm:$0xff]
        %v671 = vld [vmem:[%s136 + $0xff8] sm:$0xff]
        %v672 = vld [vmem:[%s136 + $0x1000] sm:$0xff]
        %v673 = vld [vmem:[%s136 + $0x1008] sm:$0xff]
        %v674 = vld [vmem:[%s136 + $0x1010] sm:$0xff]
        %v675 = vld [vmem:[%s136 + $0x1018] sm:$0xff]
        %v676 = vld [vmem:[%s136 + $0x1020] sm:$0xff]
        %v677 = vld [vmem:[%s136 + $0x1028] sm:$0xff]
        %v678 = vld [vmem:[%s136 + $0x1030] sm:$0xff]
        %v679 = vld [vmem:[%s136 + $0x1038] sm:$0xff]
        %v680 = vld [vmem:[%s136 + $0x1040] sm:$0xff]
        %v681 = vld [vmem:[%s136 + $0x1048] sm:$0xff]
        %v682 = vld [vmem:[%s136 + $0x1050] sm:$0xff]
        %v683 = vld [vmem:[%s136 + $0x1058] sm:$0xff]
        %v684 = vld [vmem:[%s136 + $0x1060] sm:$0xff]
        %v685 = vld [vmem:[%s136 + $0x1068] sm:$0xff]
        %v686 = vld [vmem:[%s136 + $0x1070] sm:$0xff]
        %v687 = vld [vmem:[%s136 + $0x1078] sm:$0xff]
        %v688 = vld [vmem:[%s136 + $0x1080] sm:$0xff]
        %v689 = vld [vmem:[%s136 + $0x1088] sm:$0xff]
        %v690 = vld [vmem:[%s136 + $0x1090] sm:$0xff]
        %v691 = vld [vmem:[%s136 + $0x1098] sm:$0xff]
        %v692 = vld [vmem:[%s136 + $0x10a0] sm:$0xff]
        %v693 = vld [vmem:[%s136 + $0x10a8] sm:$0xff]
        %v694 = vld [vmem:[%s136 + $0x10b0] sm:$0xff]
        %v695 = vld [vmem:[%s136 + $0x10b8] sm:$0xff]
        %v696 = vld [vmem:[%s136 + $0x10c0] sm:$0xff]
        %v697 = vld [vmem:[%s136 + $0x10c8] sm:$0xff]
        %v698 = vld [vmem:[%s136 + $0x10d0] sm:$0xff]
        %v699 = vld [vmem:[%s136 + $0x10d8] sm:$0xff]
        %v700 = vld [vmem:[%s136 + $0x10e0] sm:$0xff]
        %v701 = vld [vmem:[%s136 + $0x10e8] sm:$0xff]
        %v702 = vld [vmem:[%s136 + $0x10f0] sm:$0xff]
        %v703 = vld [vmem:[%s136 + $0x10f8] sm:$0xff]
        %v704 = vld [vmem:[%s136 + $0x1100] sm:$0xff]
        %v705 = vld [vmem:[%s136 + $0x1108] sm:$0xff]
        %v706 = vld [vmem:[%s136 + $0x1110] sm:$0xff]
        %v707 = vld [vmem:[%s136 + $0x1118] sm:$0xff]
        %v708 = vld [vmem:[%s136 + $0x1120] sm:$0xff]
        %v709 = vld [vmem:[%s136 + $0x1128] sm:$0xff]
        %v710 = vld [vmem:[%s136 + $0x1130] sm:$0xff]
        %v711 = vld [vmem:[%s136 + $0x1138] sm:$0xff]
        %v712 = vld [vmem:[%s136 + $0x1140] sm:$0xff]
        %v713 = vld [vmem:[%s136 + $0x1148] sm:$0xff]
        %v714 = vld [vmem:[%s136 + $0x1150] sm:$0xff]
        %v715 = vld [vmem:[%s136 + $0x1158] sm:$0xff]
        %v716 = vld [vmem:[%s136 + $0x1160] sm:$0xff]
        %v717 = vld [vmem:[%s136 + $0x1168] sm:$0xff]
        %v718 = vld [vmem:[%s136 + $0x1170] sm:$0xff]
        %v719 = vld [vmem:[%s136 + $0x1178] sm:$0xff]
        %v720 = vld [vmem:[%s136 + $0x1180] sm:$0xff]
        %v721 = vld [vmem:[%s136 + $0x1188] sm:$0xff]
        %v722 = vld [vmem:[%s136 + $0x1190] sm:$0xff]
        %v723 = vld [vmem:[%s136 + $0x1198] sm:$0xff]
        %v724 = vld [vmem:[%s136 + $0x11a0] sm:$0xff]
        %v725 = vld [vmem:[%s136 + $0x11a8] sm:$0xff]
        %v726 = vld [vmem:[%s136 + $0x11b0] sm:$0xff]
        %v727 = vld [vmem:[%s136 + $0x11b8] sm:$0xff]
        %v728 = vld [vmem:[%s136 + $0x11c0] sm:$0xff]
        %v729 = vld [vmem:[%s136 + $0x11c8] sm:$0xff]
        %v730 = vld [vmem:[%s136 + $0x11d0] sm:$0xff]
        %v731 = vld [vmem:[%s136 + $0x11d8] sm:$0xff]
        %v732 = vld [vmem:[%s136 + $0x11e0] sm:$0xff]
        %v733 = vld [vmem:[%s136 + $0x11e8] sm:$0xff]
        %v734 = vld [vmem:[%s136 + $0x11f0] sm:$0xff]
        %v735 = vld [vmem:[%s136 + $0x11f8] sm:$0xff]
        %v736 = vld [vmem:[%s136 + $0x1200] sm:$0xff]
        %v737 = vld [vmem:[%s136 + $0x1208] sm:$0xff]
        %v738 = vld [vmem:[%s136 + $0x1210] sm:$0xff]
        %v739 = vld [vmem:[%s136 + $0x1218] sm:$0xff]
        %v740 = vld [vmem:[%s136 + $0x1220] sm:$0xff]
        %v741 = vld [vmem:[%s136 + $0x1228] sm:$0xff]
        %v742 = vld [vmem:[%s136 + $0x1230] sm:$0xff]
        %v743 = vld [vmem:[%s136 + $0x1238] sm:$0xff]
        %v744 = vld [vmem:[%s136 + $0x1240] sm:$0xff]
        %v745 = vld [vmem:[%s136 + $0x1248] sm:$0xff]
        %v746 = vld [vmem:[%s136 + $0x1250] sm:$0xff]
        %v747 = vld [vmem:[%s136 + $0x1258] sm:$0xff]
        %v748 = vld [vmem:[%s136 + $0x1260] sm:$0xff]
        %v749 = vld [vmem:[%s136 + $0x1268] sm:$0xff]
        %v750 = vld [vmem:[%s136 + $0x1270] sm:$0xff]
        %v751 = vld [vmem:[%s136 + $0x1278] sm:$0xff]
        %v752 = vld [vmem:[%s136 + $0x1280] sm:$0xff]
        %v753 = vld [vmem:[%s136 + $0x1288] sm:$0xff]
        %v754 = vld [vmem:[%s136 + $0x1290] sm:$0xff]
        %v755 = vld [vmem:[%s136 + $0x1298] sm:$0xff]
        %v756 = vld [vmem:[%s136 + $0x12a0] sm:$0xff]
        %v757 = vld [vmem:[%s136 + $0x12a8] sm:$0xff]
        %v758 = vld [vmem:[%s136 + $0x12b0] sm:$0xff]
        %v759 = vld [vmem:[%s136 + $0x12b8] sm:$0xff]
        %v760 = vld [vmem:[%s136 + $0x12c0] sm:$0xff]
        %v761 = vld [vmem:[%s136 + $0x12c8] sm:$0xff]
        %v762 = vld [vmem:[%s136 + $0x12d0] sm:$0xff]
        %v763 = vld [vmem:[%s136 + $0x12d8] sm:$0xff]
        %v764 = vld [vmem:[%s136 + $0x12e0] sm:$0xff]
        %v765 = vld [vmem:[%s136 + $0x12e8] sm:$0xff]
        %v766 = vld [vmem:[%s136 + $0x12f0] sm:$0xff]
        %v767 = vld [vmem:[%s136 + $0x12f8] sm:$0xff]
        %v768 = vld [vmem:[%s136 + $0x1300] sm:$0xff]
        %v769 = vld [vmem:[%s136 + $0x1308] sm:$0xff]
        %v770 = vld [vmem:[%s136 + $0x1310] sm:$0xff]
        %v771 = vld [vmem:[%s136 + $0x1318] sm:$0xff]
        %v772 = vld [vmem:[%s136 + $0x1320] sm:$0xff]
        %v773 = vld [vmem:[%s136 + $0x1328] sm:$0xff]
        %v774 = vld [vmem:[%s136 + $0x1330] sm:$0xff]
        %v775 = vld [vmem:[%s136 + $0x1338] sm:$0xff]
        %v776 = vld [vmem:[%s136 + $0x1340] sm:$0xff]
        %v777 = vld [vmem:[%s136 + $0x1348] sm:$0xff]
        %v778 = vld [vmem:[%s136 + $0x1350] sm:$0xff]
        %v779 = vld [vmem:[%s136 + $0x1358] sm:$0xff]
        %v780 = vld [vmem:[%s136 + $0x1360] sm:$0xff]
        %v781 = vld [vmem:[%s136 + $0x1368] sm:$0xff]
        %v782 = vld [vmem:[%s136 + $0x1370] sm:$0xff]
        %v783 = vld [vmem:[%s136 + $0x1378] sm:$0xff]
        %v784 = vld [vmem:[%s136 + $0x1380] sm:$0xff]
        %v785 = vld [vmem:[%s136 + $0x1388] sm:$0xff]
        %v786 = vld [vmem:[%s136 + $0x1390] sm:$0xff]
        %v787 = vld [vmem:[%s136 + $0x1398] sm:$0xff]
        %v788 = vld [vmem:[%s136 + $0x13a0] sm:$0xff]
        %v789 = vld [vmem:[%s136 + $0x13a8] sm:$0xff]
        %v790 = vld [vmem:[%s136 + $0x13b0] sm:$0xff]
        %v791 = vld [vmem:[%s136 + $0x13b8] sm:$0xff]
        %v792 = vld [vmem:[%s136 + $0x13c0] sm:$0xff]
        %v793 = vld [vmem:[%s136 + $0x13c8] sm:$0xff]
        %v794 = vld [vmem:[%s136 + $0x13d0] sm:$0xff]
        %v795 = vld [vmem:[%s136 + $0x13d8] sm:$0xff]
        %v796 = vld [vmem:[%s136 + $0x13e0] sm:$0xff]
        %v797 = vld [vmem:[%s136 + $0x13e8] sm:$0xff]
        %v798 = vld [vmem:[%s136 + $0x13f0] sm:$0xff]
        %v799 = vld [vmem:[%s136 + $0x13f8] sm:$0xff]
        %v800 = vmax.f32 %v160, 0.0
        %v801 = vmax.f32 %v161, 0.0
        %v802 = vmax.f32 %v162, 0.0
        %v803 = vmax.f32 %v163, 0.0
        %v804 = vmax.f32 %v164, 0.0
        %v805 = vmax.f32 %v165, 0.0
        %v806 = vmax.f32 %v166, 0.0
        %v807 = vmax.f32 %v167, 0.0
        %v808 = vmax.f32 %v168, 0.0
        %v809 = vmax.f32 %v169, 0.0
        %v810 = vmax.f32 %v170, 0.0
        %v811 = vmax.f32 %v171, 0.0
        %v812 = vmax.f32 %v172, 0.0
        %v813 = vmax.f32 %v173, 0.0
        %v814 = vmax.f32 %v174, 0.0
        %v815 = vmax.f32 %v175, 0.0
        %v816 = vmax.f32 %v176, 0.0
        %v817 = vmax.f32 %v177, 0.0
        %v818 = vmax.f32 %v178, 0.0
        %v819 = vmax.f32 %v179, 0.0
        %v820 = vmax.f32 %v180, 0.0
        %v821 = vmax.f32 %v181, 0.0
        %v822 = vmax.f32 %v182, 0.0
        %v823 = vmax.f32 %v183, 0.0
        %v824 = vmax.f32 %v184, 0.0
        %v825 = vmax.f32 %v185, 0.0
        %v826 = vmax.f32 %v186, 0.0
        %v827 = vmax.f32 %v187, 0.0
        %v828 = vmax.f32 %v188, 0.0
        %v829 = vmax.f32 %v189, 0.0
        %v830 = vmax.f32 %v190, 0.0
        %v831 = vmax.f32 %v191, 0.0
        %v832 = vmax.f32 %v192, 0.0
        %v833 = vmax.f32 %v193, 0.0
        %v834 = vmax.f32 %v194, 0.0
        %v835 = vmax.f32 %v195, 0.0
        %v836 = vmax.f32 %v196, 0.0
        %v837 = vmax.f32 %v197, 0.0
        %v838 = vmax.f32 %v198, 0.0
        %v839 = vmax.f32 %v199, 0.0
        %v840 = vmax.f32 %v200, 0.0
        %v841 = vmax.f32 %v201, 0.0
        %v842 = vmax.f32 %v202, 0.0
        %v843 = vmax.f32 %v203, 0.0
        %v844 = vmax.f32 %v204, 0.0
        %v845 = vmax.f32 %v205, 0.0
        %v846 = vmax.f32 %v206, 0.0
        %v847 = vmax.f32 %v207, 0.0
        %v848 = vmax.f32 %v208, 0.0
        %v849 = vmax.f32 %v209, 0.0
        %v850 = vmax.f32 %v210, 0.0
        %v851 = vmax.f32 %v211, 0.0
        %v852 = vmax.f32 %v212, 0.0
        %v853 = vmax.f32 %v213, 0.0
        %v854 = vmax.f32 %v214, 0.0
        %v855 = vmax.f32 %v215, 0.0
        %v856 = vmax.f32 %v216, 0.0
        %v857 = vmax.f32 %v217, 0.0
        %v858 = vmax.f32 %v218, 0.0
        %v859 = vmax.f32 %v219, 0.0
        %v860 = vmax.f32 %v220, 0.0
        %v861 = vmax.f32 %v221, 0.0
        %v862 = vmax.f32 %v222, 0.0
        %v863 = vmax.f32 %v223, 0.0
        %v864 = vmax.f32 %v224, 0.0
        %v865 = vmax.f32 %v225, 0.0
        %v866 = vmax.f32 %v226, 0.0
        %v867 = vmax.f32 %v227, 0.0
        %v868 = vmax.f32 %v228, 0.0
        %v869 = vmax.f32 %v229, 0.0
        %v870 = vmax.f32 %v230, 0.0
        %v871 = vmax.f32 %v231, 0.0
        %v872 = vmax.f32 %v232, 0.0
        %v873 = vmax.f32 %v233, 0.0
        %v874 = vmax.f32 %v234, 0.0
        %v875 = vmax.f32 %v235, 0.0
        %v876 = vmax.f32 %v236, 0.0
        %v877 = vmax.f32 %v237, 0.0
        %v878 = vmax.f32 %v238, 0.0
        %v879 = vmax.f32 %v239, 0.0
        %v880 = vmax.f32 %v240, 0.0
        %v881 = vmax.f32 %v241, 0.0
        %v882 = vmax.f32 %v242, 0.0
        %v883 = vmax.f32 %v243, 0.0
        %v884 = vmax.f32 %v244, 0.0
        %v885 = vmax.f32 %v245, 0.0
        %v886 = vmax.f32 %v246, 0.0
        %v887 = vmax.f32 %v247, 0.0
        %v888 = vmax.f32 %v248, 0.0
        %v889 = vmax.f32 %v249, 0.0
        %v890 = vmax.f32 %v250, 0.0
        %v891 = vmax.f32 %v251, 0.0
        %v892 = vmax.f32 %v252, 0.0
        %v893 = vmax.f32 %v253, 0.0
        %v894 = vmax.f32 %v254, 0.0
        %v895 = vmax.f32 %v255, 0.0
        %v896 = vmax.f32 %v256, 0.0
        %v897 = vmax.f32 %v257, 0.0
        %v898 = vmax.f32 %v258, 0.0
        %v899 = vmax.f32 %v259, 0.0
        %v900 = vmax.f32 %v260, 0.0
        %v901 = vmax.f32 %v261, 0.0
        %v902 = vmax.f32 %v262, 0.0
        %v903 = vmax.f32 %v263, 0.0
        %v904 = vmax.f32 %v264, 0.0
        %v905 = vmax.f32 %v265, 0.0
        %v906 = vmax.f32 %v266, 0.0
        %v907 = vmax.f32 %v267, 0.0
        %v908 = vmax.f32 %v268, 0.0
        %v909 = vmax.f32 %v269, 0.0
        %v910 = vmax.f32 %v270, 0.0
        %v911 = vmax.f32 %v271, 0.0
        %v912 = vmax.f32 %v272, 0.0
        %v913 = vmax.f32 %v273, 0.0
        %v914 = vmax.f32 %v274, 0.0
        %v915 = vmax.f32 %v275, 0.0
        %v916 = vmax.f32 %v276, 0.0
        %v917 = vmax.f32 %v277, 0.0
        %v918 = vmax.f32 %v278, 0.0
        %v919 = vmax.f32 %v279, 0.0
        %v920 = vmax.f32 %v280, 0.0
        %v921 = vmax.f32 %v281, 0.0
        %v922 = vmax.f32 %v282, 0.0
        %v923 = vmax.f32 %v283, 0.0
        %v924 = vmax.f32 %v284, 0.0
        %v925 = vmax.f32 %v285, 0.0
        %v926 = vmax.f32 %v286, 0.0
        %v927 = vmax.f32 %v287, 0.0
        %v928 = vmax.f32 %v288, 0.0
        %v929 = vmax.f32 %v289, 0.0
        %v930 = vmax.f32 %v290, 0.0
        %v931 = vmax.f32 %v291, 0.0
        %v932 = vmax.f32 %v292, 0.0
        %v933 = vmax.f32 %v293, 0.0
        %v934 = vmax.f32 %v294, 0.0
        %v935 = vmax.f32 %v295, 0.0
        %v936 = vmax.f32 %v296, 0.0
        %v937 = vmax.f32 %v297, 0.0
        %v938 = vmax.f32 %v298, 0.0
        %v939 = vmax.f32 %v299, 0.0
        %v940 = vmax.f32 %v300, 0.0
        %v941 = vmax.f32 %v301, 0.0
        %v942 = vmax.f32 %v302, 0.0
        %v943 = vmax.f32 %v303, 0.0
        %v944 = vmax.f32 %v304, 0.0
        %v945 = vmax.f32 %v305, 0.0
        %v946 = vmax.f32 %v306, 0.0
        %v947 = vmax.f32 %v307, 0.0
        %v948 = vmax.f32 %v308, 0.0
        %v949 = vmax.f32 %v309, 0.0
        %v950 = vmax.f32 %v310, 0.0
        %v951 = vmax.f32 %v311, 0.0
        %v952 = vmax.f32 %v312, 0.0
        %v953 = vmax.f32 %v313, 0.0
        %v954 = vmax.f32 %v314, 0.0
        %v955 = vmax.f32 %v315, 0.0
        %v956 = vmax.f32 %v316, 0.0
        %v957 = vmax.f32 %v317, 0.0
        %v958 = vmax.f32 %v318, 0.0
        %v959 = vmax.f32 %v319, 0.0
        %v960 = vmax.f32 %v320, 0.0
        %v961 = vmax.f32 %v321, 0.0
        %v962 = vmax.f32 %v322, 0.0
        %v963 = vmax.f32 %v323, 0.0
        %v964 = vmax.f32 %v324, 0.0
        %v965 = vmax.f32 %v325, 0.0
        %v966 = vmax.f32 %v326, 0.0
        %v967 = vmax.f32 %v327, 0.0
        %v968 = vmax.f32 %v328, 0.0
        %v969 = vmax.f32 %v329, 0.0
        %v970 = vmax.f32 %v330, 0.0
        %v971 = vmax.f32 %v331, 0.0
        %v972 = vmax.f32 %v332, 0.0
        %v973 = vmax.f32 %v333, 0.0
        %v974 = vmax.f32 %v334, 0.0
        %v975 = vmax.f32 %v335, 0.0
        %v976 = vmax.f32 %v336, 0.0
        %v977 = vmax.f32 %v337, 0.0
        %v978 = vmax.f32 %v338, 0.0
        %v979 = vmax.f32 %v339, 0.0
        %v980 = vmax.f32 %v340, 0.0
        %v981 = vmax.f32 %v341, 0.0
        %v982 = vmax.f32 %v342, 0.0
        %v983 = vmax.f32 %v343, 0.0
        %v984 = vmax.f32 %v344, 0.0
        %v985 = vmax.f32 %v345, 0.0
        %v986 = vmax.f32 %v346, 0.0
        %v987 = vmax.f32 %v347, 0.0
        %v988 = vmax.f32 %v348, 0.0
        %v989 = vmax.f32 %v349, 0.0
        %v990 = vmax.f32 %v350, 0.0
        %v991 = vmax.f32 %v351, 0.0
        %v992 = vmax.f32 %v352, 0.0
        %v993 = vmax.f32 %v353, 0.0
        %v994 = vmax.f32 %v354, 0.0
        %v995 = vmax.f32 %v355, 0.0
        %v996 = vmax.f32 %v356, 0.0
        %v997 = vmax.f32 %v357, 0.0
        %v998 = vmax.f32 %v358, 0.0
        %v999 = vmax.f32 %v359, 0.0
        %v1000 = vmax.f32 %v360, 0.0
        %v1001 = vmax.f32 %v361, 0.0
        %v1002 = vmax.f32 %v362, 0.0
        %v1003 = vmax.f32 %v363, 0.0
        %v1004 = vmax.f32 %v364, 0.0
        %v1005 = vmax.f32 %v365, 0.0
        %v1006 = vmax.f32 %v366, 0.0
        %v1007 = vmax.f32 %v367, 0.0
        %v1008 = vmax.f32 %v368, 0.0
        %v1009 = vmax.f32 %v369, 0.0
        %v1010 = vmax.f32 %v370, 0.0
        %v1011 = vmax.f32 %v371, 0.0
        %v1012 = vmax.f32 %v372, 0.0
        %v1013 = vmax.f32 %v373, 0.0
        %v1014 = vmax.f32 %v374, 0.0
        %v1015 = vmax.f32 %v375, 0.0
        %v1016 = vmax.f32 %v376, 0.0
        %v1017 = vmax.f32 %v377, 0.0
        %v1018 = vmax.f32 %v378, 0.0
        %v1019 = vmax.f32 %v379, 0.0
        %v1020 = vmax.f32 %v380, 0.0
        %v1021 = vmax.f32 %v381, 0.0
        %v1022 = vmax.f32 %v382, 0.0
        %v1023 = vmax.f32 %v383, 0.0
        %v1024 = vmax.f32 %v384, 0.0
        %v1025 = vmax.f32 %v385, 0.0
        %v1026 = vmax.f32 %v386, 0.0
        %v1027 = vmax.f32 %v387, 0.0
        %v1028 = vmax.f32 %v388, 0.0
        %v1029 = vmax.f32 %v389, 0.0
        %v1030 = vmax.f32 %v390, 0.0
        %v1031 = vmax.f32 %v391, 0.0
        %v1032 = vmax.f32 %v392, 0.0
        %v1033 = vmax.f32 %v393, 0.0
        %v1034 = vmax.f32 %v394, 0.0
        %v1035 = vmax.f32 %v395, 0.0
        %v1036 = vmax.f32 %v396, 0.0
        %v1037 = vmax.f32 %v397, 0.0
        %v1038 = vmax.f32 %v398, 0.0
        %v1039 = vmax.f32 %v399, 0.0
        %v1040 = vmax.f32 %v400, 0.0
        %v1041 = vmax.f32 %v401, 0.0
        %v1042 = vmax.f32 %v402, 0.0
        %v1043 = vmax.f32 %v403, 0.0
        %v1044 = vmax.f32 %v404, 0.0
        %v1045 = vmax.f32 %v405, 0.0
        %v1046 = vmax.f32 %v406, 0.0
        %v1047 = vmax.f32 %v407, 0.0
        %v1048 = vmax.f32 %v408, 0.0
        %v1049 = vmax.f32 %v409, 0.0
        %v1050 = vmax.f32 %v410, 0.0
        %v1051 = vmax.f32 %v411, 0.0
        %v1052 = vmax.f32 %v412, 0.0
        %v1053 = vmax.f32 %v413, 0.0
        %v1054 = vmax.f32 %v414, 0.0
        %v1055 = vmax.f32 %v415, 0.0
        %v1056 = vmax.f32 %v416, 0.0
        %v1057 = vmax.f32 %v417, 0.0
        %v1058 = vmax.f32 %v418, 0.0
        %v1059 = vmax.f32 %v419, 0.0
        %v1060 = vmax.f32 %v420, 0.0
        %v1061 = vmax.f32 %v421, 0.0
        %v1062 = vmax.f32 %v422, 0.0
        %v1063 = vmax.f32 %v423, 0.0
        %v1064 = vmax.f32 %v424, 0.0
        %v1065 = vmax.f32 %v425, 0.0
        %v1066 = vmax.f32 %v426, 0.0
        %v1067 = vmax.f32 %v427, 0.0
        %v1068 = vmax.f32 %v428, 0.0
        %v1069 = vmax.f32 %v429, 0.0
        %v1070 = vmax.f32 %v430, 0.0
        %v1071 = vmax.f32 %v431, 0.0
        %v1072 = vmax.f32 %v432, 0.0
        %v1073 = vmax.f32 %v433, 0.0
        %v1074 = vmax.f32 %v434, 0.0
        %v1075 = vmax.f32 %v435, 0.0
        %v1076 = vmax.f32 %v436, 0.0
        %v1077 = vmax.f32 %v437, 0.0
        %v1078 = vmax.f32 %v438, 0.0
        %v1079 = vmax.f32 %v439, 0.0
        %v1080 = vmax.f32 %v440, 0.0
        %v1081 = vmax.f32 %v441, 0.0
        %v1082 = vmax.f32 %v442, 0.0
        %v1083 = vmax.f32 %v443, 0.0
        %v1084 = vmax.f32 %v444, 0.0
        %v1085 = vmax.f32 %v445, 0.0
        %v1086 = vmax.f32 %v446, 0.0
        %v1087 = vmax.f32 %v447, 0.0
        %v1088 = vmax.f32 %v448, 0.0
        %v1089 = vmax.f32 %v449, 0.0
        %v1090 = vmax.f32 %v450, 0.0
        %v1091 = vmax.f32 %v451, 0.0
        %v1092 = vmax.f32 %v452, 0.0
        %v1093 = vmax.f32 %v453, 0.0
        %v1094 = vmax.f32 %v454, 0.0
        %v1095 = vmax.f32 %v455, 0.0
        %v1096 = vmax.f32 %v456, 0.0
        %v1097 = vmax.f32 %v457, 0.0
        %v1098 = vmax.f32 %v458, 0.0
        %v1099 = vmax.f32 %v459, 0.0
        %v1100 = vmax.f32 %v460, 0.0
        %v1101 = vmax.f32 %v461, 0.0
        %v1102 = vmax.f32 %v462, 0.0
        %v1103 = vmax.f32 %v463, 0.0
        %v1104 = vmax.f32 %v464, 0.0
        %v1105 = vmax.f32 %v465, 0.0
        %v1106 = vmax.f32 %v466, 0.0
        %v1107 = vmax.f32 %v467, 0.0
        %v1108 = vmax.f32 %v468, 0.0
        %v1109 = vmax.f32 %v469, 0.0
        %v1110 = vmax.f32 %v470, 0.0
        %v1111 = vmax.f32 %v471, 0.0
        %v1112 = vmax.f32 %v472, 0.0
        %v1113 = vmax.f32 %v473, 0.0
        %v1114 = vmax.f32 %v474, 0.0
        %v1115 = vmax.f32 %v475, 0.0
        %v1116 = vmax.f32 %v476, 0.0
        %v1117 = vmax.f32 %v477, 0.0
        %v1118 = vmax.f32 %v478, 0.0
        %v1119 = vmax.f32 %v479, 0.0
        %v1120 = vmax.f32 %v480, 0.0
        %v1121 = vmax.f32 %v481, 0.0
        %v1122 = vmax.f32 %v482, 0.0
        %v1123 = vmax.f32 %v483, 0.0
        %v1124 = vmax.f32 %v484, 0.0
        %v1125 = vmax.f32 %v485, 0.0
        %v1126 = vmax.f32 %v486, 0.0
        %v1127 = vmax.f32 %v487, 0.0
        %v1128 = vmax.f32 %v488, 0.0
        %v1129 = vmax.f32 %v489, 0.0
        %v1130 = vmax.f32 %v490, 0.0
        %v1131 = vmax.f32 %v491, 0.0
        %v1132 = vmax.f32 %v492, 0.0
        %v1133 = vmax.f32 %v493, 0.0
        %v1134 = vmax.f32 %v494, 0.0
        %v1135 = vmax.f32 %v495, 0.0
        %v1136 = vmax.f32 %v496, 0.0
        %v1137 = vmax.f32 %v497, 0.0
        %v1138 = vmax.f32 %v498, 0.0
        %v1139 = vmax.f32 %v499, 0.0
        %v1140 = vmax.f32 %v500, 0.0
        %v1141 = vmax.f32 %v501, 0.0
        %v1142 = vmax.f32 %v502, 0.0
        %v1143 = vmax.f32 %v503, 0.0
        %v1144 = vmax.f32 %v504, 0.0
        %v1145 = vmax.f32 %v505, 0.0
        %v1146 = vmax.f32 %v506, 0.0
        %v1147 = vmax.f32 %v507, 0.0
        %v1148 = vmax.f32 %v508, 0.0
        %v1149 = vmax.f32 %v509, 0.0
        %v1150 = vmax.f32 %v510, 0.0
        %v1151 = vmax.f32 %v511, 0.0
        %v1152 = vmax.f32 %v512, 0.0
        %v1153 = vmax.f32 %v513, 0.0
        %v1154 = vmax.f32 %v514, 0.0
        %v1155 = vmax.f32 %v515, 0.0
        %v1156 = vmax.f32 %v516, 0.0
        %v1157 = vmax.f32 %v517, 0.0
        %v1158 = vmax.f32 %v518, 0.0
        %v1159 = vmax.f32 %v519, 0.0
        %v1160 = vmax.f32 %v520, 0.0
        %v1161 = vmax.f32 %v521, 0.0
        %v1162 = vmax.f32 %v522, 0.0
        %v1163 = vmax.f32 %v523, 0.0
        %v1164 = vmax.f32 %v524, 0.0
        %v1165 = vmax.f32 %v525, 0.0
        %v1166 = vmax.f32 %v526, 0.0
        %v1167 = vmax.f32 %v527, 0.0
        %v1168 = vmax.f32 %v528, 0.0
        %v1169 = vmax.f32 %v529, 0.0
        %v1170 = vmax.f32 %v530, 0.0
        %v1171 = vmax.f32 %v531, 0.0
        %v1172 = vmax.f32 %v532, 0.0
        %v1173 = vmax.f32 %v533, 0.0
        %v1174 = vmax.f32 %v534, 0.0
        %v1175 = vmax.f32 %v535, 0.0
        %v1176 = vmax.f32 %v536, 0.0
        %v1177 = vmax.f32 %v537, 0.0
        %v1178 = vmax.f32 %v538, 0.0
        %v1179 = vmax.f32 %v539, 0.0
        %v1180 = vmax.f32 %v540, 0.0
        %v1181 = vmax.f32 %v541, 0.0
        %v1182 = vmax.f32 %v542, 0.0
        %v1183 = vmax.f32 %v543, 0.0
        %v1184 = vmax.f32 %v544, 0.0
        %v1185 = vmax.f32 %v545, 0.0
        %v1186 = vmax.f32 %v546, 0.0
        %v1187 = vmax.f32 %v547, 0.0
        %v1188 = vmax.f32 %v548, 0.0
        %v1189 = vmax.f32 %v549, 0.0
        %v1190 = vmax.f32 %v550, 0.0
        %v1191 = vmax.f32 %v551, 0.0
        %v1192 = vmax.f32 %v552, 0.0
        %v1193 = vmax.f32 %v553, 0.0
        %v1194 = vmax.f32 %v554, 0.0
        %v1195 = vmax.f32 %v555, 0.0
        %v1196 = vmax.f32 %v556, 0.0
        %v1197 = vmax.f32 %v557, 0.0
        %v1198 = vmax.f32 %v558, 0.0
        %v1199 = vmax.f32 %v559, 0.0
        %v1200 = vmax.f32 %v560, 0.0
        %v1201 = vmax.f32 %v561, 0.0
        %v1202 = vmax.f32 %v562, 0.0
        %v1203 = vmax.f32 %v563, 0.0
        %v1204 = vmax.f32 %v564, 0.0
        %v1205 = vmax.f32 %v565, 0.0
        %v1206 = vmax.f32 %v566, 0.0
        %v1207 = vmax.f32 %v567, 0.0
        %v1208 = vmax.f32 %v568, 0.0
        %v1209 = vmax.f32 %v569, 0.0
        %v1210 = vmax.f32 %v570, 0.0
        %v1211 = vmax.f32 %v571, 0.0
        %v1212 = vmax.f32 %v572, 0.0
        %v1213 = vmax.f32 %v573, 0.0
        %v1214 = vmax.f32 %v574, 0.0
        %v1215 = vmax.f32 %v575, 0.0
        %v1216 = vmax.f32 %v576, 0.0
        %v1217 = vmax.f32 %v577, 0.0
        %v1218 = vmax.f32 %v578, 0.0
        %v1219 = vmax.f32 %v579, 0.0
        %v1220 = vmax.f32 %v580, 0.0
        %v1221 = vmax.f32 %v581, 0.0
        %v1222 = vmax.f32 %v582, 0.0
        %v1223 = vmax.f32 %v583, 0.0
        %v1224 = vmax.f32 %v584, 0.0
        %v1225 = vmax.f32 %v585, 0.0
        %v1226 = vmax.f32 %v586, 0.0
        %v1227 = vmax.f32 %v587, 0.0
        %v1228 = vmax.f32 %v588, 0.0
        %v1229 = vmax.f32 %v589, 0.0
        %v1230 = vmax.f32 %v590, 0.0
        %v1231 = vmax.f32 %v591, 0.0
        %v1232 = vmax.f32 %v592, 0.0
        %v1233 = vmax.f32 %v593, 0.0
        %v1234 = vmax.f32 %v594, 0.0
        %v1235 = vmax.f32 %v595, 0.0
        %v1236 = vmax.f32 %v596, 0.0
        %v1237 = vmax.f32 %v597, 0.0
        %v1238 = vmax.f32 %v598, 0.0
        %v1239 = vmax.f32 %v599, 0.0
        %v1240 = vmax.f32 %v600, 0.0
        %v1241 = vmax.f32 %v601, 0.0
        %v1242 = vmax.f32 %v602, 0.0
        %v1243 = vmax.f32 %v603, 0.0
        %v1244 = vmax.f32 %v604, 0.0
        %v1245 = vmax.f32 %v605, 0.0
        %v1246 = vmax.f32 %v606, 0.0
        %v1247 = vmax.f32 %v607, 0.0
        %v1248 = vmax.f32 %v608, 0.0
        %v1249 = vmax.f32 %v609, 0.0
        %v1250 = vmax.f32 %v610, 0.0
        %v1251 = vmax.f32 %v611, 0.0
        %v1252 = vmax.f32 %v612, 0.0
        %v1253 = vmax.f32 %v613, 0.0
        %v1254 = vmax.f32 %v614, 0.0
        %v1255 = vmax.f32 %v615, 0.0
        %v1256 = vmax.f32 %v616, 0.0
        %v1257 = vmax.f32 %v617, 0.0
        %v1258 = vmax.f32 %v618, 0.0
        %v1259 = vmax.f32 %v619, 0.0
        %v1260 = vmax.f32 %v620, 0.0
        %v1261 = vmax.f32 %v621, 0.0
        %v1262 = vmax.f32 %v622, 0.0
        %v1263 = vmax.f32 %v623, 0.0
        %v1264 = vmax.f32 %v624, 0.0
        %v1265 = vmax.f32 %v625, 0.0
        %v1266 = vmax.f32 %v626, 0.0
        %v1267 = vmax.f32 %v627, 0.0
        %v1268 = vmax.f32 %v628, 0.0
        %v1269 = vmax.f32 %v629, 0.0
        %v1270 = vmax.f32 %v630, 0.0
        %v1271 = vmax.f32 %v631, 0.0
        %v1272 = vmax.f32 %v632, 0.0
        %v1273 = vmax.f32 %v633, 0.0
        %v1274 = vmax.f32 %v634, 0.0
        %v1275 = vmax.f32 %v635, 0.0
        %v1276 = vmax.f32 %v636, 0.0
        %v1277 = vmax.f32 %v637, 0.0
        %v1278 = vmax.f32 %v638, 0.0
        %v1279 = vmax.f32 %v639, 0.0
        %v1280 = vmax.f32 %v640, 0.0
        %v1281 = vmax.f32 %v641, 0.0
        %v1282 = vmax.f32 %v642, 0.0
        %v1283 = vmax.f32 %v643, 0.0
        %v1284 = vmax.f32 %v644, 0.0
        %v1285 = vmax.f32 %v645, 0.0
        %v1286 = vmax.f32 %v646, 0.0
        %v1287 = vmax.f32 %v647, 0.0
        %v1288 = vmax.f32 %v648, 0.0
        %v1289 = vmax.f32 %v649, 0.0
        %v1290 = vmax.f32 %v650, 0.0
        %v1291 = vmax.f32 %v651, 0.0
        %v1292 = vmax.f32 %v652, 0.0
        %v1293 = vmax.f32 %v653, 0.0
        %v1294 = vmax.f32 %v654, 0.0
        %v1295 = vmax.f32 %v655, 0.0
        %v1296 = vmax.f32 %v656, 0.0
        %v1297 = vmax.f32 %v657, 0.0
        %v1298 = vmax.f32 %v658, 0.0
        %v1299 = vmax.f32 %v659, 0.0
        %v1300 = vmax.f32 %v660, 0.0
        %v1301 = vmax.f32 %v661, 0.0
        %v1302 = vmax.f32 %v662, 0.0
        %v1303 = vmax.f32 %v663, 0.0
        %v1304 = vmax.f32 %v664, 0.0
        %v1305 = vmax.f32 %v665, 0.0
        %v1306 = vmax.f32 %v666, 0.0
        %v1307 = vmax.f32 %v667, 0.0
        %v1308 = vmax.f32 %v668, 0.0
        %v1309 = vmax.f32 %v669, 0.0
        %v1310 = vmax.f32 %v670, 0.0
        %v1311 = vmax.f32 %v671, 0.0
        %v1312 = vmax.f32 %v672, 0.0
        %v1313 = vmax.f32 %v673, 0.0
        %v1314 = vmax.f32 %v674, 0.0
        %v1315 = vmax.f32 %v675, 0.0
        %v1316 = vmax.f32 %v676, 0.0
        %v1317 = vmax.f32 %v677, 0.0
        %v1318 = vmax.f32 %v678, 0.0
        %v1319 = vmax.f32 %v679, 0.0
        %v1320 = vmax.f32 %v680, 0.0
        %v1321 = vmax.f32 %v681, 0.0
        %v1322 = vmax.f32 %v682, 0.0
        %v1323 = vmax.f32 %v683, 0.0
        %v1324 = vmax.f32 %v684, 0.0
        %v1325 = vmax.f32 %v685, 0.0
        %v1326 = vmax.f32 %v686, 0.0
        %v1327 = vmax.f32 %v687, 0.0
        %v1328 = vmax.f32 %v688, 0.0
        %v1329 = vmax.f32 %v689, 0.0
        %v1330 = vmax.f32 %v690, 0.0
        %v1331 = vmax.f32 %v691, 0.0
        %v1332 = vmax.f32 %v692, 0.0
        %v1333 = vmax.f32 %v693, 0.0
        %v1334 = vmax.f32 %v694, 0.0
        %v1335 = vmax.f32 %v695, 0.0
        %v1336 = vmax.f32 %v696, 0.0
        %v1337 = vmax.f32 %v697, 0.0
        %v1338 = vmax.f32 %v698, 0.0
        %v1339 = vmax.f32 %v699, 0.0
        %v1340 = vmax.f32 %v700, 0.0
        %v1341 = vmax.f32 %v701, 0.0
        %v1342 = vmax.f32 %v702, 0.0
        %v1343 = vmax.f32 %v703, 0.0
        %v1344 = vmax.f32 %v704, 0.0
        %v1345 = vmax.f32 %v705, 0.0
        %v1346 = vmax.f32 %v706, 0.0
        %v1347 = vmax.f32 %v707, 0.0
        %v1348 = vmax.f32 %v708, 0.0
        %v1349 = vmax.f32 %v709, 0.0
        %v1350 = vmax.f32 %v710, 0.0
        %v1351 = vmax.f32 %v711, 0.0
        %v1352 = vmax.f32 %v712, 0.0
        %v1353 = vmax.f32 %v713, 0.0
        %v1354 = vmax.f32 %v714, 0.0
        %v1355 = vmax.f32 %v715, 0.0
        %v1356 = vmax.f32 %v716, 0.0
        %v1357 = vmax.f32 %v717, 0.0
        %v1358 = vmax.f32 %v718, 0.0
        %v1359 = vmax.f32 %v719, 0.0
        %v1360 = vmax.f32 %v720, 0.0
        %v1361 = vmax.f32 %v721, 0.0
        %v1362 = vmax.f32 %v722, 0.0
        %v1363 = vmax.f32 %v723, 0.0
        %v1364 = vmax.f32 %v724, 0.0
        %v1365 = vmax.f32 %v725, 0.0
        %v1366 = vmax.f32 %v726, 0.0
        %v1367 = vmax.f32 %v727, 0.0
        %v1368 = vmax.f32 %v728, 0.0
        %v1369 = vmax.f32 %v729, 0.0
        %v1370 = vmax.f32 %v730, 0.0
        %v1371 = vmax.f32 %v731, 0.0
        %v1372 = vmax.f32 %v732, 0.0
        %v1373 = vmax.f32 %v733, 0.0
        %v1374 = vmax.f32 %v734, 0.0
        %v1375 = vmax.f32 %v735, 0.0
        %v1376 = vmax.f32 %v736, 0.0
        %v1377 = vmax.f32 %v737, 0.0
        %v1378 = vmax.f32 %v738, 0.0
        %v1379 = vmax.f32 %v739, 0.0
        %v1380 = vmax.f32 %v740, 0.0
        %v1381 = vmax.f32 %v741, 0.0
        %v1382 = vmax.f32 %v742, 0.0
        %v1383 = vmax.f32 %v743, 0.0
        %v1384 = vmax.f32 %v744, 0.0
        %v1385 = vmax.f32 %v745, 0.0
        %v1386 = vmax.f32 %v746, 0.0
        %v1387 = vmax.f32 %v747, 0.0
        %v1388 = vmax.f32 %v748, 0.0
        %v1389 = vmax.f32 %v749, 0.0
        %v1390 = vmax.f32 %v750, 0.0
        %v1391 = vmax.f32 %v751, 0.0
        %v1392 = vmax.f32 %v752, 0.0
        %v1393 = vmax.f32 %v753, 0.0
        %v1394 = vmax.f32 %v754, 0.0
        %v1395 = vmax.f32 %v755, 0.0
        %v1396 = vmax.f32 %v756, 0.0
        %v1397 = vmax.f32 %v757, 0.0
        %v1398 = vmax.f32 %v758, 0.0
        %v1399 = vmax.f32 %v759, 0.0
        %v1400 = vmax.f32 %v760, 0.0
        %v1401 = vmax.f32 %v761, 0.0
        %v1402 = vmax.f32 %v762, 0.0
        %v1403 = vmax.f32 %v763, 0.0
        %v1404 = vmax.f32 %v764, 0.0
        %v1405 = vmax.f32 %v765, 0.0
        %v1406 = vmax.f32 %v766, 0.0
        %v1407 = vmax.f32 %v767, 0.0
        %v1408 = vmax.f32 %v768, 0.0
        %v1409 = vmax.f32 %v769, 0.0
        %v1410 = vmax.f32 %v770, 0.0
        %v1411 = vmax.f32 %v771, 0.0
        %v1412 = vmax.f32 %v772, 0.0
        %v1413 = vmax.f32 %v773, 0.0
        %v1414 = vmax.f32 %v774, 0.0
        %v1415 = vmax.f32 %v775, 0.0
        %v1416 = vmax.f32 %v776, 0.0
        %v1417 = vmax.f32 %v777, 0.0
        %v1418 = vmax.f32 %v778, 0.0
        %v1419 = vmax.f32 %v779, 0.0
        %v1420 = vmax.f32 %v780, 0.0
        %v1421 = vmax.f32 %v781, 0.0
        %v1422 = vmax.f32 %v782, 0.0
        %v1423 = vmax.f32 %v783, 0.0
        %v1424 = vmax.f32 %v784, 0.0
        %v1425 = vmax.f32 %v785, 0.0
        %v1426 = vmax.f32 %v786, 0.0
        %v1427 = vmax.f32 %v787, 0.0
        %v1428 = vmax.f32 %v788, 0.0
        %v1429 = vmax.f32 %v789, 0.0
        %v1430 = vmax.f32 %v790, 0.0
        %v1431 = vmax.f32 %v791, 0.0
        %v1432 = vmax.f32 %v792, 0.0
        %v1433 = vmax.f32 %v793, 0.0
        %v1434 = vmax.f32 %v794, 0.0
        %v1435 = vmax.f32 %v795, 0.0
        %v1436 = vmax.f32 %v796, 0.0
        %v1437 = vmax.f32 %v797, 0.0
        %v1438 = vmax.f32 %v798, 0.0
        %v1439 = vmax.f32 %v799, 0.0
        %v1440 = vmul.f32 %v800, %v800
        %v1441 = vmul.f32 %v801, %v801
        %v1442 = vmul.f32 %v802, %v802
        %v1443 = vmul.f32 %v803, %v803
        %v1444 = vmul.f32 %v804, %v804
        %v1445 = vmul.f32 %v805, %v805
        %v1446 = vmul.f32 %v806, %v806
        %v1447 = vmul.f32 %v807, %v807
        %v1448 = vmul.f32 %v808, %v808
        %v1449 = vmul.f32 %v809, %v809
        %v1450 = vmul.f32 %v810, %v810
        %v1451 = vmul.f32 %v811, %v811
        %v1452 = vmul.f32 %v812, %v812
        %v1453 = vmul.f32 %v813, %v813
        %v1454 = vmul.f32 %v814, %v814
        %v1455 = vmul.f32 %v815, %v815
        %v1456 = vmul.f32 %v816, %v816
        %v1457 = vmul.f32 %v817, %v817
        %v1458 = vmul.f32 %v818, %v818
        %v1459 = vmul.f32 %v819, %v819
        %v1460 = vmul.f32 %v820, %v820
        %v1461 = vmul.f32 %v821, %v821
        %v1462 = vmul.f32 %v822, %v822
        %v1463 = vmul.f32 %v823, %v823
        %v1464 = vmul.f32 %v824, %v824
        %v1465 = vmul.f32 %v825, %v825
        %v1466 = vmul.f32 %v826, %v826
        %v1467 = vmul.f32 %v827, %v827
        %v1468 = vmul.f32 %v828, %v828
        %v1469 = vmul.f32 %v829, %v829
        %v1470 = vmul.f32 %v830, %v830
        %v1471 = vmul.f32 %v831, %v831
        %v1472 = vmul.f32 %v832, %v832
        %v1473 = vmul.f32 %v833, %v833
        %v1474 = vmul.f32 %v834, %v834
        %v1475 = vmul.f32 %v835, %v835
        %v1476 = vmul.f32 %v836, %v836
        %v1477 = vmul.f32 %v837, %v837
        %v1478 = vmul.f32 %v838, %v838
        %v1479 = vmul.f32 %v839, %v839
        %v1480 = vmul.f32 %v840, %v840
        %v1481 = vmul.f32 %v841, %v841
        %v1482 = vmul.f32 %v842, %v842
        %v1483 = vmul.f32 %v843, %v843
        %v1484 = vmul.f32 %v844, %v844
        %v1485 = vmul.f32 %v845, %v845
        %v1486 = vmul.f32 %v846, %v846
        %v1487 = vmul.f32 %v847, %v847
        %v1488 = vmul.f32 %v848, %v848
        %v1489 = vmul.f32 %v849, %v849
        %v1490 = vmul.f32 %v850, %v850
        %v1491 = vmul.f32 %v851, %v851
        %v1492 = vmul.f32 %v852, %v852
        %v1493 = vmul.f32 %v853, %v853
        %v1494 = vmul.f32 %v854, %v854
        %v1495 = vmul.f32 %v855, %v855
        %v1496 = vmul.f32 %v856, %v856
        %v1497 = vmul.f32 %v857, %v857
        %v1498 = vmul.f32 %v858, %v858
        %v1499 = vmul.f32 %v859, %v859
        %v1500 = vmul.f32 %v860, %v860
        %v1501 = vmul.f32 %v861, %v861
        %v1502 = vmul.f32 %v862, %v862
        %v1503 = vmul.f32 %v863, %v863
        %v1504 = vmul.f32 %v864, %v864
        %v1505 = vmul.f32 %v865, %v865
        %v1506 = vmul.f32 %v866, %v866
        %v1507 = vmul.f32 %v867, %v867
        %v1508 = vmul.f32 %v868, %v868
        %v1509 = vmul.f32 %v869, %v869
        %v1510 = vmul.f32 %v870, %v870
        %v1511 = vmul.f32 %v871, %v871
        %v1512 = vmul.f32 %v872, %v872
        %v1513 = vmul.f32 %v873, %v873
        %v1514 = vmul.f32 %v874, %v874
        %v1515 = vmul.f32 %v875, %v875
        %v1516 = vmul.f32 %v876, %v876
        %v1517 = vmul.f32 %v877, %v877
        %v1518 = vmul.f32 %v878, %v878
        %v1519 = vmul.f32 %v879, %v879
        %v1520 = vmul.f32 %v880, %v880
        %v1521 = vmul.f32 %v881, %v881
        %v1522 = vmul.f32 %v882, %v882
        %v1523 = vmul.f32 %v883, %v883
        %v1524 = vmul.f32 %v884, %v884
        %v1525 = vmul.f32 %v885, %v885
        %v1526 = vmul.f32 %v886, %v886
        %v1527 = vmul.f32 %v887, %v887
        %v1528 = vmul.f32 %v888, %v888
        %v1529 = vmul.f32 %v889, %v889
        %v1530 = vmul.f32 %v890, %v890
        %v1531 = vmul.f32 %v891, %v891
        %v1532 = vmul.f32 %v892, %v892
        %v1533 = vmul.f32 %v893, %v893
        %v1534 = vmul.f32 %v894, %v894
        %v1535 = vmul.f32 %v895, %v895
        %v1536 = vmul.f32 %v896, %v896
        %v1537 = vmul.f32 %v897, %v897
        %v1538 = vmul.f32 %v898, %v898
        %v1539 = vmul.f32 %v899, %v899
        %v1540 = vmul.f32 %v900, %v900
        %v1541 = vmul.f32 %v901, %v901
        %v1542 = vmul.f32 %v902, %v902
        %v1543 = vmul.f32 %v903, %v903
        %v1544 = vmul.f32 %v904, %v904
        %v1545 = vmul.f32 %v905, %v905
        %v1546 = vmul.f32 %v906, %v906
        %v1547 = vmul.f32 %v907, %v907
        %v1548 = vmul.f32 %v908, %v908
        %v1549 = vmul.f32 %v909, %v909
        %v1550 = vmul.f32 %v910, %v910
        %v1551 = vmul.f32 %v911, %v911
        %v1552 = vmul.f32 %v912, %v912
        %v1553 = vmul.f32 %v913, %v913
        %v1554 = vmul.f32 %v914, %v914
        %v1555 = vmul.f32 %v915, %v915
        %v1556 = vmul.f32 %v916, %v916
        %v1557 = vmul.f32 %v917, %v917
        %v1558 = vmul.f32 %v918, %v918
        %v1559 = vmul.f32 %v919, %v919
        %v1560 = vmul.f32 %v920, %v920
        %v1561 = vmul.f32 %v921, %v921
        %v1562 = vmul.f32 %v922, %v922
        %v1563 = vmul.f32 %v923, %v923
        %v1564 = vmul.f32 %v924, %v924
        %v1565 = vmul.f32 %v925, %v925
        %v1566 = vmul.f32 %v926, %v926
        %v1567 = vmul.f32 %v927, %v927
        %v1568 = vmul.f32 %v928, %v928
        %v1569 = vmul.f32 %v929, %v929
        %v1570 = vmul.f32 %v930, %v930
        %v1571 = vmul.f32 %v931, %v931
        %v1572 = vmul.f32 %v932, %v932
        %v1573 = vmul.f32 %v933, %v933
        %v1574 = vmul.f32 %v934, %v934
        %v1575 = vmul.f32 %v935, %v935
        %v1576 = vmul.f32 %v936, %v936
        %v1577 = vmul.f32 %v937, %v937
        %v1578 = vmul.f32 %v938, %v938
        %v1579 = vmul.f32 %v939, %v939
        %v1580 = vmul.f32 %v940, %v940
        %v1581 = vmul.f32 %v941, %v941
        %v1582 = vmul.f32 %v942, %v942
        %v1583 = vmul.f32 %v943, %v943
        %v1584 = vmul.f32 %v944, %v944
        %v1585 = vmul.f32 %v945, %v945
        %v1586 = vmul.f32 %v946, %v946
        %v1587 = vmul.f32 %v947, %v947
        %v1588 = vmul.f32 %v948, %v948
        %v1589 = vmul.f32 %v949, %v949
        %v1590 = vmul.f32 %v950, %v950
        %v1591 = vmul.f32 %v951, %v951
        %v1592 = vmul.f32 %v952, %v952
        %v1593 = vmul.f32 %v953, %v953
        %v1594 = vmul.f32 %v954, %v954
        %v1595 = vmul.f32 %v955, %v955
        %v1596 = vmul.f32 %v956, %v956
        %v1597 = vmul.f32 %v957, %v957
        %v1598 = vmul.f32 %v958, %v958
        %v1599 = vmul.f32 %v959, %v959
        %v1600 = vmul.f32 %v960, %v960
        %v1601 = vmul.f32 %v961, %v961
        %v1602 = vmul.f32 %v962, %v962
        %v1603 = vmul.f32 %v963, %v963
        %v1604 = vmul.f32 %v964, %v964
        %v1605 = vmul.f32 %v965, %v965
        %v1606 = vmul.f32 %v966, %v966
        %v1607 = vmul.f32 %v967, %v967
        %v1608 = vmul.f32 %v968, %v968
        %v1609 = vmul.f32 %v969, %v969
        %v1610 = vmul.f32 %v970, %v970
        %v1611 = vmul.f32 %v971, %v971
        %v1612 = vmul.f32 %v972, %v972
        %v1613 = vmul.f32 %v973, %v973
        %v1614 = vmul.f32 %v974, %v974
        %v1615 = vmul.f32 %v975, %v975
        %v1616 = vmul.f32 %v976, %v976
        %v1617 = vmul.f32 %v977, %v977
        %v1618 = vmul.f32 %v978, %v978
        %v1619 = vmul.f32 %v979, %v979
        %v1620 = vmul.f32 %v980, %v980
        %v1621 = vmul.f32 %v981, %v981
        %v1622 = vmul.f32 %v982, %v982
        %v1623 = vmul.f32 %v983, %v983
        %v1624 = vmul.f32 %v984, %v984
        %v1625 = vmul.f32 %v985, %v985
        %v1626 = vmul.f32 %v986, %v986
        %v1627 = vmul.f32 %v987, %v987
        %v1628 = vmul.f32 %v988, %v988
        %v1629 = vmul.f32 %v989, %v989
        %v1630 = vmul.f32 %v990, %v990
        %v1631 = vmul.f32 %v991, %v991
        %v1632 = vmul.f32 %v992, %v992
        %v1633 = vmul.f32 %v993, %v993
        %v1634 = vmul.f32 %v994, %v994
        %v1635 = vmul.f32 %v995, %v995
        %v1636 = vmul.f32 %v996, %v996
        %v1637 = vmul.f32 %v997, %v997
        %v1638 = vmul.f32 %v998, %v998
        %v1639 = vmul.f32 %v999, %v999
        %v1640 = vmul.f32 %v1000, %v1000
        %v1641 = vmul.f32 %v1001, %v1001
        %v1642 = vmul.f32 %v1002, %v1002
        %v1643 = vmul.f32 %v1003, %v1003
        %v1644 = vmul.f32 %v1004, %v1004
        %v1645 = vmul.f32 %v1005, %v1005
        %v1646 = vmul.f32 %v1006, %v1006
        %v1647 = vmul.f32 %v1007, %v1007
        %v1648 = vmul.f32 %v1008, %v1008
        %v1649 = vmul.f32 %v1009, %v1009
        %v1650 = vmul.f32 %v1010, %v1010
        %v1651 = vmul.f32 %v1011, %v1011
        %v1652 = vmul.f32 %v1012, %v1012
        %v1653 = vmul.f32 %v1013, %v1013
        %v1654 = vmul.f32 %v1014, %v1014
        %v1655 = vmul.f32 %v1015, %v1015
        %v1656 = vmul.f32 %v1016, %v1016
        %v1657 = vmul.f32 %v1017, %v1017
        %v1658 = vmul.f32 %v1018, %v1018
        %v1659 = vmul.f32 %v1019, %v1019
        %v1660 = vmul.f32 %v1020, %v1020
        %v1661 = vmul.f32 %v1021, %v1021
        %v1662 = vmul.f32 %v1022, %v1022
        %v1663 = vmul.f32 %v1023, %v1023
        %v1664 = vmul.f32 %v1024, %v1024
        %v1665 = vmul.f32 %v1025, %v1025
        %v1666 = vmul.f32 %v1026, %v1026
        %v1667 = vmul.f32 %v1027, %v1027
        %v1668 = vmul.f32 %v1028, %v1028
        %v1669 = vmul.f32 %v1029, %v1029
        %v1670 = vmul.f32 %v1030, %v1030
        %v1671 = vmul.f32 %v1031, %v1031
        %v1672 = vmul.f32 %v1032, %v1032
        %v1673 = vmul.f32 %v1033, %v1033
        %v1674 = vmul.f32 %v1034, %v1034
        %v1675 = vmul.f32 %v1035, %v1035
        %v1676 = vmul.f32 %v1036, %v1036
        %v1677 = vmul.f32 %v1037, %v1037
        %v1678 = vmul.f32 %v1038, %v1038
        %v1679 = vmul.f32 %v1039, %v1039
        %v1680 = vmul.f32 %v1040, %v1040
        %v1681 = vmul.f32 %v1041, %v1041
        %v1682 = vmul.f32 %v1042, %v1042
        %v1683 = vmul.f32 %v1043, %v1043
        %v1684 = vmul.f32 %v1044, %v1044
        %v1685 = vmul.f32 %v1045, %v1045
        %v1686 = vmul.f32 %v1046, %v1046
        %v1687 = vmul.f32 %v1047, %v1047
        %v1688 = vmul.f32 %v1048, %v1048
        %v1689 = vmul.f32 %v1049, %v1049
        %v1690 = vmul.f32 %v1050, %v1050
        %v1691 = vmul.f32 %v1051, %v1051
        %v1692 = vmul.f32 %v1052, %v1052
        %v1693 = vmul.f32 %v1053, %v1053
        %v1694 = vmul.f32 %v1054, %v1054
        %v1695 = vmul.f32 %v1055, %v1055
        %v1696 = vmul.f32 %v1056, %v1056
        %v1697 = vmul.f32 %v1057, %v1057
        %v1698 = vmul.f32 %v1058, %v1058
        %v1699 = vmul.f32 %v1059, %v1059
        %v1700 = vmul.f32 %v1060, %v1060
        %v1701 = vmul.f32 %v1061, %v1061
        %v1702 = vmul.f32 %v1062, %v1062
        %v1703 = vmul.f32 %v1063, %v1063
        %v1704 = vmul.f32 %v1064, %v1064
        %v1705 = vmul.f32 %v1065, %v1065
        %v1706 = vmul.f32 %v1066, %v1066
        %v1707 = vmul.f32 %v1067, %v1067
        %v1708 = vmul.f32 %v1068, %v1068
        %v1709 = vmul.f32 %v1069, %v1069
        %v1710 = vmul.f32 %v1070, %v1070
        %v1711 = vmul.f32 %v1071, %v1071
        %v1712 = vmul.f32 %v1072, %v1072
        %v1713 = vmul.f32 %v1073, %v1073
        %v1714 = vmul.f32 %v1074, %v1074
        %v1715 = vmul.f32 %v1075, %v1075
        %v1716 = vmul.f32 %v1076, %v1076
        %v1717 = vmul.f32 %v1077, %v1077
        %v1718 = vmul.f32 %v1078, %v1078
        %v1719 = vmul.f32 %v1079, %v1079
        %v1720 = vmul.f32 %v1080, %v1080
        %v1721 = vmul.f32 %v1081, %v1081
        %v1722 = vmul.f32 %v1082, %v1082
        %v1723 = vmul.f32 %v1083, %v1083
        %v1724 = vmul.f32 %v1084, %v1084
        %v1725 = vmul.f32 %v1085, %v1085
        %v1726 = vmul.f32 %v1086, %v1086
        %v1727 = vmul.f32 %v1087, %v1087
        %v1728 = vmul.f32 %v1088, %v1088
        %v1729 = vmul.f32 %v1089, %v1089
        %v1730 = vmul.f32 %v1090, %v1090
        %v1731 = vmul.f32 %v1091, %v1091
        %v1732 = vmul.f32 %v1092, %v1092
        %v1733 = vmul.f32 %v1093, %v1093
        %v1734 = vmul.f32 %v1094, %v1094
        %v1735 = vmul.f32 %v1095, %v1095
        %v1736 = vmul.f32 %v1096, %v1096
        %v1737 = vmul.f32 %v1097, %v1097
        %v1738 = vmul.f32 %v1098, %v1098
        %v1739 = vmul.f32 %v1099, %v1099
        %v1740 = vmul.f32 %v1100, %v1100
        %v1741 = vmul.f32 %v1101, %v1101
        %v1742 = vmul.f32 %v1102, %v1102
        %v1743 = vmul.f32 %v1103, %v1103
        %v1744 = vmul.f32 %v1104, %v1104
        %v1745 = vmul.f32 %v1105, %v1105
        %v1746 = vmul.f32 %v1106, %v1106
        %v1747 = vmul.f32 %v1107, %v1107
        %v1748 = vmul.f32 %v1108, %v1108
        %v1749 = vmul.f32 %v1109, %v1109
        %v1750 = vmul.f32 %v1110, %v1110
        %v1751 = vmul.f32 %v1111, %v1111
        %v1752 = vmul.f32 %v1112, %v1112
        %v1753 = vmul.f32 %v1113, %v1113
        %v1754 = vmul.f32 %v1114, %v1114
        %v1755 = vmul.f32 %v1115, %v1115
        %v1756 = vmul.f32 %v1116, %v1116
        %v1757 = vmul.f32 %v1117, %v1117
        %v1758 = vmul.f32 %v1118, %v1118
        %v1759 = vmul.f32 %v1119, %v1119
        %v1760 = vmul.f32 %v1120, %v1120
        %v1761 = vmul.f32 %v1121, %v1121
        %v1762 = vmul.f32 %v1122, %v1122
        %v1763 = vmul.f32 %v1123, %v1123
        %v1764 = vmul.f32 %v1124, %v1124
        %v1765 = vmul.f32 %v1125, %v1125
        %v1766 = vmul.f32 %v1126, %v1126
        %v1767 = vmul.f32 %v1127, %v1127
        %v1768 = vmul.f32 %v1128, %v1128
        %v1769 = vmul.f32 %v1129, %v1129
        %v1770 = vmul.f32 %v1130, %v1130
        %v1771 = vmul.f32 %v1131, %v1131
        %v1772 = vmul.f32 %v1132, %v1132
        %v1773 = vmul.f32 %v1133, %v1133
        %v1774 = vmul.f32 %v1134, %v1134
        %v1775 = vmul.f32 %v1135, %v1135
        %v1776 = vmul.f32 %v1136, %v1136
        %v1777 = vmul.f32 %v1137, %v1137
        %v1778 = vmul.f32 %v1138, %v1138
        %v1779 = vmul.f32 %v1139, %v1139
        %v1780 = vmul.f32 %v1140, %v1140
        %v1781 = vmul.f32 %v1141, %v1141
        %v1782 = vmul.f32 %v1142, %v1142
        %v1783 = vmul.f32 %v1143, %v1143
        %v1784 = vmul.f32 %v1144, %v1144
        %v1785 = vmul.f32 %v1145, %v1145
        %v1786 = vmul.f32 %v1146, %v1146
        %v1787 = vmul.f32 %v1147, %v1147
        %v1788 = vmul.f32 %v1148, %v1148
        %v1789 = vmul.f32 %v1149, %v1149
        %v1790 = vmul.f32 %v1150, %v1150
        %v1791 = vmul.f32 %v1151, %v1151
        %v1792 = vmul.f32 %v1152, %v1152
        %v1793 = vmul.f32 %v1153, %v1153
        %v1794 = vmul.f32 %v1154, %v1154
        %v1795 = vmul.f32 %v1155, %v1155
        %v1796 = vmul.f32 %v1156, %v1156
        %v1797 = vmul.f32 %v1157, %v1157
        %v1798 = vmul.f32 %v1158, %v1158
        %v1799 = vmul.f32 %v1159, %v1159
        %v1800 = vmul.f32 %v1160, %v1160
        %v1801 = vmul.f32 %v1161, %v1161
        %v1802 = vmul.f32 %v1162, %v1162
        %v1803 = vmul.f32 %v1163, %v1163
        %v1804 = vmul.f32 %v1164, %v1164
        %v1805 = vmul.f32 %v1165, %v1165
        %v1806 = vmul.f32 %v1166, %v1166
        %v1807 = vmul.f32 %v1167, %v1167
        %v1808 = vmul.f32 %v1168, %v1168
        %v1809 = vmul.f32 %v1169, %v1169
        %v1810 = vmul.f32 %v1170, %v1170
        %v1811 = vmul.f32 %v1171, %v1171
        %v1812 = vmul.f32 %v1172, %v1172
        %v1813 = vmul.f32 %v1173, %v1173
        %v1814 = vmul.f32 %v1174, %v1174
        %v1815 = vmul.f32 %v1175, %v1175
        %v1816 = vmul.f32 %v1176, %v1176
        %v1817 = vmul.f32 %v1177, %v1177
        %v1818 = vmul.f32 %v1178, %v1178
        %v1819 = vmul.f32 %v1179, %v1179
        %v1820 = vmul.f32 %v1180, %v1180
        %v1821 = vmul.f32 %v1181, %v1181
        %v1822 = vmul.f32 %v1182, %v1182
        %v1823 = vmul.f32 %v1183, %v1183
        %v1824 = vmul.f32 %v1184, %v1184
        %v1825 = vmul.f32 %v1185, %v1185
        %v1826 = vmul.f32 %v1186, %v1186
        %v1827 = vmul.f32 %v1187, %v1187
        %v1828 = vmul.f32 %v1188, %v1188
        %v1829 = vmul.f32 %v1189, %v1189
        %v1830 = vmul.f32 %v1190, %v1190
        %v1831 = vmul.f32 %v1191, %v1191
        %v1832 = vmul.f32 %v1192, %v1192
        %v1833 = vmul.f32 %v1193, %v1193
        %v1834 = vmul.f32 %v1194, %v1194
        %v1835 = vmul.f32 %v1195, %v1195
        %v1836 = vmul.f32 %v1196, %v1196
        %v1837 = vmul.f32 %v1197, %v1197
        %v1838 = vmul.f32 %v1198, %v1198
        %v1839 = vmul.f32 %v1199, %v1199
        %v1840 = vmul.f32 %v1200, %v1200
        %v1841 = vmul.f32 %v1201, %v1201
        %v1842 = vmul.f32 %v1202, %v1202
        %v1843 = vmul.f32 %v1203, %v1203
        %v1844 = vmul.f32 %v1204, %v1204
        %v1845 = vmul.f32 %v1205, %v1205
        %v1846 = vmul.f32 %v1206, %v1206
        %v1847 = vmul.f32 %v1207, %v1207
        %v1848 = vmul.f32 %v1208, %v1208
        %v1849 = vmul.f32 %v1209, %v1209
        %v1850 = vmul.f32 %v1210, %v1210
        %v1851 = vmul.f32 %v1211, %v1211
        %v1852 = vmul.f32 %v1212, %v1212
        %v1853 = vmul.f32 %v1213, %v1213
        %v1854 = vmul.f32 %v1214, %v1214
        %v1855 = vmul.f32 %v1215, %v1215
        %v1856 = vmul.f32 %v1216, %v1216
        %v1857 = vmul.f32 %v1217, %v1217
        %v1858 = vmul.f32 %v1218, %v1218
        %v1859 = vmul.f32 %v1219, %v1219
        %v1860 = vmul.f32 %v1220, %v1220
        %v1861 = vmul.f32 %v1221, %v1221
        %v1862 = vmul.f32 %v1222, %v1222
        %v1863 = vmul.f32 %v1223, %v1223
        %v1864 = vmul.f32 %v1224, %v1224
        %v1865 = vmul.f32 %v1225, %v1225
        %v1866 = vmul.f32 %v1226, %v1226
        %v1867 = vmul.f32 %v1227, %v1227
        %v1868 = vmul.f32 %v1228, %v1228
        %v1869 = vmul.f32 %v1229, %v1229
        %v1870 = vmul.f32 %v1230, %v1230
        %v1871 = vmul.f32 %v1231, %v1231
        %v1872 = vmul.f32 %v1232, %v1232
        %v1873 = vmul.f32 %v1233, %v1233
        %v1874 = vmul.f32 %v1234, %v1234
        %v1875 = vmul.f32 %v1235, %v1235
        %v1876 = vmul.f32 %v1236, %v1236
        %v1877 = vmul.f32 %v1237, %v1237
        %v1878 = vmul.f32 %v1238, %v1238
        %v1879 = vmul.f32 %v1239, %v1239
        %v1880 = vmul.f32 %v1240, %v1240
        %v1881 = vmul.f32 %v1241, %v1241
        %v1882 = vmul.f32 %v1242, %v1242
        %v1883 = vmul.f32 %v1243, %v1243
        %v1884 = vmul.f32 %v1244, %v1244
        %v1885 = vmul.f32 %v1245, %v1245
        %v1886 = vmul.f32 %v1246, %v1246
        %v1887 = vmul.f32 %v1247, %v1247
        %v1888 = vmul.f32 %v1248, %v1248
        %v1889 = vmul.f32 %v1249, %v1249
        %v1890 = vmul.f32 %v1250, %v1250
        %v1891 = vmul.f32 %v1251, %v1251
        %v1892 = vmul.f32 %v1252, %v1252
        %v1893 = vmul.f32 %v1253, %v1253
        %v1894 = vmul.f32 %v1254, %v1254
        %v1895 = vmul.f32 %v1255, %v1255
        %v1896 = vmul.f32 %v1256, %v1256
        %v1897 = vmul.f32 %v1257, %v1257
        %v1898 = vmul.f32 %v1258, %v1258
        %v1899 = vmul.f32 %v1259, %v1259
        %v1900 = vmul.f32 %v1260, %v1260
        %v1901 = vmul.f32 %v1261, %v1261
        %v1902 = vmul.f32 %v1262, %v1262
        %v1903 = vmul.f32 %v1263, %v1263
        %v1904 = vmul.f32 %v1264, %v1264
        %v1905 = vmul.f32 %v1265, %v1265
        %v1906 = vmul.f32 %v1266, %v1266
        %v1907 = vmul.f32 %v1267, %v1267
        %v1908 = vmul.f32 %v1268, %v1268
        %v1909 = vmul.f32 %v1269, %v1269
        %v1910 = vmul.f32 %v1270, %v1270
        %v1911 = vmul.f32 %v1271, %v1271
        %v1912 = vmul.f32 %v1272, %v1272
        %v1913 = vmul.f32 %v1273, %v1273
        %v1914 = vmul.f32 %v1274, %v1274
        %v1915 = vmul.f32 %v1275, %v1275
        %v1916 = vmul.f32 %v1276, %v1276
        %v1917 = vmul.f32 %v1277, %v1277
        %v1918 = vmul.f32 %v1278, %v1278
        %v1919 = vmul.f32 %v1279, %v1279
        %v1920 = vmul.f32 %v1280, %v1280
        %v1921 = vmul.f32 %v1281, %v1281
        %v1922 = vmul.f32 %v1282, %v1282
        %v1923 = vmul.f32 %v1283, %v1283
        %v1924 = vmul.f32 %v1284, %v1284
        %v1925 = vmul.f32 %v1285, %v1285
        %v1926 = vmul.f32 %v1286, %v1286
        %v1927 = vmul.f32 %v1287, %v1287
        %v1928 = vmul.f32 %v1288, %v1288
        %v1929 = vmul.f32 %v1289, %v1289
        %v1930 = vmul.f32 %v1290, %v1290
        %v1931 = vmul.f32 %v1291, %v1291
        %v1932 = vmul.f32 %v1292, %v1292
        %v1933 = vmul.f32 %v1293, %v1293
        %v1934 = vmul.f32 %v1294, %v1294
        %v1935 = vmul.f32 %v1295, %v1295
        %v1936 = vmul.f32 %v1296, %v1296
        %v1937 = vmul.f32 %v1297, %v1297
        %v1938 = vmul.f32 %v1298, %v1298
        %v1939 = vmul.f32 %v1299, %v1299
        %v1940 = vmul.f32 %v1300, %v1300
        %v1941 = vmul.f32 %v1301, %v1301
        %v1942 = vmul.f32 %v1302, %v1302
        %v1943 = vmul.f32 %v1303, %v1303
        %v1944 = vmul.f32 %v1304, %v1304
        %v1945 = vmul.f32 %v1305, %v1305
        %v1946 = vmul.f32 %v1306, %v1306
        %v1947 = vmul.f32 %v1307, %v1307
        %v1948 = vmul.f32 %v1308, %v1308
        %v1949 = vmul.f32 %v1309, %v1309
        %v1950 = vmul.f32 %v1310, %v1310
        %v1951 = vmul.f32 %v1311, %v1311
        %v1952 = vmul.f32 %v1312, %v1312
        %v1953 = vmul.f32 %v1313, %v1313
        %v1954 = vmul.f32 %v1314, %v1314
        %v1955 = vmul.f32 %v1315, %v1315
        %v1956 = vmul.f32 %v1316, %v1316
        %v1957 = vmul.f32 %v1317, %v1317
        %v1958 = vmul.f32 %v1318, %v1318
        %v1959 = vmul.f32 %v1319, %v1319
        %v1960 = vmul.f32 %v1320, %v1320
        %v1961 = vmul.f32 %v1321, %v1321
        %v1962 = vmul.f32 %v1322, %v1322
        %v1963 = vmul.f32 %v1323, %v1323
        %v1964 = vmul.f32 %v1324, %v1324
        %v1965 = vmul.f32 %v1325, %v1325
        %v1966 = vmul.f32 %v1326, %v1326
        %v1967 = vmul.f32 %v1327, %v1327
        %v1968 = vmul.f32 %v1328, %v1328
        %v1969 = vmul.f32 %v1329, %v1329
        %v1970 = vmul.f32 %v1330, %v1330
        %v1971 = vmul.f32 %v1331, %v1331
        %v1972 = vmul.f32 %v1332, %v1332
        %v1973 = vmul.f32 %v1333, %v1333
        %v1974 = vmul.f32 %v1334, %v1334
        %v1975 = vmul.f32 %v1335, %v1335
        %v1976 = vmul.f32 %v1336, %v1336
        %v1977 = vmul.f32 %v1337, %v1337
        %v1978 = vmul.f32 %v1338, %v1338
        %v1979 = vmul.f32 %v1339, %v1339
        %v1980 = vmul.f32 %v1340, %v1340
        %v1981 = vmul.f32 %v1341, %v1341
        %v1982 = vmul.f32 %v1342, %v1342
        %v1983 = vmul.f32 %v1343, %v1343
        %v1984 = vmul.f32 %v1344, %v1344
        %v1985 = vmul.f32 %v1345, %v1345
        %v1986 = vmul.f32 %v1346, %v1346
        %v1987 = vmul.f32 %v1347, %v1347
        %v1988 = vmul.f32 %v1348, %v1348
        %v1989 = vmul.f32 %v1349, %v1349
        %v1990 = vmul.f32 %v1350, %v1350
        %v1991 = vmul.f32 %v1351, %v1351
        %v1992 = vmul.f32 %v1352, %v1352
        %v1993 = vmul.f32 %v1353, %v1353
        %v1994 = vmul.f32 %v1354, %v1354
        %v1995 = vmul.f32 %v1355, %v1355
        %v1996 = vmul.f32 %v1356, %v1356
        %v1997 = vmul.f32 %v1357, %v1357
        %v1998 = vmul.f32 %v1358, %v1358
        %v1999 = vmul.f32 %v1359, %v1359
        %v2000 = vmul.f32 %v1360, %v1360
        %v2001 = vmul.f32 %v1361, %v1361
        %v2002 = vmul.f32 %v1362, %v1362
        %v2003 = vmul.f32 %v1363, %v1363
        %v2004 = vmul.f32 %v1364, %v1364
        %v2005 = vmul.f32 %v1365, %v1365
        %v2006 = vmul.f32 %v1366, %v1366
        %v2007 = vmul.f32 %v1367, %v1367
        %v2008 = vmul.f32 %v1368, %v1368
        %v2009 = vmul.f32 %v1369, %v1369
        %v2010 = vmul.f32 %v1370, %v1370
        %v2011 = vmul.f32 %v1371, %v1371
        %v2012 = vmul.f32 %v1372, %v1372
        %v2013 = vmul.f32 %v1373, %v1373
        %v2014 = vmul.f32 %v1374, %v1374
        %v2015 = vmul.f32 %v1375, %v1375
        %v2016 = vmul.f32 %v1376, %v1376
        %v2017 = vmul.f32 %v1377, %v1377
        %v2018 = vmul.f32 %v1378, %v1378
        %v2019 = vmul.f32 %v1379, %v1379
        %v2020 = vmul.f32 %v1380, %v1380
        %v2021 = vmul.f32 %v1381, %v1381
        %v2022 = vmul.f32 %v1382, %v1382
        %v2023 = vmul.f32 %v1383, %v1383
        %v2024 = vmul.f32 %v1384, %v1384
        %v2025 = vmul.f32 %v1385, %v1385
        %v2026 = vmul.f32 %v1386, %v1386
        %v2027 = vmul.f32 %v1387, %v1387
        %v2028 = vmul.f32 %v1388, %v1388
        %v2029 = vmul.f32 %v1389, %v1389
        %v2030 = vmul.f32 %v1390, %v1390
        %v2031 = vmul.f32 %v1391, %v1391
        %v2032 = vmul.f32 %v1392, %v1392
        %v2033 = vmul.f32 %v1393, %v1393
        %v2034 = vmul.f32 %v1394, %v1394
        %v2035 = vmul.f32 %v1395, %v1395
        %v2036 = vmul.f32 %v1396, %v1396
        %v2037 = vmul.f32 %v1397, %v1397
        %v2038 = vmul.f32 %v1398, %v1398
        %v2039 = vmul.f32 %v1399, %v1399
        %v2040 = vmul.f32 %v1400, %v1400
        %v2041 = vmul.f32 %v1401, %v1401
        %v2042 = vmul.f32 %v1402, %v1402
        %v2043 = vmul.f32 %v1403, %v1403
        %v2044 = vmul.f32 %v1404, %v1404
        %v2045 = vmul.f32 %v1405, %v1405
        %v2046 = vmul.f32 %v1406, %v1406
        %v2047 = vmul.f32 %v1407, %v1407
        %v2048 = vmul.f32 %v1408, %v1408
        %v2049 = vmul.f32 %v1409, %v1409
        %v2050 = vmul.f32 %v1410, %v1410
        %v2051 = vmul.f32 %v1411, %v1411
        %v2052 = vmul.f32 %v1412, %v1412
        %v2053 = vmul.f32 %v1413, %v1413
        %v2054 = vmul.f32 %v1414, %v1414
        %v2055 = vmul.f32 %v1415, %v1415
        %v2056 = vmul.f32 %v1416, %v1416
        %v2057 = vmul.f32 %v1417, %v1417
        %v2058 = vmul.f32 %v1418, %v1418
        %v2059 = vmul.f32 %v1419, %v1419
        %v2060 = vmul.f32 %v1420, %v1420
        %v2061 = vmul.f32 %v1421, %v1421
        %v2062 = vmul.f32 %v1422, %v1422
        %v2063 = vmul.f32 %v1423, %v1423
        %v2064 = vmul.f32 %v1424, %v1424
        %v2065 = vmul.f32 %v1425, %v1425
        %v2066 = vmul.f32 %v1426, %v1426
        %v2067 = vmul.f32 %v1427, %v1427
        %v2068 = vmul.f32 %v1428, %v1428
        %v2069 = vmul.f32 %v1429, %v1429
        %v2070 = vmul.f32 %v1430, %v1430
        %v2071 = vmul.f32 %v1431, %v1431
        %v2072 = vmul.f32 %v1432, %v1432
        %v2073 = vmul.f32 %v1433, %v1433
        %v2074 = vmul.f32 %v1434, %v1434
        %v2075 = vmul.f32 %v1435, %v1435
        %v2076 = vmul.f32 %v1436, %v1436
        %v2077 = vmul.f32 %v1437, %v1437
        %v2078 = vmul.f32 %v1438, %v1438
        %v2079 = vmul.f32 %v1439, %v1439
        %2080 = vst [vmem:[%s155] sm:$0xff] %v1440
        %2081 = vst [vmem:[%s155 + $0x8] sm:$0xff] %v1441
        %2082 = vst [vmem:[%s155 + $0x10] sm:$0xff] %v1442
        %2083 = vst [vmem:[%s155 + $0x18] sm:$0xff] %v1443
        %2084 = vst [vmem:[%s155 + $0x20] sm:$0xff] %v1444
        %2085 = vst [vmem:[%s155 + $0x28] sm:$0xff] %v1445
        %2086 = vst [vmem:[%s155 + $0x30] sm:$0xff] %v1446
        %2087 = vst [vmem:[%s155 + $0x38] sm:$0xff] %v1447
        %2088 = vst [vmem:[%s155 + $0x40] sm:$0xff] %v1448
        %2089 = vst [vmem:[%s155 + $0x48] sm:$0xff] %v1449
        %2090 = vst [vmem:[%s155 + $0x50] sm:$0xff] %v1450
        %2091 = vst [vmem:[%s155 + $0x58] sm:$0xff] %v1451
        %2092 = vst [vmem:[%s155 + $0x60] sm:$0xff] %v1452
        %2093 = vst [vmem:[%s155 + $0x68] sm:$0xff] %v1453
        %2094 = vst [vmem:[%s155 + $0x70] sm:$0xff] %v1454
        %2095 = vst [vmem:[%s155 + $0x78] sm:$0xff] %v1455
        %2096 = vst [vmem:[%s155 + $0x80] sm:$0xff] %v1456
        %2097 = vst [vmem:[%s155 + $0x88] sm:$0xff] %v1457
        %2098 = vst [vmem:[%s155 + $0x90] sm:$0xff] %v1458
        %2099 = vst [vmem:[%s155 + $0x98] sm:$0xff] %v1459
        %2100 = vst [vmem:[%s155 + $0xa0] sm:$0xff] %v1460
        %2101 = vst [vmem:[%s155 + $0xa8] sm:$0xff] %v1461
        %2102 = vst [vmem:[%s155 + $0xb0] sm:$0xff] %v1462
        %2103 = vst [vmem:[%s155 + $0xb8] sm:$0xff] %v1463
        %2104 = vst [vmem:[%s155 + $0xc0] sm:$0xff] %v1464
        %2105 = vst [vmem:[%s155 + $0xc8] sm:$0xff] %v1465
        %2106 = vst [vmem:[%s155 + $0xd0] sm:$0xff] %v1466
        %2107 = vst [vmem:[%s155 + $0xd8] sm:$0xff] %v1467
        %2108 = vst [vmem:[%s155 + $0xe0] sm:$0xff] %v1468
        %2109 = vst [vmem:[%s155 + $0xe8] sm:$0xff] %v1469
        %2110 = vst [vmem:[%s155 + $0xf0] sm:$0xff] %v1470
        %2111 = vst [vmem:[%s155 + $0xf8] sm:$0xff] %v1471
        %2112 = vst [vmem:[%s155 + $0x100] sm:$0xff] %v1472
        %2113 = vst [vmem:[%s155 + $0x108] sm:$0xff] %v1473
        %2114 = vst [vmem:[%s155 + $0x110] sm:$0xff] %v1474
        %2115 = vst [vmem:[%s155 + $0x118] sm:$0xff] %v1475
        %2116 = vst [vmem:[%s155 + $0x120] sm:$0xff] %v1476
        %2117 = vst [vmem:[%s155 + $0x128] sm:$0xff] %v1477
        %2118 = vst [vmem:[%s155 + $0x130] sm:$0xff] %v1478
        %2119 = vst [vmem:[%s155 + $0x138] sm:$0xff] %v1479
        %2120 = vst [vmem:[%s155 + $0x140] sm:$0xff] %v1480
        %2121 = vst [vmem:[%s155 + $0x148] sm:$0xff] %v1481
        %2122 = vst [vmem:[%s155 + $0x150] sm:$0xff] %v1482
        %2123 = vst [vmem:[%s155 + $0x158] sm:$0xff] %v1483
        %2124 = vst [vmem:[%s155 + $0x160] sm:$0xff] %v1484
        %2125 = vst [vmem:[%s155 + $0x168] sm:$0xff] %v1485
        %2126 = vst [vmem:[%s155 + $0x170] sm:$0xff] %v1486
        %2127 = vst [vmem:[%s155 + $0x178] sm:$0xff] %v1487
        %2128 = vst [vmem:[%s155 + $0x180] sm:$0xff] %v1488
        %2129 = vst [vmem:[%s155 + $0x188] sm:$0xff] %v1489
        %2130 = vst [vmem:[%s155 + $0x190] sm:$0xff] %v1490
        %2131 = vst [vmem:[%s155 + $0x198] sm:$0xff] %v1491
        %2132 = vst [vmem:[%s155 + $0x1a0] sm:$0xff] %v1492
        %2133 = vst [vmem:[%s155 + $0x1a8] sm:$0xff] %v1493
        %2134 = vst [vmem:[%s155 + $0x1b0] sm:$0xff] %v1494
        %2135 = vst [vmem:[%s155 + $0x1b8] sm:$0xff] %v1495
        %2136 = vst [vmem:[%s155 + $0x1c0] sm:$0xff] %v1496
        %2137 = vst [vmem:[%s155 + $0x1c8] sm:$0xff] %v1497
        %2138 = vst [vmem:[%s155 + $0x1d0] sm:$0xff] %v1498
        %2139 = vst [vmem:[%s155 + $0x1d8] sm:$0xff] %v1499
        %2140 = vst [vmem:[%s155 + $0x1e0] sm:$0xff] %v1500
        %2141 = vst [vmem:[%s155 + $0x1e8] sm:$0xff] %v1501
        %2142 = vst [vmem:[%s155 + $0x1f0] sm:$0xff] %v1502
        %2143 = vst [vmem:[%s155 + $0x1f8] sm:$0xff] %v1503
        %2144 = vst [vmem:[%s155 + $0x200] sm:$0xff] %v1504
        %2145 = vst [vmem:[%s155 + $0x208] sm:$0xff] %v1505
        %2146 = vst [vmem:[%s155 + $0x210] sm:$0xff] %v1506
        %2147 = vst [vmem:[%s155 + $0x218] sm:$0xff] %v1507
        %2148 = vst [vmem:[%s155 + $0x220] sm:$0xff] %v1508
        %2149 = vst [vmem:[%s155 + $0x228] sm:$0xff] %v1509
        %2150 = vst [vmem:[%s155 + $0x230] sm:$0xff] %v1510
        %2151 = vst [vmem:[%s155 + $0x238] sm:$0xff] %v1511
        %2152 = vst [vmem:[%s155 + $0x240] sm:$0xff] %v1512
        %2153 = vst [vmem:[%s155 + $0x248] sm:$0xff] %v1513
        %2154 = vst [vmem:[%s155 + $0x250] sm:$0xff] %v1514
        %2155 = vst [vmem:[%s155 + $0x258] sm:$0xff] %v1515
        %2156 = vst [vmem:[%s155 + $0x260] sm:$0xff] %v1516
        %2157 = vst [vmem:[%s155 + $0x268] sm:$0xff] %v1517
        %2158 = vst [vmem:[%s155 + $0x270] sm:$0xff] %v1518
        %2159 = vst [vmem:[%s155 + $0x278] sm:$0xff] %v1519
        %2160 = vst [vmem:[%s155 + $0x280] sm:$0xff] %v1520
        %2161 = vst [vmem:[%s155 + $0x288] sm:$0xff] %v1521
        %2162 = vst [vmem:[%s155 + $0x290] sm:$0xff] %v1522
        %2163 = vst [vmem:[%s155 + $0x298] sm:$0xff] %v1523
        %2164 = vst [vmem:[%s155 + $0x2a0] sm:$0xff] %v1524
        %2165 = vst [vmem:[%s155 + $0x2a8] sm:$0xff] %v1525
        %2166 = vst [vmem:[%s155 + $0x2b0] sm:$0xff] %v1526
        %2167 = vst [vmem:[%s155 + $0x2b8] sm:$0xff] %v1527
        %2168 = vst [vmem:[%s155 + $0x2c0] sm:$0xff] %v1528
        %2169 = vst [vmem:[%s155 + $0x2c8] sm:$0xff] %v1529
        %2170 = vst [vmem:[%s155 + $0x2d0] sm:$0xff] %v1530
        %2171 = vst [vmem:[%s155 + $0x2d8] sm:$0xff] %v1531
        %2172 = vst [vmem:[%s155 + $0x2e0] sm:$0xff] %v1532
        %2173 = vst [vmem:[%s155 + $0x2e8] sm:$0xff] %v1533
        %2174 = vst [vmem:[%s155 + $0x2f0] sm:$0xff] %v1534
        %2175 = vst [vmem:[%s155 + $0x2f8] sm:$0xff] %v1535
        %2176 = vst [vmem:[%s155 + $0x300] sm:$0xff] %v1536
        %2177 = vst [vmem:[%s155 + $0x308] sm:$0xff] %v1537
        %2178 = vst [vmem:[%s155 + $0x310] sm:$0xff] %v1538
        %2179 = vst [vmem:[%s155 + $0x318] sm:$0xff] %v1539
        %2180 = vst [vmem:[%s155 + $0x320] sm:$0xff] %v1540
        %2181 = vst [vmem:[%s155 + $0x328] sm:$0xff] %v1541
        %2182 = vst [vmem:[%s155 + $0x330] sm:$0xff] %v1542
        %2183 = vst [vmem:[%s155 + $0x338] sm:$0xff] %v1543
        %2184 = vst [vmem:[%s155 + $0x340] sm:$0xff] %v1544
        %2185 = vst [vmem:[%s155 + $0x348] sm:$0xff] %v1545
        %2186 = vst [vmem:[%s155 + $0x350] sm:$0xff] %v1546
        %2187 = vst [vmem:[%s155 + $0x358] sm:$0xff] %v1547
        %2188 = vst [vmem:[%s155 + $0x360] sm:$0xff] %v1548
        %2189 = vst [vmem:[%s155 + $0x368] sm:$0xff] %v1549
        %2190 = vst [vmem:[%s155 + $0x370] sm:$0xff] %v1550
        %2191 = vst [vmem:[%s155 + $0x378] sm:$0xff] %v1551
        %2192 = vst [vmem:[%s155 + $0x380] sm:$0xff] %v1552
        %2193 = vst [vmem:[%s155 + $0x388] sm:$0xff] %v1553
        %2194 = vst [vmem:[%s155 + $0x390] sm:$0xff] %v1554
        %2195 = vst [vmem:[%s155 + $0x398] sm:$0xff] %v1555
        %2196 = vst [vmem:[%s155 + $0x3a0] sm:$0xff] %v1556
        %2197 = vst [vmem:[%s155 + $0x3a8] sm:$0xff] %v1557
        %2198 = vst [vmem:[%s155 + $0x3b0] sm:$0xff] %v1558
        %2199 = vst [vmem:[%s155 + $0x3b8] sm:$0xff] %v1559
        %2200 = vst [vmem:[%s155 + $0x3c0] sm:$0xff] %v1560
        %2201 = vst [vmem:[%s155 + $0x3c8] sm:$0xff] %v1561
        %2202 = vst [vmem:[%s155 + $0x3d0] sm:$0xff] %v1562
        %2203 = vst [vmem:[%s155 + $0x3d8] sm:$0xff] %v1563
        %2204 = vst [vmem:[%s155 + $0x3e0] sm:$0xff] %v1564
        %2205 = vst [vmem:[%s155 + $0x3e8] sm:$0xff] %v1565
        %2206 = vst [vmem:[%s155 + $0x3f0] sm:$0xff] %v1566
        %2207 = vst [vmem:[%s155 + $0x3f8] sm:$0xff] %v1567
        %2208 = vst [vmem:[%s155 + $0x400] sm:$0xff] %v1568
        %2209 = vst [vmem:[%s155 + $0x408] sm:$0xff] %v1569
        %2210 = vst [vmem:[%s155 + $0x410] sm:$0xff] %v1570
        %2211 = vst [vmem:[%s155 + $0x418] sm:$0xff] %v1571
        %2212 = vst [vmem:[%s155 + $0x420] sm:$0xff] %v1572
        %2213 = vst [vmem:[%s155 + $0x428] sm:$0xff] %v1573
        %2214 = vst [vmem:[%s155 + $0x430] sm:$0xff] %v1574
        %2215 = vst [vmem:[%s155 + $0x438] sm:$0xff] %v1575
        %2216 = vst [vmem:[%s155 + $0x440] sm:$0xff] %v1576
        %2217 = vst [vmem:[%s155 + $0x448] sm:$0xff] %v1577
        %2218 = vst [vmem:[%s155 + $0x450] sm:$0xff] %v1578
        %2219 = vst [vmem:[%s155 + $0x458] sm:$0xff] %v1579
        %2220 = vst [vmem:[%s155 + $0x460] sm:$0xff] %v1580
        %2221 = vst [vmem:[%s155 + $0x468] sm:$0xff] %v1581
        %2222 = vst [vmem:[%s155 + $0x470] sm:$0xff] %v1582
        %2223 = vst [vmem:[%s155 + $0x478] sm:$0xff] %v1583
        %2224 = vst [vmem:[%s155 + $0x480] sm:$0xff] %v1584
        %2225 = vst [vmem:[%s155 + $0x488] sm:$0xff] %v1585
        %2226 = vst [vmem:[%s155 + $0x490] sm:$0xff] %v1586
        %2227 = vst [vmem:[%s155 + $0x498] sm:$0xff] %v1587
        %2228 = vst [vmem:[%s155 + $0x4a0] sm:$0xff] %v1588
        %2229 = vst [vmem:[%s155 + $0x4a8] sm:$0xff] %v1589
        %2230 = vst [vmem:[%s155 + $0x4b0] sm:$0xff] %v1590
        %2231 = vst [vmem:[%s155 + $0x4b8] sm:$0xff] %v1591
        %2232 = vst [vmem:[%s155 + $0x4c0] sm:$0xff] %v1592
        %2233 = vst [vmem:[%s155 + $0x4c8] sm:$0xff] %v1593
        %2234 = vst [vmem:[%s155 + $0x4d0] sm:$0xff] %v1594
        %2235 = vst [vmem:[%s155 + $0x4d8] sm:$0xff] %v1595
        %2236 = vst [vmem:[%s155 + $0x4e0] sm:$0xff] %v1596
        %2237 = vst [vmem:[%s155 + $0x4e8] sm:$0xff] %v1597
        %2238 = vst [vmem:[%s155 + $0x4f0] sm:$0xff] %v1598
        %2239 = vst [vmem:[%s155 + $0x4f8] sm:$0xff] %v1599
        %2240 = vst [vmem:[%s155 + $0x500] sm:$0xff] %v1600
        %2241 = vst [vmem:[%s155 + $0x508] sm:$0xff] %v1601
        %2242 = vst [vmem:[%s155 + $0x510] sm:$0xff] %v1602
        %2243 = vst [vmem:[%s155 + $0x518] sm:$0xff] %v1603
        %2244 = vst [vmem:[%s155 + $0x520] sm:$0xff] %v1604
        %2245 = vst [vmem:[%s155 + $0x528] sm:$0xff] %v1605
        %2246 = vst [vmem:[%s155 + $0x530] sm:$0xff] %v1606
        %2247 = vst [vmem:[%s155 + $0x538] sm:$0xff] %v1607
        %2248 = vst [vmem:[%s155 + $0x540] sm:$0xff] %v1608
        %2249 = vst [vmem:[%s155 + $0x548] sm:$0xff] %v1609
        %2250 = vst [vmem:[%s155 + $0x550] sm:$0xff] %v1610
        %2251 = vst [vmem:[%s155 + $0x558] sm:$0xff] %v1611
        %2252 = vst [vmem:[%s155 + $0x560] sm:$0xff] %v1612
        %2253 = vst [vmem:[%s155 + $0x568] sm:$0xff] %v1613
        %2254 = vst [vmem:[%s155 + $0x570] sm:$0xff] %v1614
        %2255 = vst [vmem:[%s155 + $0x578] sm:$0xff] %v1615
        %2256 = vst [vmem:[%s155 + $0x580] sm:$0xff] %v1616
        %2257 = vst [vmem:[%s155 + $0x588] sm:$0xff] %v1617
        %2258 = vst [vmem:[%s155 + $0x590] sm:$0xff] %v1618
        %2259 = vst [vmem:[%s155 + $0x598] sm:$0xff] %v1619
        %2260 = vst [vmem:[%s155 + $0x5a0] sm:$0xff] %v1620
        %2261 = vst [vmem:[%s155 + $0x5a8] sm:$0xff] %v1621
        %2262 = vst [vmem:[%s155 + $0x5b0] sm:$0xff] %v1622
        %2263 = vst [vmem:[%s155 + $0x5b8] sm:$0xff] %v1623
        %2264 = vst [vmem:[%s155 + $0x5c0] sm:$0xff] %v1624
        %2265 = vst [vmem:[%s155 + $0x5c8] sm:$0xff] %v1625
        %2266 = vst [vmem:[%s155 + $0x5d0] sm:$0xff] %v1626
        %2267 = vst [vmem:[%s155 + $0x5d8] sm:$0xff] %v1627
        %2268 = vst [vmem:[%s155 + $0x5e0] sm:$0xff] %v1628
        %2269 = vst [vmem:[%s155 + $0x5e8] sm:$0xff] %v1629
        %2270 = vst [vmem:[%s155 + $0x5f0] sm:$0xff] %v1630
        %2271 = vst [vmem:[%s155 + $0x5f8] sm:$0xff] %v1631
        %2272 = vst [vmem:[%s155 + $0x600] sm:$0xff] %v1632
        %2273 = vst [vmem:[%s155 + $0x608] sm:$0xff] %v1633
        %2274 = vst [vmem:[%s155 + $0x610] sm:$0xff] %v1634
        %2275 = vst [vmem:[%s155 + $0x618] sm:$0xff] %v1635
        %2276 = vst [vmem:[%s155 + $0x620] sm:$0xff] %v1636
        %2277 = vst [vmem:[%s155 + $0x628] sm:$0xff] %v1637
        %2278 = vst [vmem:[%s155 + $0x630] sm:$0xff] %v1638
        %2279 = vst [vmem:[%s155 + $0x638] sm:$0xff] %v1639
        %2280 = vst [vmem:[%s155 + $0x640] sm:$0xff] %v1640
        %2281 = vst [vmem:[%s155 + $0x648] sm:$0xff] %v1641
        %2282 = vst [vmem:[%s155 + $0x650] sm:$0xff] %v1642
        %2283 = vst [vmem:[%s155 + $0x658] sm:$0xff] %v1643
        %2284 = vst [vmem:[%s155 + $0x660] sm:$0xff] %v1644
        %2285 = vst [vmem:[%s155 + $0x668] sm:$0xff] %v1645
        %2286 = vst [vmem:[%s155 + $0x670] sm:$0xff] %v1646
        %2287 = vst [vmem:[%s155 + $0x678] sm:$0xff] %v1647
        %2288 = vst [vmem:[%s155 + $0x680] sm:$0xff] %v1648
        %2289 = vst [vmem:[%s155 + $0x688] sm:$0xff] %v1649
        %2290 = vst [vmem:[%s155 + $0x690] sm:$0xff] %v1650
        %2291 = vst [vmem:[%s155 + $0x698] sm:$0xff] %v1651
        %2292 = vst [vmem:[%s155 + $0x6a0] sm:$0xff] %v1652
        %2293 = vst [vmem:[%s155 + $0x6a8] sm:$0xff] %v1653
        %2294 = vst [vmem:[%s155 + $0x6b0] sm:$0xff] %v1654
        %2295 = vst [vmem:[%s155 + $0x6b8] sm:$0xff] %v1655
        %2296 = vst [vmem:[%s155 + $0x6c0] sm:$0xff] %v1656
        %2297 = vst [vmem:[%s155 + $0x6c8] sm:$0xff] %v1657
        %2298 = vst [vmem:[%s155 + $0x6d0] sm:$0xff] %v1658
        %2299 = vst [vmem:[%s155 + $0x6d8] sm:$0xff] %v1659
        %2300 = vst [vmem:[%s155 + $0x6e0] sm:$0xff] %v1660
        %2301 = vst [vmem:[%s155 + $0x6e8] sm:$0xff] %v1661
        %2302 = vst [vmem:[%s155 + $0x6f0] sm:$0xff] %v1662
        %2303 = vst [vmem:[%s155 + $0x6f8] sm:$0xff] %v1663
        %2304 = vst [vmem:[%s155 + $0x700] sm:$0xff] %v1664
        %2305 = vst [vmem:[%s155 + $0x708] sm:$0xff] %v1665
        %2306 = vst [vmem:[%s155 + $0x710] sm:$0xff] %v1666
        %2307 = vst [vmem:[%s155 + $0x718] sm:$0xff] %v1667
        %2308 = vst [vmem:[%s155 + $0x720] sm:$0xff] %v1668
        %2309 = vst [vmem:[%s155 + $0x728] sm:$0xff] %v1669
        %2310 = vst [vmem:[%s155 + $0x730] sm:$0xff] %v1670
        %2311 = vst [vmem:[%s155 + $0x738] sm:$0xff] %v1671
        %2312 = vst [vmem:[%s155 + $0x740] sm:$0xff] %v1672
        %2313 = vst [vmem:[%s155 + $0x748] sm:$0xff] %v1673
        %2314 = vst [vmem:[%s155 + $0x750] sm:$0xff] %v1674
        %2315 = vst [vmem:[%s155 + $0x758] sm:$0xff] %v1675
        %2316 = vst [vmem:[%s155 + $0x760] sm:$0xff] %v1676
        %2317 = vst [vmem:[%s155 + $0x768] sm:$0xff] %v1677
        %2318 = vst [vmem:[%s155 + $0x770] sm:$0xff] %v1678
        %2319 = vst [vmem:[%s155 + $0x778] sm:$0xff] %v1679
        %2320 = vst [vmem:[%s155 + $0x780] sm:$0xff] %v1680
        %2321 = vst [vmem:[%s155 + $0x788] sm:$0xff] %v1681
        %2322 = vst [vmem:[%s155 + $0x790] sm:$0xff] %v1682
        %2323 = vst [vmem:[%s155 + $0x798] sm:$0xff] %v1683
        %2324 = vst [vmem:[%s155 + $0x7a0] sm:$0xff] %v1684
        %2325 = vst [vmem:[%s155 + $0x7a8] sm:$0xff] %v1685
        %2326 = vst [vmem:[%s155 + $0x7b0] sm:$0xff] %v1686
        %2327 = vst [vmem:[%s155 + $0x7b8] sm:$0xff] %v1687
        %2328 = vst [vmem:[%s155 + $0x7c0] sm:$0xff] %v1688
        %2329 = vst [vmem:[%s155 + $0x7c8] sm:$0xff] %v1689
        %2330 = vst [vmem:[%s155 + $0x7d0] sm:$0xff] %v1690
        %2331 = vst [vmem:[%s155 + $0x7d8] sm:$0xff] %v1691
        %2332 = vst [vmem:[%s155 + $0x7e0] sm:$0xff] %v1692
        %2333 = vst [vmem:[%s155 + $0x7e8] sm:$0xff] %v1693
        %2334 = vst [vmem:[%s155 + $0x7f0] sm:$0xff] %v1694
        %2335 = vst [vmem:[%s155 + $0x7f8] sm:$0xff] %v1695
        %2336 = vst [vmem:[%s155 + $0x800] sm:$0xff] %v1696
        %2337 = vst [vmem:[%s155 + $0x808] sm:$0xff] %v1697
        %2338 = vst [vmem:[%s155 + $0x810] sm:$0xff] %v1698
        %2339 = vst [vmem:[%s155 + $0x818] sm:$0xff] %v1699
        %2340 = vst [vmem:[%s155 + $0x820] sm:$0xff] %v1700
        %2341 = vst [vmem:[%s155 + $0x828] sm:$0xff] %v1701
        %2342 = vst [vmem:[%s155 + $0x830] sm:$0xff] %v1702
        %2343 = vst [vmem:[%s155 + $0x838] sm:$0xff] %v1703
        %2344 = vst [vmem:[%s155 + $0x840] sm:$0xff] %v1704
        %2345 = vst [vmem:[%s155 + $0x848] sm:$0xff] %v1705
        %2346 = vst [vmem:[%s155 + $0x850] sm:$0xff] %v1706
        %2347 = vst [vmem:[%s155 + $0x858] sm:$0xff] %v1707
        %2348 = vst [vmem:[%s155 + $0x860] sm:$0xff] %v1708
        %2349 = vst [vmem:[%s155 + $0x868] sm:$0xff] %v1709
        %2350 = vst [vmem:[%s155 + $0x870] sm:$0xff] %v1710
        %2351 = vst [vmem:[%s155 + $0x878] sm:$0xff] %v1711
        %2352 = vst [vmem:[%s155 + $0x880] sm:$0xff] %v1712
        %2353 = vst [vmem:[%s155 + $0x888] sm:$0xff] %v1713
        %2354 = vst [vmem:[%s155 + $0x890] sm:$0xff] %v1714
        %2355 = vst [vmem:[%s155 + $0x898] sm:$0xff] %v1715
        %2356 = vst [vmem:[%s155 + $0x8a0] sm:$0xff] %v1716
        %2357 = vst [vmem:[%s155 + $0x8a8] sm:$0xff] %v1717
        %2358 = vst [vmem:[%s155 + $0x8b0] sm:$0xff] %v1718
        %2359 = vst [vmem:[%s155 + $0x8b8] sm:$0xff] %v1719
        %2360 = vst [vmem:[%s155 + $0x8c0] sm:$0xff] %v1720
        %2361 = vst [vmem:[%s155 + $0x8c8] sm:$0xff] %v1721
        %2362 = vst [vmem:[%s155 + $0x8d0] sm:$0xff] %v1722
        %2363 = vst [vmem:[%s155 + $0x8d8] sm:$0xff] %v1723
        %2364 = vst [vmem:[%s155 + $0x8e0] sm:$0xff] %v1724
        %2365 = vst [vmem:[%s155 + $0x8e8] sm:$0xff] %v1725
        %2366 = vst [vmem:[%s155 + $0x8f0] sm:$0xff] %v1726
        %2367 = vst [vmem:[%s155 + $0x8f8] sm:$0xff] %v1727
        %2368 = vst [vmem:[%s155 + $0x900] sm:$0xff] %v1728
        %2369 = vst [vmem:[%s155 + $0x908] sm:$0xff] %v1729
        %2370 = vst [vmem:[%s155 + $0x910] sm:$0xff] %v1730
        %2371 = vst [vmem:[%s155 + $0x918] sm:$0xff] %v1731
        %2372 = vst [vmem:[%s155 + $0x920] sm:$0xff] %v1732
        %2373 = vst [vmem:[%s155 + $0x928] sm:$0xff] %v1733
        %2374 = vst [vmem:[%s155 + $0x930] sm:$0xff] %v1734
        %2375 = vst [vmem:[%s155 + $0x938] sm:$0xff] %v1735
        %2376 = vst [vmem:[%s155 + $0x940] sm:$0xff] %v1736
        %2377 = vst [vmem:[%s155 + $0x948] sm:$0xff] %v1737
        %2378 = vst [vmem:[%s155 + $0x950] sm:$0xff] %v1738
        %2379 = vst [vmem:[%s155 + $0x958] sm:$0xff] %v1739
        %2380 = vst [vmem:[%s155 + $0x960] sm:$0xff] %v1740
        %2381 = vst [vmem:[%s155 + $0x968] sm:$0xff] %v1741
        %2382 = vst [vmem:[%s155 + $0x970] sm:$0xff] %v1742
        %2383 = vst [vmem:[%s155 + $0x978] sm:$0xff] %v1743
        %2384 = vst [vmem:[%s155 + $0x980] sm:$0xff] %v1744
        %2385 = vst [vmem:[%s155 + $0x988] sm:$0xff] %v1745
        %2386 = vst [vmem:[%s155 + $0x990] sm:$0xff] %v1746
        %2387 = vst [vmem:[%s155 + $0x998] sm:$0xff] %v1747
        %2388 = vst [vmem:[%s155 + $0x9a0] sm:$0xff] %v1748
        %2389 = vst [vmem:[%s155 + $0x9a8] sm:$0xff] %v1749
        %2390 = vst [vmem:[%s155 + $0x9b0] sm:$0xff] %v1750
        %2391 = vst [vmem:[%s155 + $0x9b8] sm:$0xff] %v1751
        %2392 = vst [vmem:[%s155 + $0x9c0] sm:$0xff] %v1752
        %2393 = vst [vmem:[%s155 + $0x9c8] sm:$0xff] %v1753
        %2394 = vst [vmem:[%s155 + $0x9d0] sm:$0xff] %v1754
        %2395 = vst [vmem:[%s155 + $0x9d8] sm:$0xff] %v1755
        %2396 = vst [vmem:[%s155 + $0x9e0] sm:$0xff] %v1756
        %2397 = vst [vmem:[%s155 + $0x9e8] sm:$0xff] %v1757
        %2398 = vst [vmem:[%s155 + $0x9f0] sm:$0xff] %v1758
        %2399 = vst [vmem:[%s155 + $0x9f8] sm:$0xff] %v1759
        %2400 = vst [vmem:[%s155 + $0xa00] sm:$0xff] %v1760
        %2401 = vst [vmem:[%s155 + $0xa08] sm:$0xff] %v1761
        %2402 = vst [vmem:[%s155 + $0xa10] sm:$0xff] %v1762
        %2403 = vst [vmem:[%s155 + $0xa18] sm:$0xff] %v1763
        %2404 = vst [vmem:[%s155 + $0xa20] sm:$0xff] %v1764
        %2405 = vst [vmem:[%s155 + $0xa28] sm:$0xff] %v1765
        %2406 = vst [vmem:[%s155 + $0xa30] sm:$0xff] %v1766
        %2407 = vst [vmem:[%s155 + $0xa38] sm:$0xff] %v1767
        %2408 = vst [vmem:[%s155 + $0xa40] sm:$0xff] %v1768
        %2409 = vst [vmem:[%s155 + $0xa48] sm:$0xff] %v1769
        %2410 = vst [vmem:[%s155 + $0xa50] sm:$0xff] %v1770
        %2411 = vst [vmem:[%s155 + $0xa58] sm:$0xff] %v1771
        %2412 = vst [vmem:[%s155 + $0xa60] sm:$0xff] %v1772
        %2413 = vst [vmem:[%s155 + $0xa68] sm:$0xff] %v1773
        %2414 = vst [vmem:[%s155 + $0xa70] sm:$0xff] %v1774
        %2415 = vst [vmem:[%s155 + $0xa78] sm:$0xff] %v1775
        %2416 = vst [vmem:[%s155 + $0xa80] sm:$0xff] %v1776
        %2417 = vst [vmem:[%s155 + $0xa88] sm:$0xff] %v1777
        %2418 = vst [vmem:[%s155 + $0xa90] sm:$0xff] %v1778
        %2419 = vst [vmem:[%s155 + $0xa98] sm:$0xff] %v1779
        %2420 = vst [vmem:[%s155 + $0xaa0] sm:$0xff] %v1780
        %2421 = vst [vmem:[%s155 + $0xaa8] sm:$0xff] %v1781
        %2422 = vst [vmem:[%s155 + $0xab0] sm:$0xff] %v1782
        %2423 = vst [vmem:[%s155 + $0xab8] sm:$0xff] %v1783
        %2424 = vst [vmem:[%s155 + $0xac0] sm:$0xff] %v1784
        %2425 = vst [vmem:[%s155 + $0xac8] sm:$0xff] %v1785
        %2426 = vst [vmem:[%s155 + $0xad0] sm:$0xff] %v1786
        %2427 = vst [vmem:[%s155 + $0xad8] sm:$0xff] %v1787
        %2428 = vst [vmem:[%s155 + $0xae0] sm:$0xff] %v1788
        %2429 = vst [vmem:[%s155 + $0xae8] sm:$0xff] %v1789
        %2430 = vst [vmem:[%s155 + $0xaf0] sm:$0xff] %v1790
        %2431 = vst [vmem:[%s155 + $0xaf8] sm:$0xff] %v1791
        %2432 = vst [vmem:[%s155 + $0xb00] sm:$0xff] %v1792
        %2433 = vst [vmem:[%s155 + $0xb08] sm:$0xff] %v1793
        %2434 = vst [vmem:[%s155 + $0xb10] sm:$0xff] %v1794
        %2435 = vst [vmem:[%s155 + $0xb18] sm:$0xff] %v1795
        %2436 = vst [vmem:[%s155 + $0xb20] sm:$0xff] %v1796
        %2437 = vst [vmem:[%s155 + $0xb28] sm:$0xff] %v1797
        %2438 = vst [vmem:[%s155 + $0xb30] sm:$0xff] %v1798
        %2439 = vst [vmem:[%s155 + $0xb38] sm:$0xff] %v1799
        %2440 = vst [vmem:[%s155 + $0xb40] sm:$0xff] %v1800
        %2441 = vst [vmem:[%s155 + $0xb48] sm:$0xff] %v1801
        %2442 = vst [vmem:[%s155 + $0xb50] sm:$0xff] %v1802
        %2443 = vst [vmem:[%s155 + $0xb58] sm:$0xff] %v1803
        %2444 = vst [vmem:[%s155 + $0xb60] sm:$0xff] %v1804
        %2445 = vst [vmem:[%s155 + $0xb68] sm:$0xff] %v1805
        %2446 = vst [vmem:[%s155 + $0xb70] sm:$0xff] %v1806
        %2447 = vst [vmem:[%s155 + $0xb78] sm:$0xff] %v1807
        %2448 = vst [vmem:[%s155 + $0xb80] sm:$0xff] %v1808
        %2449 = vst [vmem:[%s155 + $0xb88] sm:$0xff] %v1809
        %2450 = vst [vmem:[%s155 + $0xb90] sm:$0xff] %v1810
        %2451 = vst [vmem:[%s155 + $0xb98] sm:$0xff] %v1811
        %2452 = vst [vmem:[%s155 + $0xba0] sm:$0xff] %v1812
        %2453 = vst [vmem:[%s155 + $0xba8] sm:$0xff] %v1813
        %2454 = vst [vmem:[%s155 + $0xbb0] sm:$0xff] %v1814
        %2455 = vst [vmem:[%s155 + $0xbb8] sm:$0xff] %v1815
        %2456 = vst [vmem:[%s155 + $0xbc0] sm:$0xff] %v1816
        %2457 = vst [vmem:[%s155 + $0xbc8] sm:$0xff] %v1817
        %2458 = vst [vmem:[%s155 + $0xbd0] sm:$0xff] %v1818
        %2459 = vst [vmem:[%s155 + $0xbd8] sm:$0xff] %v1819
        %2460 = vst [vmem:[%s155 + $0xbe0] sm:$0xff] %v1820
        %2461 = vst [vmem:[%s155 + $0xbe8] sm:$0xff] %v1821
        %2462 = vst [vmem:[%s155 + $0xbf0] sm:$0xff] %v1822
        %2463 = vst [vmem:[%s155 + $0xbf8] sm:$0xff] %v1823
        %2464 = vst [vmem:[%s155 + $0xc00] sm:$0xff] %v1824
        %2465 = vst [vmem:[%s155 + $0xc08] sm:$0xff] %v1825
        %2466 = vst [vmem:[%s155 + $0xc10] sm:$0xff] %v1826
        %2467 = vst [vmem:[%s155 + $0xc18] sm:$0xff] %v1827
        %2468 = vst [vmem:[%s155 + $0xc20] sm:$0xff] %v1828
        %2469 = vst [vmem:[%s155 + $0xc28] sm:$0xff] %v1829
        %2470 = vst [vmem:[%s155 + $0xc30] sm:$0xff] %v1830
        %2471 = vst [vmem:[%s155 + $0xc38] sm:$0xff] %v1831
        %2472 = vst [vmem:[%s155 + $0xc40] sm:$0xff] %v1832
        %2473 = vst [vmem:[%s155 + $0xc48] sm:$0xff] %v1833
        %2474 = vst [vmem:[%s155 + $0xc50] sm:$0xff] %v1834
        %2475 = vst [vmem:[%s155 + $0xc58] sm:$0xff] %v1835
        %2476 = vst [vmem:[%s155 + $0xc60] sm:$0xff] %v1836
        %2477 = vst [vmem:[%s155 + $0xc68] sm:$0xff] %v1837
        %2478 = vst [vmem:[%s155 + $0xc70] sm:$0xff] %v1838
        %2479 = vst [vmem:[%s155 + $0xc78] sm:$0xff] %v1839
        %2480 = vst [vmem:[%s155 + $0xc80] sm:$0xff] %v1840
        %2481 = vst [vmem:[%s155 + $0xc88] sm:$0xff] %v1841
        %2482 = vst [vmem:[%s155 + $0xc90] sm:$0xff] %v1842
        %2483 = vst [vmem:[%s155 + $0xc98] sm:$0xff] %v1843
        %2484 = vst [vmem:[%s155 + $0xca0] sm:$0xff] %v1844
        %2485 = vst [vmem:[%s155 + $0xca8] sm:$0xff] %v1845
        %2486 = vst [vmem:[%s155 + $0xcb0] sm:$0xff] %v1846
        %2487 = vst [vmem:[%s155 + $0xcb8] sm:$0xff] %v1847
        %2488 = vst [vmem:[%s155 + $0xcc0] sm:$0xff] %v1848
        %2489 = vst [vmem:[%s155 + $0xcc8] sm:$0xff] %v1849
        %2490 = vst [vmem:[%s155 + $0xcd0] sm:$0xff] %v1850
        %2491 = vst [vmem:[%s155 + $0xcd8] sm:$0xff] %v1851
        %2492 = vst [vmem:[%s155 + $0xce0] sm:$0xff] %v1852
        %2493 = vst [vmem:[%s155 + $0xce8] sm:$0xff] %v1853
        %2494 = vst [vmem:[%s155 + $0xcf0] sm:$0xff] %v1854
        %2495 = vst [vmem:[%s155 + $0xcf8] sm:$0xff] %v1855
        %2496 = vst [vmem:[%s155 + $0xd00] sm:$0xff] %v1856
        %2497 = vst [vmem:[%s155 + $0xd08] sm:$0xff] %v1857
        %2498 = vst [vmem:[%s155 + $0xd10] sm:$0xff] %v1858
        %2499 = vst [vmem:[%s155 + $0xd18] sm:$0xff] %v1859
        %2500 = vst [vmem:[%s155 + $0xd20] sm:$0xff] %v1860
        %2501 = vst [vmem:[%s155 + $0xd28] sm:$0xff] %v1861
        %2502 = vst [vmem:[%s155 + $0xd30] sm:$0xff] %v1862
        %2503 = vst [vmem:[%s155 + $0xd38] sm:$0xff] %v1863
        %2504 = vst [vmem:[%s155 + $0xd40] sm:$0xff] %v1864
        %2505 = vst [vmem:[%s155 + $0xd48] sm:$0xff] %v1865
        %2506 = vst [vmem:[%s155 + $0xd50] sm:$0xff] %v1866
        %2507 = vst [vmem:[%s155 + $0xd58] sm:$0xff] %v1867
        %2508 = vst [vmem:[%s155 + $0xd60] sm:$0xff] %v1868
        %2509 = vst [vmem:[%s155 + $0xd68] sm:$0xff] %v1869
        %2510 = vst [vmem:[%s155 + $0xd70] sm:$0xff] %v1870
        %2511 = vst [vmem:[%s155 + $0xd78] sm:$0xff] %v1871
        %2512 = vst [vmem:[%s155 + $0xd80] sm:$0xff] %v1872
        %2513 = vst [vmem:[%s155 + $0xd88] sm:$0xff] %v1873
        %2514 = vst [vmem:[%s155 + $0xd90] sm:$0xff] %v1874
        %2515 = vst [vmem:[%s155 + $0xd98] sm:$0xff] %v1875
        %2516 = vst [vmem:[%s155 + $0xda0] sm:$0xff] %v1876
        %2517 = vst [vmem:[%s155 + $0xda8] sm:$0xff] %v1877
        %2518 = vst [vmem:[%s155 + $0xdb0] sm:$0xff] %v1878
        %2519 = vst [vmem:[%s155 + $0xdb8] sm:$0xff] %v1879
        %2520 = vst [vmem:[%s155 + $0xdc0] sm:$0xff] %v1880
        %2521 = vst [vmem:[%s155 + $0xdc8] sm:$0xff] %v1881
        %2522 = vst [vmem:[%s155 + $0xdd0] sm:$0xff] %v1882
        %2523 = vst [vmem:[%s155 + $0xdd8] sm:$0xff] %v1883
        %2524 = vst [vmem:[%s155 + $0xde0] sm:$0xff] %v1884
        %2525 = vst [vmem:[%s155 + $0xde8] sm:$0xff] %v1885
        %2526 = vst [vmem:[%s155 + $0xdf0] sm:$0xff] %v1886
        %2527 = vst [vmem:[%s155 + $0xdf8] sm:$0xff] %v1887
        %2528 = vst [vmem:[%s155 + $0xe00] sm:$0xff] %v1888
        %2529 = vst [vmem:[%s155 + $0xe08] sm:$0xff] %v1889
        %2530 = vst [vmem:[%s155 + $0xe10] sm:$0xff] %v1890
        %2531 = vst [vmem:[%s155 + $0xe18] sm:$0xff] %v1891
        %2532 = vst [vmem:[%s155 + $0xe20] sm:$0xff] %v1892
        %2533 = vst [vmem:[%s155 + $0xe28] sm:$0xff] %v1893
        %2534 = vst [vmem:[%s155 + $0xe30] sm:$0xff] %v1894
        %2535 = vst [vmem:[%s155 + $0xe38] sm:$0xff] %v1895
        %2536 = vst [vmem:[%s155 + $0xe40] sm:$0xff] %v1896
        %2537 = vst [vmem:[%s155 + $0xe48] sm:$0xff] %v1897
        %2538 = vst [vmem:[%s155 + $0xe50] sm:$0xff] %v1898
        %2539 = vst [vmem:[%s155 + $0xe58] sm:$0xff] %v1899
        %2540 = vst [vmem:[%s155 + $0xe60] sm:$0xff] %v1900
        %2541 = vst [vmem:[%s155 + $0xe68] sm:$0xff] %v1901
        %2542 = vst [vmem:[%s155 + $0xe70] sm:$0xff] %v1902
        %2543 = vst [vmem:[%s155 + $0xe78] sm:$0xff] %v1903
        %2544 = vst [vmem:[%s155 + $0xe80] sm:$0xff] %v1904
        %2545 = vst [vmem:[%s155 + $0xe88] sm:$0xff] %v1905
        %2546 = vst [vmem:[%s155 + $0xe90] sm:$0xff] %v1906
        %2547 = vst [vmem:[%s155 + $0xe98] sm:$0xff] %v1907
        %2548 = vst [vmem:[%s155 + $0xea0] sm:$0xff] %v1908
        %2549 = vst [vmem:[%s155 + $0xea8] sm:$0xff] %v1909
        %2550 = vst [vmem:[%s155 + $0xeb0] sm:$0xff] %v1910
        %2551 = vst [vmem:[%s155 + $0xeb8] sm:$0xff] %v1911
        %2552 = vst [vmem:[%s155 + $0xec0] sm:$0xff] %v1912
        %2553 = vst [vmem:[%s155 + $0xec8] sm:$0xff] %v1913
        %2554 = vst [vmem:[%s155 + $0xed0] sm:$0xff] %v1914
        %2555 = vst [vmem:[%s155 + $0xed8] sm:$0xff] %v1915
        %2556 = vst [vmem:[%s155 + $0xee0] sm:$0xff] %v1916
        %2557 = vst [vmem:[%s155 + $0xee8] sm:$0xff] %v1917
        %2558 = vst [vmem:[%s155 + $0xef0] sm:$0xff] %v1918
        %2559 = vst [vmem:[%s155 + $0xef8] sm:$0xff] %v1919
        %2560 = vst [vmem:[%s155 + $0xf00] sm:$0xff] %v1920
        %2561 = vst [vmem:[%s155 + $0xf08] sm:$0xff] %v1921
        %2562 = vst [vmem:[%s155 + $0xf10] sm:$0xff] %v1922
        %2563 = vst [vmem:[%s155 + $0xf18] sm:$0xff] %v1923
        %2564 = vst [vmem:[%s155 + $0xf20] sm:$0xff] %v1924
        %2565 = vst [vmem:[%s155 + $0xf28] sm:$0xff] %v1925
        %2566 = vst [vmem:[%s155 + $0xf30] sm:$0xff] %v1926
        %2567 = vst [vmem:[%s155 + $0xf38] sm:$0xff] %v1927
        %2568 = vst [vmem:[%s155 + $0xf40] sm:$0xff] %v1928
        %2569 = vst [vmem:[%s155 + $0xf48] sm:$0xff] %v1929
        %2570 = vst [vmem:[%s155 + $0xf50] sm:$0xff] %v1930
        %2571 = vst [vmem:[%s155 + $0xf58] sm:$0xff] %v1931
        %2572 = vst [vmem:[%s155 + $0xf60] sm:$0xff] %v1932
        %2573 = vst [vmem:[%s155 + $0xf68] sm:$0xff] %v1933
        %2574 = vst [vmem:[%s155 + $0xf70] sm:$0xff] %v1934
        %2575 = vst [vmem:[%s155 + $0xf78] sm:$0xff] %v1935
        %2576 = vst [vmem:[%s155 + $0xf80] sm:$0xff] %v1936
        %2577 = vst [vmem:[%s155 + $0xf88] sm:$0xff] %v1937
        %2578 = vst [vmem:[%s155 + $0xf90] sm:$0xff] %v1938
        %2579 = vst [vmem:[%s155 + $0xf98] sm:$0xff] %v1939
        %2580 = vst [vmem:[%s155 + $0xfa0] sm:$0xff] %v1940
        %2581 = vst [vmem:[%s155 + $0xfa8] sm:$0xff] %v1941
        %2582 = vst [vmem:[%s155 + $0xfb0] sm:$0xff] %v1942
        %2583 = vst [vmem:[%s155 + $0xfb8] sm:$0xff] %v1943
        %2584 = vst [vmem:[%s155 + $0xfc0] sm:$0xff] %v1944
        %2585 = vst [vmem:[%s155 + $0xfc8] sm:$0xff] %v1945
        %2586 = vst [vmem:[%s155 + $0xfd0] sm:$0xff] %v1946
        %2587 = vst [vmem:[%s155 + $0xfd8] sm:$0xff] %v1947
        %2588 = vst [vmem:[%s155 + $0xfe0] sm:$0xff] %v1948
        %2589 = vst [vmem:[%s155 + $0xfe8] sm:$0xff] %v1949
        %2590 = vst [vmem:[%s155 + $0xff0] sm:$0xff] %v1950
        %2591 = vst [vmem:[%s155 + $0xff8] sm:$0xff] %v1951
        %2592 = vst [vmem:[%s155 + $0x1000] sm:$0xff] %v1952
        %2593 = vst [vmem:[%s155 + $0x1008] sm:$0xff] %v1953
        %2594 = vst [vmem:[%s155 + $0x1010] sm:$0xff] %v1954
        %2595 = vst [vmem:[%s155 + $0x1018] sm:$0xff] %v1955
        %2596 = vst [vmem:[%s155 + $0x1020] sm:$0xff] %v1956
        %2597 = vst [vmem:[%s155 + $0x1028] sm:$0xff] %v1957
        %2598 = vst [vmem:[%s155 + $0x1030] sm:$0xff] %v1958
        %2599 = vst [vmem:[%s155 + $0x1038] sm:$0xff] %v1959
        %2600 = vst [vmem:[%s155 + $0x1040] sm:$0xff] %v1960
        %2601 = vst [vmem:[%s155 + $0x1048] sm:$0xff] %v1961
        %2602 = vst [vmem:[%s155 + $0x1050] sm:$0xff] %v1962
        %2603 = vst [vmem:[%s155 + $0x1058] sm:$0xff] %v1963
        %2604 = vst [vmem:[%s155 + $0x1060] sm:$0xff] %v1964
        %2605 = vst [vmem:[%s155 + $0x1068] sm:$0xff] %v1965
        %2606 = vst [vmem:[%s155 + $0x1070] sm:$0xff] %v1966
        %2607 = vst [vmem:[%s155 + $0x1078] sm:$0xff] %v1967
        %2608 = vst [vmem:[%s155 + $0x1080] sm:$0xff] %v1968
        %2609 = vst [vmem:[%s155 + $0x1088] sm:$0xff] %v1969
        %2610 = vst [vmem:[%s155 + $0x1090] sm:$0xff] %v1970
        %2611 = vst [vmem:[%s155 + $0x1098] sm:$0xff] %v1971
        %2612 = vst [vmem:[%s155 + $0x10a0] sm:$0xff] %v1972
        %2613 = vst [vmem:[%s155 + $0x10a8] sm:$0xff] %v1973
        %2614 = vst [vmem:[%s155 + $0x10b0] sm:$0xff] %v1974
        %2615 = vst [vmem:[%s155 + $0x10b8] sm:$0xff] %v1975
        %2616 = vst [vmem:[%s155 + $0x10c0] sm:$0xff] %v1976
        %2617 = vst [vmem:[%s155 + $0x10c8] sm:$0xff] %v1977
        %2618 = vst [vmem:[%s155 + $0x10d0] sm:$0xff] %v1978
        %2619 = vst [vmem:[%s155 + $0x10d8] sm:$0xff] %v1979
        %2620 = vst [vmem:[%s155 + $0x10e0] sm:$0xff] %v1980
        %2621 = vst [vmem:[%s155 + $0x10e8] sm:$0xff] %v1981
        %2622 = vst [vmem:[%s155 + $0x10f0] sm:$0xff] %v1982
        %2623 = vst [vmem:[%s155 + $0x10f8] sm:$0xff] %v1983
        %2624 = vst [vmem:[%s155 + $0x1100] sm:$0xff] %v1984
        %2625 = vst [vmem:[%s155 + $0x1108] sm:$0xff] %v1985
        %2626 = vst [vmem:[%s155 + $0x1110] sm:$0xff] %v1986
        %2627 = vst [vmem:[%s155 + $0x1118] sm:$0xff] %v1987
        %2628 = vst [vmem:[%s155 + $0x1120] sm:$0xff] %v1988
        %2629 = vst [vmem:[%s155 + $0x1128] sm:$0xff] %v1989
        %2630 = vst [vmem:[%s155 + $0x1130] sm:$0xff] %v1990
        %2631 = vst [vmem:[%s155 + $0x1138] sm:$0xff] %v1991
        %2632 = vst [vmem:[%s155 + $0x1140] sm:$0xff] %v1992
        %2633 = vst [vmem:[%s155 + $0x1148] sm:$0xff] %v1993
        %2634 = vst [vmem:[%s155 + $0x1150] sm:$0xff] %v1994
        %2635 = vst [vmem:[%s155 + $0x1158] sm:$0xff] %v1995
        %2636 = vst [vmem:[%s155 + $0x1160] sm:$0xff] %v1996
        %2637 = vst [vmem:[%s155 + $0x1168] sm:$0xff] %v1997
        %2638 = vst [vmem:[%s155 + $0x1170] sm:$0xff] %v1998
        %2639 = vst [vmem:[%s155 + $0x1178] sm:$0xff] %v1999
        %2640 = vst [vmem:[%s155 + $0x1180] sm:$0xff] %v2000
        %2641 = vst [vmem:[%s155 + $0x1188] sm:$0xff] %v2001
        %2642 = vst [vmem:[%s155 + $0x1190] sm:$0xff] %v2002
        %2643 = vst [vmem:[%s155 + $0x1198] sm:$0xff] %v2003
        %2644 = vst [vmem:[%s155 + $0x11a0] sm:$0xff] %v2004
        %2645 = vst [vmem:[%s155 + $0x11a8] sm:$0xff] %v2005
        %2646 = vst [vmem:[%s155 + $0x11b0] sm:$0xff] %v2006
        %2647 = vst [vmem:[%s155 + $0x11b8] sm:$0xff] %v2007
        %2648 = vst [vmem:[%s155 + $0x11c0] sm:$0xff] %v2008
        %2649 = vst [vmem:[%s155 + $0x11c8] sm:$0xff] %v2009
        %2650 = vst [vmem:[%s155 + $0x11d0] sm:$0xff] %v2010
        %2651 = vst [vmem:[%s155 + $0x11d8] sm:$0xff] %v2011
        %2652 = vst [vmem:[%s155 + $0x11e0] sm:$0xff] %v2012
        %2653 = vst [vmem:[%s155 + $0x11e8] sm:$0xff] %v2013
        %2654 = vst [vmem:[%s155 + $0x11f0] sm:$0xff] %v2014
        %2655 = vst [vmem:[%s155 + $0x11f8] sm:$0xff] %v2015
        %2656 = vst [vmem:[%s155 + $0x1200] sm:$0xff] %v2016
        %2657 = vst [vmem:[%s155 + $0x1208] sm:$0xff] %v2017
        %2658 = vst [vmem:[%s155 + $0x1210] sm:$0xff] %v2018
        %2659 = vst [vmem:[%s155 + $0x1218] sm:$0xff] %v2019
        %2660 = vst [vmem:[%s155 + $0x1220] sm:$0xff] %v2020
        %2661 = vst [vmem:[%s155 + $0x1228] sm:$0xff] %v2021
        %2662 = vst [vmem:[%s155 + $0x1230] sm:$0xff] %v2022
        %2663 = vst [vmem:[%s155 + $0x1238] sm:$0xff] %v2023
        %2664 = vst [vmem:[%s155 + $0x1240] sm:$0xff] %v2024
        %2665 = vst [vmem:[%s155 + $0x1248] sm:$0xff] %v2025
        %2666 = vst [vmem:[%s155 + $0x1250] sm:$0xff] %v2026
        %2667 = vst [vmem:[%s155 + $0x1258] sm:$0xff] %v2027
        %2668 = vst [vmem:[%s155 + $0x1260] sm:$0xff] %v2028
        %2669 = vst [vmem:[%s155 + $0x1268] sm:$0xff] %v2029
        %2670 = vst [vmem:[%s155 + $0x1270] sm:$0xff] %v2030
        %2671 = vst [vmem:[%s155 + $0x1278] sm:$0xff] %v2031
        %2672 = vst [vmem:[%s155 + $0x1280] sm:$0xff] %v2032
        %2673 = vst [vmem:[%s155 + $0x1288] sm:$0xff] %v2033
        %2674 = vst [vmem:[%s155 + $0x1290] sm:$0xff] %v2034
        %2675 = vst [vmem:[%s155 + $0x1298] sm:$0xff] %v2035
        %2676 = vst [vmem:[%s155 + $0x12a0] sm:$0xff] %v2036
        %2677 = vst [vmem:[%s155 + $0x12a8] sm:$0xff] %v2037
        %2678 = vst [vmem:[%s155 + $0x12b0] sm:$0xff] %v2038
        %2679 = vst [vmem:[%s155 + $0x12b8] sm:$0xff] %v2039
        %2680 = vst [vmem:[%s155 + $0x12c0] sm:$0xff] %v2040
        %2681 = vst [vmem:[%s155 + $0x12c8] sm:$0xff] %v2041
        %2682 = vst [vmem:[%s155 + $0x12d0] sm:$0xff] %v2042
        %2683 = vst [vmem:[%s155 + $0x12d8] sm:$0xff] %v2043
        %2684 = vst [vmem:[%s155 + $0x12e0] sm:$0xff] %v2044
        %2685 = vst [vmem:[%s155 + $0x12e8] sm:$0xff] %v2045
        %2686 = vst [vmem:[%s155 + $0x12f0] sm:$0xff] %v2046
        %2687 = vst [vmem:[%s155 + $0x12f8] sm:$0xff] %v2047
        %2688 = vst [vmem:[%s155 + $0x1300] sm:$0xff] %v2048
        %2689 = vst [vmem:[%s155 + $0x1308] sm:$0xff] %v2049
        %2690 = vst [vmem:[%s155 + $0x1310] sm:$0xff] %v2050
        %2691 = vst [vmem:[%s155 + $0x1318] sm:$0xff] %v2051
        %2692 = vst [vmem:[%s155 + $0x1320] sm:$0xff] %v2052
        %2693 = vst [vmem:[%s155 + $0x1328] sm:$0xff] %v2053
        %2694 = vst [vmem:[%s155 + $0x1330] sm:$0xff] %v2054
        %2695 = vst [vmem:[%s155 + $0x1338] sm:$0xff] %v2055
        %2696 = vst [vmem:[%s155 + $0x1340] sm:$0xff] %v2056
        %2697 = vst [vmem:[%s155 + $0x1348] sm:$0xff] %v2057
        %2698 = vst [vmem:[%s155 + $0x1350] sm:$0xff] %v2058
        %2699 = vst [vmem:[%s155 + $0x1358] sm:$0xff] %v2059
        %2700 = vst [vmem:[%s155 + $0x1360] sm:$0xff] %v2060
        %2701 = vst [vmem:[%s155 + $0x1368] sm:$0xff] %v2061
        %2702 = vst [vmem:[%s155 + $0x1370] sm:$0xff] %v2062
        %2703 = vst [vmem:[%s155 + $0x1378] sm:$0xff] %v2063
        %2704 = vst [vmem:[%s155 + $0x1380] sm:$0xff] %v2064
        %2705 = vst [vmem:[%s155 + $0x1388] sm:$0xff] %v2065
        %2706 = vst [vmem:[%s155 + $0x1390] sm:$0xff] %v2066
        %2707 = vst [vmem:[%s155 + $0x1398] sm:$0xff] %v2067
        %2708 = vst [vmem:[%s155 + $0x13a0] sm:$0xff] %v2068
        %2709 = vst [vmem:[%s155 + $0x13a8] sm:$0xff] %v2069
        %2710 = vst [vmem:[%s155 + $0x13b0] sm:$0xff] %v2070
        %2711 = vst [vmem:[%s155 + $0x13b8] sm:$0xff] %v2071
        %2712 = vst [vmem:[%s155 + $0x13c0] sm:$0xff] %v2072
        %2713 = vst [vmem:[%s155 + $0x13c8] sm:$0xff] %v2073
        %2714 = vst [vmem:[%s155 + $0x13d0] sm:$0xff] %v2074
        %2715 = vst [vmem:[%s155 + $0x13d8] sm:$0xff] %v2075
        %2716 = vst [vmem:[%s155 + $0x13e0] sm:$0xff] %v2076
        %2717 = vst [vmem:[%s155 + $0x13e8] sm:$0xff] %v2077
        %2718 = vst [vmem:[%s155 + $0x13f0] sm:$0xff] %v2078
        %2719 = vst [vmem:[%s155 + $0x13f8] sm:$0xff] %v2079
        %s2720 = sand.u32 %s68, 1
        %s2721 = scalar_lea.sflag [#allocation4], %s2720
        %s2722 = sand.u32 %s68, 1
        %s2723 = smul.addr %s2722, 5120
        %s2724 = scalar_lea.vmem [#allocation5], %s2723
        // Predicated region
        $region29: #{tpu_custom_call.1} parent=23 // pred_check
          %p2725 = pneg %p78
        $region30: #{tpu_custom_call.1} parent=23 // pred_check_branch
          %2727 = sbr.rel (%p2725) target = $region32
        $region31: #{tpu_custom_call.1} parent=23 // pred_region
          %s2728 = smul.u32 40, %s22
          %s2729 = smul.u32 16, %s23
          %2731 = vsyncadd %s2721, 0
          %s2732 = smul.addr %s2728, 16
          %s2733 = sadd.s32 %s2729, %s2732
          %s2734 = smul.addr %s2733, 8
          %s2735 = scalar_lea.hbm %s1, %s2734
          %s2736 = sshll.u32 %s2724, 4
          %s2737 = int_to_ptr.vmem [resolvable:$true] %s2736
          %s2738 = sshll.u32 %s2735, 4
          %s2739 = int_to_ptr.hbm [resolvable:$true] %s2738
          %2744 = dma.vmem_to_hbm [thread:$0]  %s2737, 81920, %s2739, %s2721, 2048, 2048, 128
        $region32: #{tpu_custom_call.1} parent=23 // pred_fallthru
          _
      $region24: #{tpu_custom_call.1} parent=5 // pred_fallthru
        _
      %p2745 = scmp.le.s32.totalorder 2, %s13
      // Predicated region
      $region33: #{tpu_custom_call.1} parent=5 // pred_check
        %p2746 = pneg %p2745
      $region34: #{tpu_custom_call.1} parent=5 // pred_check_branch
        %2748 = sbr.rel (%p2746) target = $region36
      $region35: #{tpu_custom_call.1} parent=5 // pred_region
        %s2749 = ssub.s32 %s13, 2
        // Predicated region
        $region37: #{tpu_custom_call.1} parent=35 // pred_check
          %p2750 = pneg %p84
        $region38: #{tpu_custom_call.1} parent=35 // pred_check_branch
          %2752 = sbr.rel (%p2750) target = $region40
        $region39: #{tpu_custom_call.1} parent=35 // pred_region
          %s2753 = sand.u32 %s69, 1
          %s2754 = scalar_lea.sflag [#allocation4], %s2753
          %s2755 = sand.u32 %s69, 1
          %s2756 = smul.addr %s2755, 5120
          %s2757 = scalar_lea.vmem [#allocation5], %s2756
          %2759 = dma.done %s2754, 81920
        $region40: #{tpu_custom_call.1} parent=35 // pred_fallthru
          _
      $region36: #{tpu_custom_call.1} parent=5 // pred_fallthru
        _
    $region6: #{tpu_custom_call.1} parent=1 // loop_footer
      %s17 = sadd.s32 1, %s13
    $region7: #{tpu_custom_call.1} parent=1 // loop_footer_branch
      %12 = sbr.rel target = $region3
    $region8: #{tpu_custom_call.1} parent=1 // loop_exit
      _
    %2760 = vsyncpa [#allocation3], 1
    %s2761 = scalar_lea.sflag [#allocation3], 1
    %2762 = vsyncpa %s2761, 1
    %2763 = vsyncpa [#allocation4], 1
    %s2764 = scalar_lea.sflag [#allocation4], 1
    %2765 = vsyncpa %s2764, 1

</llo_original>
